<compile_context>
chip_gen: v7x
topology: tpu7x:2x2x1
jax: 0.10.0
libtpu: 0.0.40
codegen_flags: <defaults>
</compile_context>

<pallas_src>
import jax
import jax.numpy as jnp
from jax.experimental import pallas as pl
from jax.experimental.pallas import tpu as pltpu

INPUT_DIM = 784
CONDITION_DIM = 10
HIDDEN_DIM = 400
LATENT_DIM = 20


def cvae_kernel(
    # inputs
    x_ref, c_ref, eps_ref,
    # encoder params
    w1x_ref, w1c_ref, b1_ref,
    w2_ref, b2_ref,
    wml_ref, bml_ref,          # fused [mu | logvar] head: f32 (400, 40), (1, 40)
    # decoder params
    wd1_ref, bd1_ref,          # fused [z | c] first layer: bf16 (30, 400), f32 (1, 400)
    wd2_ref, bd2_ref,
    wd3_ref, bd3_ref,
    # outputs
    recon_ref, muvar_ref,
):
    f32 = jnp.float32
    bf16 = jnp.bfloat16

    x = x_ref[...].astype(bf16)          # no-op when x is streamed as bf16
    c_f32 = c_ref[...].astype(f32)
    c_bf = c_ref[...].astype(bf16)

    # ---------------- Encoder ----------------
    # cat([x, c], dim=1) @ W1  ==  x @ W1x + c @ W1c   (avoids a 794-lane concat)
    # Note: if the real workload's c is one-hot, the c @ W1c term could become
    # a weight-row select instead of a K=10 matmul; c is dense here, so keep it.
    h = (
        jnp.dot(x, w1x_ref[...], preferred_element_type=f32)
        + jnp.dot(c_bf, w1c_ref[...], preferred_element_type=f32)
        + b1_ref[...]
    )
    h = jnp.maximum(h, 0.0).astype(bf16)

    # Second hidden stays f32: it only feeds the (tiny) mu/logvar head.
    h2 = jnp.dot(h, w2_ref[...], preferred_element_type=f32) + b2_ref[...]
    h2 = jnp.maximum(h2, 0.0)

    # Fused mu|logvar head, all-f32 (400x40 is MXU-trivial; keeps parity with
    # an f32 PyTorch baseline since exp(0.5*logvar) amplifies head error).
    muvar = jnp.dot(h2, wml_ref[...], preferred_element_type=f32) + bml_ref[...]
    mu = muvar[:, :LATENT_DIM]
    logvar = muvar[:, LATENT_DIM:]

    # ---------------- Reparameterize (f32) ----------------
    std = jnp.exp(0.5 * logvar)
    z = mu + eps_ref[...].astype(f32) * std

    # ---------------- Decoder ----------------
    # Fused first layer: concat([z, c]) is a single 30-lane slab.
    zc = jnp.concatenate([z, c_f32], axis=1).astype(bf16)
    d = jnp.dot(zc, wd1_ref[...], preferred_element_type=f32) + bd1_ref[...]
    d = jnp.maximum(d, 0.0).astype(bf16)

    d = jnp.dot(d, wd2_ref[...], preferred_element_type=f32) + bd2_ref[...]
    d = jnp.maximum(d, 0.0).astype(bf16)

    recon = jnp.dot(d, wd3_ref[...], preferred_element_type=f32) + bd3_ref[...]

    # Raw logits (module has no output sigmoid; loss is MSE).
    recon_ref[...] = recon.astype(recon_ref.dtype)
    muvar_ref[...] = muvar


def _pick_batch_tile(batch):
    """Batch-tile selection.

    batch < 128   : single grid step (splitting only re-pays weight DMA /
                    ~0.35 us step overhead for a few-microsecond kernel).
    128..1024     : exactly two steps on the "parallel" axis so both v7x
                    TensorCores run; tile rounded up to a multiple of 8.
    batch > 1024  : 512-row tiles (deep MXU M dim, step overhead amortized,
                    ~12-16 MiB VMEM footprint).
    """
    if batch < 128:
        return batch
    if batch <= 1024:
        return min(512, ((batch + 1) // 2 + 7) // 8 * 8)
    return 512


def _cvae_forward_impl(x, c, eps, params):
    batch = x.shape[0]
    tb = _pick_batch_tile(batch)
    nb = pl.cdiv(batch, tb)

    # recon streams at the input precision: bf16 x in -> bf16 recon out
    # (halves activation HBM bytes); f32 x keeps the module's f32 semantics.
    recon_dtype = x.dtype

    def act_spec(feat):
        return pl.BlockSpec((tb, feat), lambda i: (i, 0))

    def w_spec(arr):
        # Constant index_map -> weight block stays VMEM-resident across steps.
        return pl.BlockSpec(arr.shape, lambda i: (0, 0))

    (w1x, w1c, b1, w2, b2, wml, bml, wd1, bd1, wd2, bd2, wd3, bd3) = params

    in_specs = [
        act_spec(INPUT_DIM), act_spec(CONDITION_DIM), act_spec(LATENT_DIM),
        w_spec(w1x), w_spec(w1c), w_spec(b1),
        w_spec(w2), w_spec(b2),
        w_spec(wml), w_spec(bml),
        w_spec(wd1), w_spec(bd1),
        w_spec(wd2), w_spec(bd2),
        w_spec(wd3), w_spec(bd3),
    ]
    out_specs = (act_spec(INPUT_DIM), act_spec(2 * LATENT_DIM))

    # Advisory cost estimate for XLA's scheduler around the custom call.
    flops = 2 * batch * (
        INPUT_DIM * HIDDEN_DIM + CONDITION_DIM * HIDDEN_DIM     # enc layer 1
        + HIDDEN_DIM * HIDDEN_DIM                               # enc layer 2
        + HIDDEN_DIM * 2 * LATENT_DIM                           # mu|logvar head
        + (LATENT_DIM + CONDITION_DIM) * HIDDEN_DIM             # dec layer 1
        + HIDDEN_DIM * HIDDEN_DIM                               # dec layer 2
        + HIDDEN_DIM * INPUT_DIM                                # dec layer 3
    )
    weight_bytes = sum(int(p.size) * jnp.dtype(p.dtype).itemsize for p in params)
    act_bytes = batch * (
        INPUT_DIM * jnp.dtype(x.dtype).itemsize
        + CONDITION_DIM * jnp.dtype(c.dtype).itemsize
        + LATENT_DIM * jnp.dtype(eps.dtype).itemsize
        + INPUT_DIM * jnp.dtype(recon_dtype).itemsize
        + 2 * LATENT_DIM * 4
    )
    cost = pl.CostEstimate(
        flops=int(flops),
        transcendentals=int(batch * LATENT_DIM),
        bytes_accessed=int(act_bytes + weight_bytes),
    )

    recon, muvar = pl.pallas_call(
        cvae_kernel,
        out_shape=(
            jax.ShapeDtypeStruct((batch, INPUT_DIM), recon_dtype),
            jax.ShapeDtypeStruct((batch, 2 * LATENT_DIM), jnp.float32),
        ),
        grid=(nb,),
        in_specs=in_specs,
        out_specs=out_specs,
        compiler_params=pltpu.CompilerParams(
            dimension_semantics=("parallel",),
            vmem_limit_bytes=32 << 20,   # TB=512 footprint ~16 MiB; v7x safe
        ),
        cost_estimate=cost,
    )(x, c, eps, *params)

    mu = muvar[:, :LATENT_DIM]
    logvar = muvar[:, LATENT_DIM:]
    return recon, mu, logvar


cvae_forward = jax.jit(_cvae_forward_impl)


def init_params(key):
    """Deterministic init mimicking nn.Linear (U(-1/sqrt(fan_in), +1/sqrt(fan_in))).

    Weights stored transposed vs torch, i.e. (in_features, out_features).
    Big matmul weights are bf16 (f32 MXU accumulation); the fused mu|logvar
    head weight and all biases stay f32."""
    def linear(key, fan_in, fan_out):
        kw, kb = jax.random.split(key)
        bound = 1.0 / jnp.sqrt(jnp.float32(fan_in))
        w = jax.random.uniform(kw, (fan_in, fan_out), jnp.float32, -bound, bound)
        b = jax.random.uniform(kb, (1, fan_out), jnp.float32, -bound, bound)
        return w, b

    bf16 = jnp.bfloat16
    keys = jax.random.split(key, 8)

    # Encoder first layer: split weight over [x | c]
    w1, b1 = linear(keys[0], INPUT_DIM + CONDITION_DIM, HIDDEN_DIM)
    w1x, w1c = w1[:INPUT_DIM].astype(bf16), w1[INPUT_DIM:].astype(bf16)
    w2, b2 = linear(keys[1], HIDDEN_DIM, HIDDEN_DIM)
    w2 = w2.astype(bf16)
    # Fused mu|logvar head (kept f32 for parity with an f32 torch baseline)
    wmu, bmu = linear(keys[2], HIDDEN_DIM, LATENT_DIM)
    wlv, blv = linear(keys[3], HIDDEN_DIM, LATENT_DIM)
    wml = jnp.concatenate([wmu, wlv], axis=1)                # (400, 40) f32
    bml = jnp.concatenate([bmu, blv], axis=1)                # (1, 40) f32
    # Decoder first layer: single fused [z | c] weight
    wd1, bd1 = linear(keys[4], LATENT_DIM + CONDITION_DIM, HIDDEN_DIM)
    wd1 = wd1.astype(bf16)                                   # (30, 400)
    wd2, bd2 = linear(keys[5], HIDDEN_DIM, HIDDEN_DIM)
    wd2 = wd2.astype(bf16)
    wd3, bd3 = linear(keys[6], HIDDEN_DIM, INPUT_DIM)
    wd3 = wd3.astype(bf16)

    return (w1x, w1c, b1, w2, b2, wml, bml, wd1, bd1, wd2, bd2, wd3, bd3)


def cvae_reference(x, c, eps, params):
    """Pure-JAX reference mirroring the kernel's mixed-precision math."""
    (w1x, w1c, b1, w2, b2, wml, bml, wd1, bd1, wd2, bd2, wd3, bd3) = params
    f32, bf16 = jnp.float32, jnp.bfloat16
    xb, cb = x.astype(bf16), c.astype(bf16)
    h = jnp.maximum(
        jnp.dot(xb, w1x, preferred_element_type=f32)
        + jnp.dot(cb, w1c, preferred_element_type=f32) + b1, 0.0).astype(bf16)
    h2 = jnp.maximum(jnp.dot(h, w2, preferred_element_type=f32) + b2, 0.0)
    muvar = jnp.dot(h2, wml, preferred_element_type=f32) + bml
    mu, logvar = muvar[:, :LATENT_DIM], muvar[:, LATENT_DIM:]
    z = mu + eps.astype(f32) * jnp.exp(0.5 * logvar)
    zc = jnp.concatenate([z, c.astype(f32)], axis=1).astype(bf16)
    d = jnp.maximum(
        jnp.dot(zc, wd1, preferred_element_type=f32) + bd1, 0.0).astype(bf16)
    d = jnp.maximum(
        jnp.dot(d, wd2, preferred_element_type=f32) + bd2, 0.0).astype(bf16)
    recon = jnp.dot(d, wd3, preferred_element_type=f32) + bd3
    return recon, mu, logvar


if __name__ == "__main__":
    key = jax.random.PRNGKey(0)
    k_param, k_x, k_c, k_eps, k_x2, k_c2, k_eps2 = jax.random.split(key, 7)

    params = init_params(k_param)

    # ---- Small f32 check (module-precision streaming path, single grid step)
    batch = 8
    x = jax.random.normal(k_x, (batch, INPUT_DIM), jnp.float32)
    c = jax.random.normal(k_c, (batch, CONDITION_DIM), jnp.float32)
    # reparameterization noise (torch.randn_like(std)), drawn deterministically
    eps = jax.random.normal(k_eps, (batch, LATENT_DIM), jnp.float32)

    recon_x, mu, logvar = cvae_forward(x, c, eps, params)
    jax.block_until_ready((recon_x, mu, logvar))

    ref_recon, ref_mu, ref_logvar = cvae_reference(x, c, eps, params)
    assert recon_x.shape == (batch, INPUT_DIM)
    assert mu.shape == (batch, LATENT_DIM)
    assert logvar.shape == (batch, LATENT_DIM)
    assert jnp.allclose(recon_x, ref_recon, atol=2e-3, rtol=2e-3)
    assert jnp.allclose(mu, ref_mu, atol=2e-3, rtol=2e-3)
    assert jnp.allclose(logvar, ref_logvar, atol=2e-3, rtol=2e-3)

    # ---- bf16-streamed, two-grid-step check (perf path: both v7x TCs run,
    #      halved x/recon HBM bytes on v5e/v6e; recon comes back in bf16).
    batch2 = 256
    x2 = jax.random.normal(k_x2, (batch2, INPUT_DIM), jnp.bfloat16)
    c2 = jax.random.normal(k_c2, (batch2, CONDITION_DIM), jnp.float32)
    eps2 = jax.random.normal(k_eps2, (batch2, LATENT_DIM), jnp.float32)

    recon2, mu2, logvar2 = cvae_forward(x2, c2, eps2, params)
    jax.block_until_ready((recon2, mu2, logvar2))

    r_recon2, r_mu2, r_logvar2 = cvae_reference(x2, c2, eps2, params)
    assert recon2.dtype == jnp.bfloat16
    assert jnp.allclose(recon2.astype(jnp.float32),
                        r_recon2.astype(jnp.float32), atol=5e-2, rtol=5e-2)
    assert jnp.allclose(mu2, r_mu2, atol=2e-3, rtol=2e-3)
    assert jnp.allclose(logvar2, r_logvar2, atol=2e-3, rtol=2e-3)

    print("KERNEL_OK")
</pallas_src>

<mosaic_0001>
module attributes {stable_mosaic.version = 11 : i64} {
  func.func @cvae_kernel(%arg0: i32, %arg1: memref<8x784xf32, #tpu.memory_space<vmem>>, %arg2: memref<8x10xf32, #tpu.memory_space<vmem>>, %arg3: memref<8x20xf32, #tpu.memory_space<vmem>>, %arg4: memref<784x400xbf16, #tpu.memory_space<vmem>>, %arg5: memref<10x400xbf16, #tpu.memory_space<vmem>>, %arg6: memref<1x400xf32, #tpu.memory_space<vmem>>, %arg7: memref<400x400xbf16, #tpu.memory_space<vmem>>, %arg8: memref<1x400xf32, #tpu.memory_space<vmem>>, %arg9: memref<400x40xf32, #tpu.memory_space<vmem>>, %arg10: memref<1x40xf32, #tpu.memory_space<vmem>>, %arg11: memref<30x400xbf16, #tpu.memory_space<vmem>>, %arg12: memref<1x400xf32, #tpu.memory_space<vmem>>, %arg13: memref<400x400xbf16, #tpu.memory_space<vmem>>, %arg14: memref<1x400xf32, #tpu.memory_space<vmem>>, %arg15: memref<400x784xbf16, #tpu.memory_space<vmem>>, %arg16: memref<1x784xf32, #tpu.memory_space<vmem>>, %arg17: memref<8x784xf32, #tpu.memory_space<vmem>>, %arg18: memref<8x40xf32, #tpu.memory_space<vmem>>) attributes {dimension_semantics = [#tpu.dimension_semantics<parallel>], iteration_bounds = array<i64: 1>, scalar_prefetch = 0 : i64, scratch_operands = 0 : i64, tpu.core_type = #tpu.core_type<tc>, window_params = [{transform_indices = @transform_0, window_bounds = array<i64: 8, 784>}, {transform_indices = @transform_1, window_bounds = array<i64: 8, 10>}, {transform_indices = @transform_2, window_bounds = array<i64: 8, 20>}, {pipeline_mode = #tpu.pipeline_mode<synchronous>, transform_indices = @transform_3, window_bounds = array<i64: 784, 400>}, {pipeline_mode = #tpu.pipeline_mode<synchronous>, transform_indices = @transform_4, window_bounds = array<i64: 10, 400>}, {pipeline_mode = #tpu.pipeline_mode<synchronous>, transform_indices = @transform_5, window_bounds = array<i64: 1, 400>}, {pipeline_mode = #tpu.pipeline_mode<synchronous>, transform_indices = @transform_6, window_bounds = array<i64: 400, 400>}, {pipeline_mode = #tpu.pipeline_mode<synchronous>, transform_indices = @transform_7, window_bounds = array<i64: 1, 400>}, {pipeline_mode = #tpu.pipeline_mode<synchronous>, transform_indices = @transform_8, window_bounds = array<i64: 400, 40>}, {pipeline_mode = #tpu.pipeline_mode<synchronous>, transform_indices = @transform_9, window_bounds = array<i64: 1, 40>}, {pipeline_mode = #tpu.pipeline_mode<synchronous>, transform_indices = @transform_10, window_bounds = array<i64: 30, 400>}, {pipeline_mode = #tpu.pipeline_mode<synchronous>, transform_indices = @transform_11, window_bounds = array<i64: 1, 400>}, {pipeline_mode = #tpu.pipeline_mode<synchronous>, transform_indices = @transform_12, window_bounds = array<i64: 400, 400>}, {pipeline_mode = #tpu.pipeline_mode<synchronous>, transform_indices = @transform_13, window_bounds = array<i64: 1, 400>}, {pipeline_mode = #tpu.pipeline_mode<synchronous>, transform_indices = @transform_14, window_bounds = array<i64: 400, 784>}, {pipeline_mode = #tpu.pipeline_mode<synchronous>, transform_indices = @transform_15, window_bounds = array<i64: 1, 784>}, {transform_indices = @transform_16, window_bounds = array<i64: 8, 784>}, {transform_indices = @transform_17, window_bounds = array<i64: 8, 40>}]} {
    %c0 = arith.constant 0 : index
    %c0_0 = arith.constant 0 : index
    %0 = vector.load %arg1[%c0, %c0_0] : memref<8x784xf32, #tpu.memory_space<vmem>>, vector<8x784xf32>
    %1 = arith.truncf %0 : vector<8x784xf32> to vector<8x784xbf16>
    %c0_1 = arith.constant 0 : index
    %c0_2 = arith.constant 0 : index
    %2 = vector.load %arg2[%c0_1, %c0_2] : memref<8x10xf32, #tpu.memory_space<vmem>>, vector<8x10xf32>
    %c0_3 = arith.constant 0 : index
    %c0_4 = arith.constant 0 : index
    %3 = vector.load %arg2[%c0_3, %c0_4] : memref<8x10xf32, #tpu.memory_space<vmem>>, vector<8x10xf32>
    %4 = arith.truncf %3 : vector<8x10xf32> to vector<8x10xbf16>
    %c0_5 = arith.constant 0 : index
    %c0_6 = arith.constant 0 : index
    %5 = vector.load %arg4[%c0_5, %c0_6] : memref<784x400xbf16, #tpu.memory_space<vmem>>, vector<784x400xbf16>
    %cst = arith.constant dense<0.000000e+00> : vector<8x400xf32>
    %6 = tpu.matmul %1, %5, %cst {dimension_numbers = #tpu.dot_dimension_numbers<[1], [0], [0], [1], [0, 0, 1, 1], [], []>} : vector<8x784xbf16>, vector<784x400xbf16>, vector<8x400xf32> -> vector<8x400xf32>
    %c0_7 = arith.constant 0 : index
    %c0_8 = arith.constant 0 : index
    %7 = vector.load %arg5[%c0_7, %c0_8] : memref<10x400xbf16, #tpu.memory_space<vmem>>, vector<10x400xbf16>
    %cst_9 = arith.constant dense<0.000000e+00> : vector<8x400xf32>
    %8 = tpu.matmul %4, %7, %cst_9 {dimension_numbers = #tpu.dot_dimension_numbers<[1], [0], [0], [1], [0, 0, 1, 1], [], []>} : vector<8x10xbf16>, vector<10x400xbf16>, vector<8x400xf32> -> vector<8x400xf32>
    %9 = arith.addf %6, %8 : vector<8x400xf32>
    %c0_10 = arith.constant 0 : index
    %c0_11 = arith.constant 0 : index
    %10 = vector.load %arg6[%c0_10, %c0_11] : memref<1x400xf32, #tpu.memory_space<vmem>>, vector<1x400xf32>
    %11 = vector.broadcast %10 : vector<1x400xf32> to vector<8x400xf32>
    %12 = arith.addf %9, %11 : vector<8x400xf32>
    %cst_12 = arith.constant 0.000000e+00 : f32
    %13 = vector.broadcast %cst_12 : f32 to vector<8x400xf32>
    %14 = arith.maximumf %12, %13 : vector<8x400xf32>
    %15 = arith.truncf %14 : vector<8x400xf32> to vector<8x400xbf16>
    %c0_13 = arith.constant 0 : index
    %c0_14 = arith.constant 0 : index
    %16 = vector.load %arg7[%c0_13, %c0_14] : memref<400x400xbf16, #tpu.memory_space<vmem>>, vector<400x400xbf16>
    %cst_15 = arith.constant dense<0.000000e+00> : vector<8x400xf32>
    %17 = tpu.matmul %15, %16, %cst_15 {dimension_numbers = #tpu.dot_dimension_numbers<[1], [0], [0], [1], [0, 0, 1, 1], [], []>} : vector<8x400xbf16>, vector<400x400xbf16>, vector<8x400xf32> -> vector<8x400xf32>
    %c0_16 = arith.constant 0 : index
    %c0_17 = arith.constant 0 : index
    %18 = vector.load %arg8[%c0_16, %c0_17] : memref<1x400xf32, #tpu.memory_space<vmem>>, vector<1x400xf32>
    %19 = vector.broadcast %18 : vector<1x400xf32> to vector<8x400xf32>
    %20 = arith.addf %17, %19 : vector<8x400xf32>
    %cst_18 = arith.constant 0.000000e+00 : f32
    %21 = vector.broadcast %cst_18 : f32 to vector<8x400xf32>
    %22 = arith.maximumf %20, %21 : vector<8x400xf32>
    %c0_19 = arith.constant 0 : index
    %c0_20 = arith.constant 0 : index
    %23 = vector.load %arg9[%c0_19, %c0_20] : memref<400x40xf32, #tpu.memory_space<vmem>>, vector<400x40xf32>
    %cst_21 = arith.constant dense<0.000000e+00> : vector<8x40xf32>
    %24 = tpu.matmul %22, %23, %cst_21 {dimension_numbers = #tpu.dot_dimension_numbers<[1], [0], [0], [1], [0, 0, 1, 1], [], []>} : vector<8x400xf32>, vector<400x40xf32>, vector<8x40xf32> -> vector<8x40xf32>
    %c0_22 = arith.constant 0 : index
    %c0_23 = arith.constant 0 : index
    %25 = vector.load %arg10[%c0_22, %c0_23] : memref<1x40xf32, #tpu.memory_space<vmem>>, vector<1x40xf32>
    %26 = vector.broadcast %25 : vector<1x40xf32> to vector<8x40xf32>
    %27 = arith.addf %24, %26 : vector<8x40xf32>
    %28 = vector.extract_strided_slice %27 {offsets = [0, 0], sizes = [8, 20], strides = [1, 1]} : vector<8x40xf32> to vector<8x20xf32>
    %29 = vector.extract_strided_slice %27 {offsets = [0, 20], sizes = [8, 20], strides = [1, 1]} : vector<8x40xf32> to vector<8x20xf32>
    %cst_24 = arith.constant 5.000000e-01 : f32
    %30 = vector.broadcast %cst_24 : f32 to vector<8x20xf32>
    %31 = arith.mulf %30, %29 : vector<8x20xf32>
    %32 = math.exp %31 : vector<8x20xf32>
    %c0_25 = arith.constant 0 : index
    %c0_26 = arith.constant 0 : index
    %33 = vector.load %arg3[%c0_25, %c0_26] : memref<8x20xf32, #tpu.memory_space<vmem>>, vector<8x20xf32>
    %34 = arith.mulf %33, %32 : vector<8x20xf32>
    %35 = arith.addf %28, %34 : vector<8x20xf32>
    %36 = tpu.concatenate %35, %2 in 1 : vector<8x20xf32>, vector<8x10xf32> -> vector<8x30xf32>
    %37 = arith.truncf %36 : vector<8x30xf32> to vector<8x30xbf16>
    %c0_27 = arith.constant 0 : index
    %c0_28 = arith.constant 0 : index
    %38 = vector.load %arg11[%c0_27, %c0_28] : memref<30x400xbf16, #tpu.memory_space<vmem>>, vector<30x400xbf16>
    %cst_29 = arith.constant dense<0.000000e+00> : vector<8x400xf32>
    %39 = tpu.matmul %37, %38, %cst_29 {dimension_numbers = #tpu.dot_dimension_numbers<[1], [0], [0], [1], [0, 0, 1, 1], [], []>} : vector<8x30xbf16>, vector<30x400xbf16>, vector<8x400xf32> -> vector<8x400xf32>
    %c0_30 = arith.constant 0 : index
    %c0_31 = arith.constant 0 : index
    %40 = vector.load %arg12[%c0_30, %c0_31] : memref<1x400xf32, #tpu.memory_space<vmem>>, vector<1x400xf32>
    %41 = vector.broadcast %40 : vector<1x400xf32> to vector<8x400xf32>
    %42 = arith.addf %39, %41 : vector<8x400xf32>
    %cst_32 = arith.constant 0.000000e+00 : f32
    %43 = vector.broadcast %cst_32 : f32 to vector<8x400xf32>
    %44 = arith.maximumf %42, %43 : vector<8x400xf32>
    %45 = arith.truncf %44 : vector<8x400xf32> to vector<8x400xbf16>
    %c0_33 = arith.constant 0 : index
    %c0_34 = arith.constant 0 : index
    %46 = vector.load %arg13[%c0_33, %c0_34] : memref<400x400xbf16, #tpu.memory_space<vmem>>, vector<400x400xbf16>
    %cst_35 = arith.constant dense<0.000000e+00> : vector<8x400xf32>
    %47 = tpu.matmul %45, %46, %cst_35 {dimension_numbers = #tpu.dot_dimension_numbers<[1], [0], [0], [1], [0, 0, 1, 1], [], []>} : vector<8x400xbf16>, vector<400x400xbf16>, vector<8x400xf32> -> vector<8x400xf32>
    %c0_36 = arith.constant 0 : index
    %c0_37 = arith.constant 0 : index
    %48 = vector.load %arg14[%c0_36, %c0_37] : memref<1x400xf32, #tpu.memory_space<vmem>>, vector<1x400xf32>
    %49 = vector.broadcast %48 : vector<1x400xf32> to vector<8x400xf32>
    %50 = arith.addf %47, %49 : vector<8x400xf32>
    %cst_38 = arith.constant 0.000000e+00 : f32
    %51 = vector.broadcast %cst_38 : f32 to vector<8x400xf32>
    %52 = arith.maximumf %50, %51 : vector<8x400xf32>
    %53 = arith.truncf %52 : vector<8x400xf32> to vector<8x400xbf16>
    %c0_39 = arith.constant 0 : index
    %c0_40 = arith.constant 0 : index
    %54 = vector.load %arg15[%c0_39, %c0_40] : memref<400x784xbf16, #tpu.memory_space<vmem>>, vector<400x784xbf16>
    %cst_41 = arith.constant dense<0.000000e+00> : vector<8x784xf32>
    %55 = tpu.matmul %53, %54, %cst_41 {dimension_numbers = #tpu.dot_dimension_numbers<[1], [0], [0], [1], [0, 0, 1, 1], [], []>} : vector<8x400xbf16>, vector<400x784xbf16>, vector<8x784xf32> -> vector<8x784xf32>
    %c0_42 = arith.constant 0 : index
    %c0_43 = arith.constant 0 : index
    %56 = vector.load %arg16[%c0_42, %c0_43] : memref<1x784xf32, #tpu.memory_space<vmem>>, vector<1x784xf32>
    %57 = vector.broadcast %56 : vector<1x784xf32> to vector<8x784xf32>
    %58 = arith.addf %55, %57 : vector<8x784xf32>
    %c0_44 = arith.constant 0 : index
    %c0_45 = arith.constant 0 : index
    %59 = vector.load %arg17[%c0_44, %c0_45] : memref<8x784xf32, #tpu.memory_space<vmem>>, vector<8x784xf32>
    tpu.vector_store %arg17[%c0_44, %c0_45], %58 {strides = array<i32>} : memref<8x784xf32, #tpu.memory_space<vmem>>, vector<8x784xf32>,
    %c0_46 = arith.constant 0 : index
    %c0_47 = arith.constant 0 : index
    %60 = vector.load %arg18[%c0_46, %c0_47] : memref<8x40xf32, #tpu.memory_space<vmem>>, vector<8x40xf32>
    tpu.vector_store %arg18[%c0_46, %c0_47], %27 {strides = array<i32>} : memref<8x40xf32, #tpu.memory_space<vmem>>, vector<8x40xf32>,
    return
  }
  func.func @transform_0(%arg0: i32) -> (i32, i32) {
    %c0_i32 = arith.constant 0 : i32
    %c0_i32_0 = arith.constant 0 : i32
    return %arg0, %c0_i32 : i32, i32
  }
  func.func @transform_1(%arg0: i32) -> (i32, i32) {
    %c0_i32 = arith.constant 0 : i32
    %c0_i32_0 = arith.constant 0 : i32
    return %arg0, %c0_i32 : i32, i32
  }
  func.func @transform_2(%arg0: i32) -> (i32, i32) {
    %c0_i32 = arith.constant 0 : i32
    %c0_i32_0 = arith.constant 0 : i32
    return %arg0, %c0_i32 : i32, i32
  }
  func.func @transform_3(%arg0: i32) -> (i32, i32) {
    %c0_i32 = arith.constant 0 : i32
    %c0_i32_0 = arith.constant 0 : i32
    %c0_i32_1 = arith.constant 0 : i32
    return %c0_i32, %c0_i32_0 : i32, i32
  }
  func.func @transform_4(%arg0: i32) -> (i32, i32) {
    %c0_i32 = arith.constant 0 : i32
    %c0_i32_0 = arith.constant 0 : i32
    %c0_i32_1 = arith.constant 0 : i32
    return %c0_i32, %c0_i32_0 : i32, i32
  }
  func.func @transform_5(%arg0: i32) -> (i32, i32) {
    %c0_i32 = arith.constant 0 : i32
    %c0_i32_0 = arith.constant 0 : i32
    %c0_i32_1 = arith.constant 0 : i32
    return %c0_i32, %c0_i32_0 : i32, i32
  }
  func.func @transform_6(%arg0: i32) -> (i32, i32) {
    %c0_i32 = arith.constant 0 : i32
    %c0_i32_0 = arith.constant 0 : i32
    %c0_i32_1 = arith.constant 0 : i32
    return %c0_i32, %c0_i32_0 : i32, i32
  }
  func.func @transform_7(%arg0: i32) -> (i32, i32) {
    %c0_i32 = arith.constant 0 : i32
    %c0_i32_0 = arith.constant 0 : i32
    %c0_i32_1 = arith.constant 0 : i32
    return %c0_i32, %c0_i32_0 : i32, i32
  }
  func.func @transform_8(%arg0: i32) -> (i32, i32) {
    %c0_i32 = arith.constant 0 : i32
    %c0_i32_0 = arith.constant 0 : i32
    %c0_i32_1 = arith.constant 0 : i32
    return %c0_i32, %c0_i32_0 : i32, i32
  }
  func.func @transform_9(%arg0: i32) -> (i32, i32) {
    %c0_i32 = arith.constant 0 : i32
    %c0_i32_0 = arith.constant 0 : i32
    %c0_i32_1 = arith.constant 0 : i32
    return %c0_i32, %c0_i32_0 : i32, i32
  }
  func.func @transform_10(%arg0: i32) -> (i32, i32) {
    %c0_i32 = arith.constant 0 : i32
    %c0_i32_0 = arith.constant 0 : i32
    %c0_i32_1 = arith.constant 0 : i32
    return %c0_i32, %c0_i32_0 : i32, i32
  }
  func.func @transform_11(%arg0: i32) -> (i32, i32) {
    %c0_i32 = arith.constant 0 : i32
    %c0_i32_0 = arith.constant 0 : i32
    %c0_i32_1 = arith.constant 0 : i32
    return %c0_i32, %c0_i32_0 : i32, i32
  }
  func.func @transform_12(%arg0: i32) -> (i32, i32) {
    %c0_i32 = arith.constant 0 : i32
    %c0_i32_0 = arith.constant 0 : i32
    %c0_i32_1 = arith.constant 0 : i32
    return %c0_i32, %c0_i32_0 : i32, i32
  }
  func.func @transform_13(%arg0: i32) -> (i32, i32) {
    %c0_i32 = arith.constant 0 : i32
    %c0_i32_0 = arith.constant 0 : i32
    %c0_i32_1 = arith.constant 0 : i32
    return %c0_i32, %c0_i32_0 : i32, i32
  }
  func.func @transform_14(%arg0: i32) -> (i32, i32) {
    %c0_i32 = arith.constant 0 : i32
    %c0_i32_0 = arith.constant 0 : i32
    %c0_i32_1 = arith.constant 0 : i32
    return %c0_i32, %c0_i32_0 : i32, i32
  }
  func.func @transform_15(%arg0: i32) -> (i32, i32) {
    %c0_i32 = arith.constant 0 : i32
    %c0_i32_0 = arith.constant 0 : i32
    %c0_i32_1 = arith.constant 0 : i32
    return %c0_i32, %c0_i32_0 : i32, i32
  }
  func.func @transform_16(%arg0: i32) -> (i32, i32) {
    %c0_i32 = arith.constant 0 : i32
    %c0_i32_0 = arith.constant 0 : i32
    return %arg0, %c0_i32 : i32, i32
  }
  func.func @transform_17(%arg0: i32) -> (i32, i32) {
    %c0_i32 = arith.constant 0 : i32
    %c0_i32_0 = arith.constant 0 : i32
    return %arg0, %c0_i32 : i32, i32
  }
}

</mosaic_0001>

<llo_original>
// kernel: _cvae_forward_impl.1
$region0: #{_cvae_forward_impl.1}
  #allocation0 [shape = 'u32[]', space=smem, size = 0x4, offset = 0x4, fixed_abs, tag = 'smem constant byte address 0x4 - core index']
  #allocation1 [shape = 'u32[144,128]{1,0:T(1,128)}', space=vmem, size = 0x12000, scoped, tag = 'internal scratch']
  %s0 = inlined_call_operand.vmem [shape: f32[8,784], index: 0, kind: input, shape index: {}]
  %s1 = inlined_call_operand.vmem [shape: f32[8,10], index: 1, kind: input, shape index: {}]
  %s2 = inlined_call_operand.vmem [shape: f32[8,20], index: 2, kind: input, shape index: {}]
  %s3 = inlined_call_operand.vmem [shape: bf16[784,400], index: 3, kind: input, shape index: {}]
  %s4 = inlined_call_operand.vmem [shape: bf16[10,400], index: 4, kind: input, shape index: {}]
  %s5 = inlined_call_operand.vmem [shape: f32[1,400], index: 5, kind: input, shape index: {}]
  %s6 = inlined_call_operand.vmem [shape: bf16[400,400], index: 6, kind: input, shape index: {}]
  %s7 = inlined_call_operand.vmem [shape: f32[1,400], index: 7, kind: input, shape index: {}]
  %s8 = inlined_call_operand.vmem [shape: f32[400,40], index: 8, kind: input, shape index: {}]
  %s9 = inlined_call_operand.vmem [shape: f32[1,40], index: 9, kind: input, shape index: {}]
  %s10 = inlined_call_operand.vmem [shape: bf16[30,400], index: 10, kind: input, shape index: {}]
  %s11 = inlined_call_operand.vmem [shape: f32[1,400], index: 11, kind: input, shape index: {}]
  %s12 = inlined_call_operand.vmem [shape: bf16[400,400], index: 12, kind: input, shape index: {}]
  %s13 = inlined_call_operand.vmem [shape: f32[1,400], index: 13, kind: input, shape index: {}]
  %s14 = inlined_call_operand.vmem [shape: bf16[400,784], index: 14, kind: input, shape index: {}]
  %s15 = inlined_call_operand.vmem [shape: f32[1,784], index: 15, kind: input, shape index: {}]
  %s16 = inlined_call_operand.hbm [shape: f32[8,784], index: 16, kind: output, shape index: {0}]
  %s17 = inlined_call_operand.vmem [shape: f32[8,40], index: 17, kind: output, shape index: {1}]
  %18 = xla_tuple %s16, %s17
  %s19 = sld [smem:[#allocation0]]
  $region82: #{_cvae_forward_impl.1} parent=0
    _
  %s21 = ssub.s32 1, %s19
  %s22 = scalar_select 0, %s21, %s19
  $region1: #{_cvae_forward_impl.1} parent=0
    #allocation2 [shape = 'u8[28672]{0}', space=vmem, size = 0x7000, scoped, tag = 'output window, operand 0, single buffered']
    #allocation3 [shape = 's32[1]{0}', space=sflag, size = 0x4, scoped, tag = 'scoped memory for _cvae_forward_impl.1']
    %23 = vsyncpa [#allocation3], 0
    // Predicated region
    $region2: #{_cvae_forward_impl.1} parent=1 // pred_check
      _
    $region3: #{_cvae_forward_impl.1} parent=1 // pred_check_branch
      %25 = sbr.rel (0) target = $region5
    $region4: #{_cvae_forward_impl.1} parent=1 // pred_region
      _
    $region5: #{_cvae_forward_impl.1} parent=1 // pred_fallthru
      _
    // Predicated region
    $region6: #{_cvae_forward_impl.1} parent=1 // pred_check
      _
    $region7: #{_cvae_forward_impl.1} parent=1 // pred_check_branch
      %27 = sbr.rel (0) target = $region9
    $region8: #{_cvae_forward_impl.1} parent=1 // pred_region
      _
    $region9: #{_cvae_forward_impl.1} parent=1 // pred_fallthru
      _
    // Predicated region
    $region10: #{_cvae_forward_impl.1} parent=1 // pred_check
      _
    $region11: #{_cvae_forward_impl.1} parent=1 // pred_check_branch
      %29 = sbr.rel (0) target = $region13
    $region12: #{_cvae_forward_impl.1} parent=1 // pred_region
      _
    $region13: #{_cvae_forward_impl.1} parent=1 // pred_fallthru
      _
    // Predicated region
    $region14: #{_cvae_forward_impl.1} parent=1 // pred_check
      _
    $region15: #{_cvae_forward_impl.1} parent=1 // pred_check_branch
      %31 = sbr.rel (0) target = $region17
    $region16: #{_cvae_forward_impl.1} parent=1 // pred_region
      _
    $region17: #{_cvae_forward_impl.1} parent=1 // pred_fallthru
      _
    // Predicated region
    $region18: #{_cvae_forward_impl.1} parent=1 // pred_check
      _
    $region19: #{_cvae_forward_impl.1} parent=1 // pred_check_branch
      %33 = sbr.rel (0) target = $region21
    $region20: #{_cvae_forward_impl.1} parent=1 // pred_region
      _
    $region21: #{_cvae_forward_impl.1} parent=1 // pred_fallthru
      _
    // Predicated region
    $region22: #{_cvae_forward_impl.1} parent=1 // pred_check
      _
    $region23: #{_cvae_forward_impl.1} parent=1 // pred_check_branch
      %35 = sbr.rel (0) target = $region25
    $region24: #{_cvae_forward_impl.1} parent=1 // pred_region
      _
    $region25: #{_cvae_forward_impl.1} parent=1 // pred_fallthru
      _
    // Predicated region
    $region26: #{_cvae_forward_impl.1} parent=1 // pred_check
      _
    $region27: #{_cvae_forward_impl.1} parent=1 // pred_check_branch
      %37 = sbr.rel (0) target = $region29
    $region28: #{_cvae_forward_impl.1} parent=1 // pred_region
      _
    $region29: #{_cvae_forward_impl.1} parent=1 // pred_fallthru
      _
    // Predicated region
    $region30: #{_cvae_forward_impl.1} parent=1 // pred_check
      _
    $region31: #{_cvae_forward_impl.1} parent=1 // pred_check_branch
      %39 = sbr.rel (0) target = $region33
    $region32: #{_cvae_forward_impl.1} parent=1 // pred_region
      _
    $region33: #{_cvae_forward_impl.1} parent=1 // pred_fallthru
      _
    // Predicated region
    $region34: #{_cvae_forward_impl.1} parent=1 // pred_check
      _
    $region35: #{_cvae_forward_impl.1} parent=1 // pred_check_branch
      %41 = sbr.rel (0) target = $region37
    $region36: #{_cvae_forward_impl.1} parent=1 // pred_region
      _
    $region37: #{_cvae_forward_impl.1} parent=1 // pred_fallthru
      _
    // Predicated region
    $region38: #{_cvae_forward_impl.1} parent=1 // pred_check
      _
    $region39: #{_cvae_forward_impl.1} parent=1 // pred_check_branch
      %43 = sbr.rel (0) target = $region41
    $region40: #{_cvae_forward_impl.1} parent=1 // pred_region
      _
    $region41: #{_cvae_forward_impl.1} parent=1 // pred_fallthru
      _
    // Predicated region
    $region42: #{_cvae_forward_impl.1} parent=1 // pred_check
      _
    $region43: #{_cvae_forward_impl.1} parent=1 // pred_check_branch
      %45 = sbr.rel (0) target = $region45
    $region44: #{_cvae_forward_impl.1} parent=1 // pred_region
      _
    $region45: #{_cvae_forward_impl.1} parent=1 // pred_fallthru
      _
    // Predicated region
    $region46: #{_cvae_forward_impl.1} parent=1 // pred_check
      _
    $region47: #{_cvae_forward_impl.1} parent=1 // pred_check_branch
      %47 = sbr.rel (0) target = $region49
    $region48: #{_cvae_forward_impl.1} parent=1 // pred_region
      _
    $region49: #{_cvae_forward_impl.1} parent=1 // pred_fallthru
      _
    // Predicated region
    $region50: #{_cvae_forward_impl.1} parent=1 // pred_check
      _
    $region51: #{_cvae_forward_impl.1} parent=1 // pred_check_branch
      %49 = sbr.rel (0) target = $region53
    $region52: #{_cvae_forward_impl.1} parent=1 // pred_region
      _
    $region53: #{_cvae_forward_impl.1} parent=1 // pred_fallthru
      _
    // Predicated region
    $region54: #{_cvae_forward_impl.1} parent=1 // pred_check
      _
    $region55: #{_cvae_forward_impl.1} parent=1 // pred_check_branch
      %51 = sbr.rel (0) target = $region57
    $region56: #{_cvae_forward_impl.1} parent=1 // pred_region
      _
    $region57: #{_cvae_forward_impl.1} parent=1 // pred_fallthru
      _
    // Predicated region
    $region58: #{_cvae_forward_impl.1} parent=1 // pred_check
      _
    $region59: #{_cvae_forward_impl.1} parent=1 // pred_check_branch
      %53 = sbr.rel (0) target = $region61
    $region60: #{_cvae_forward_impl.1} parent=1 // pred_region
      _
    $region61: #{_cvae_forward_impl.1} parent=1 // pred_fallthru
      _
    // Predicated region
    $region62: #{_cvae_forward_impl.1} parent=1 // pred_check
      _
    $region63: #{_cvae_forward_impl.1} parent=1 // pred_check_branch
      %55 = sbr.rel (0) target = $region65
    $region64: #{_cvae_forward_impl.1} parent=1 // pred_region
      _
    $region65: #{_cvae_forward_impl.1} parent=1 // pred_fallthru
      _
    %v57 = vld [vmem:[%s0] sm:$0xff]
    %v58 = vld [vmem:[%s0 + $0x8] sm:$0xff]
    %v59 = vld [vmem:[%s0 + $0x10] sm:$0xff]
    %v60 = vld [vmem:[%s0 + $0x18] sm:$0xff]
    %v61 = vld [vmem:[%s0 + $0x20] sm:$0xff]
    %v62 = vld [vmem:[%s0 + $0x28] sm:$0xff]
    %v63 = vld [vmem:[%s0 + $0x30] sm:$0xff]
    %v64 = vpack.c.bf16 %v57, %v57
    %v65 = vpack.c.bf16 %v58, %v58
    %v66 = vpack.c.bf16 %v59, %v59
    %v67 = vpack.c.bf16 %v60, %v60
    %v68 = vpack.c.bf16 %v61, %v61
    %v69 = vpack.c.bf16 %v62, %v62
    %v70 = vpack.c.bf16 %v63, %v63
    %v71 = vld [vmem:[%s1] sm:$0xff]
    %v72 = vpack.c.bf16 %v71, %v71
    %v73 = vld [vmem:[%s3] sm:$0xff]
    %v74 = vld [vmem:[%s3 + $0x8] sm:$0xff]
    %v75 = vld [vmem:[%s3 + $0x10] sm:$0xff]
    %v76 = vld [vmem:[%s3 + $0x18] sm:$0xff]
    %v77 = vld [vmem:[%s3 + $0x20] sm:$0xff]
    %v78 = vld [vmem:[%s3 + $0x28] sm:$0xff]
    %v79 = vld [vmem:[%s3 + $0x30] sm:$0xff]
    %v80 = vld [vmem:[%s3 + $0x38] sm:$0xff]
    %v81 = vld [vmem:[%s3 + $0x40] sm:$0xff]
    %v82 = vld [vmem:[%s3 + $0x48] sm:$0xff]
    %v83 = vld [vmem:[%s3 + $0x50] sm:$0xff]
    %v84 = vld [vmem:[%s3 + $0x58] sm:$0xff]
    %v85 = vld [vmem:[%s3 + $0x60] sm:$0xff]
    %v86 = vld [vmem:[%s3 + $0x68] sm:$0xff]
    %v87 = vld [vmem:[%s3 + $0x70] sm:$0xff]
    %v88 = vld [vmem:[%s3 + $0x78] sm:$0xff]
    %v89 = vld [vmem:[%s3 + $0x80] sm:$0xff]
    %v90 = vld [vmem:[%s3 + $0x88] sm:$0xff]
    %v91 = vld [vmem:[%s3 + $0x90] sm:$0xff]
    %v92 = vld [vmem:[%s3 + $0x98] sm:$0xff]
    %v93 = vld [vmem:[%s3 + $0xa0] sm:$0xff]
    %v94 = vld [vmem:[%s3 + $0xa8] sm:$0xff]
    %v95 = vld [vmem:[%s3 + $0xb0] sm:$0xff]
    %v96 = vld [vmem:[%s3 + $0xb8] sm:$0xff]
    %v97 = vld [vmem:[%s3 + $0xc0] sm:$0xff]
    %v98 = vld [vmem:[%s3 + $0xc8] sm:$0xff]
    %v99 = vld [vmem:[%s3 + $0xd0] sm:$0xff]
    %v100 = vld [vmem:[%s3 + $0xd8] sm:$0xff]
    %v101 = vld [vmem:[%s3 + $0xe0] sm:$0xff]
    %v102 = vld [vmem:[%s3 + $0xe8] sm:$0xff]
    %v103 = vld [vmem:[%s3 + $0xf0] sm:$0xff]
    %v104 = vld [vmem:[%s3 + $0xf8] sm:$0xff]
    %v105 = vld [vmem:[%s3 + $0x100] sm:$0xff]
    %v106 = vld [vmem:[%s3 + $0x108] sm:$0xff]
    %v107 = vld [vmem:[%s3 + $0x110] sm:$0xff]
    %v108 = vld [vmem:[%s3 + $0x118] sm:$0xff]
    %v109 = vld [vmem:[%s3 + $0x120] sm:$0xff]
    %v110 = vld [vmem:[%s3 + $0x128] sm:$0xff]
    %v111 = vld [vmem:[%s3 + $0x130] sm:$0xff]
    %v112 = vld [vmem:[%s3 + $0x138] sm:$0xff]
    %v113 = vld [vmem:[%s3 + $0x140] sm:$0xff]
    %v114 = vld [vmem:[%s3 + $0x148] sm:$0xff]
    %v115 = vld [vmem:[%s3 + $0x150] sm:$0xff]
    %v116 = vld [vmem:[%s3 + $0x158] sm:$0xff]
    %v117 = vld [vmem:[%s3 + $0x160] sm:$0xff]
    %v118 = vld [vmem:[%s3 + $0x168] sm:$0xff]
    %v119 = vld [vmem:[%s3 + $0x170] sm:$0xff]
    %v120 = vld [vmem:[%s3 + $0x178] sm:$0xff]
    %v121 = vld [vmem:[%s3 + $0x180] sm:$0xff]
    %v122 = vld [vmem:[%s3 + $0x188] sm:$0xff]
    %v123 = vld [vmem:[%s3 + $0x190] sm:$0xff]
    %v124 = vld [vmem:[%s3 + $0x198] sm:$0xff]
    %v125 = vld [vmem:[%s3 + $0x1a0] sm:$0xff]
    %v126 = vld [vmem:[%s3 + $0x1a8] sm:$0xff]
    %v127 = vld [vmem:[%s3 + $0x1b0] sm:$0xff]
    %v128 = vld [vmem:[%s3 + $0x1b8] sm:$0xff]
    %v129 = vld [vmem:[%s3 + $0x1c0] sm:$0xff]
    %v130 = vld [vmem:[%s3 + $0x1c8] sm:$0xff]
    %v131 = vld [vmem:[%s3 + $0x1d0] sm:$0xff]
    %v132 = vld [vmem:[%s3 + $0x1d8] sm:$0xff]
    %v133 = vld [vmem:[%s3 + $0x1e0] sm:$0xff]
    %v134 = vld [vmem:[%s3 + $0x1e8] sm:$0xff]
    %v135 = vld [vmem:[%s3 + $0x1f0] sm:$0xff]
    %v136 = vld [vmem:[%s3 + $0x1f8] sm:$0xff]
    %v137 = vld [vmem:[%s3 + $0x200] sm:$0xff]
    %v138 = vld [vmem:[%s3 + $0x208] sm:$0xff]
    %v139 = vld [vmem:[%s3 + $0x210] sm:$0xff]
    %v140 = vld [vmem:[%s3 + $0x218] sm:$0xff]
    %v141 = vld [vmem:[%s3 + $0x220] sm:$0xff]
    %v142 = vld [vmem:[%s3 + $0x228] sm:$0xff]
    %v143 = vld [vmem:[%s3 + $0x230] sm:$0xff]
    %v144 = vld [vmem:[%s3 + $0x238] sm:$0xff]
    %v145 = vld [vmem:[%s3 + $0x240] sm:$0xff]
    %v146 = vld [vmem:[%s3 + $0x248] sm:$0xff]
    %v147 = vld [vmem:[%s3 + $0x250] sm:$0xff]
    %v148 = vld [vmem:[%s3 + $0x258] sm:$0xff]
    %v149 = vld [vmem:[%s3 + $0x260] sm:$0xff]
    %v150 = vld [vmem:[%s3 + $0x268] sm:$0xff]
    %v151 = vld [vmem:[%s3 + $0x270] sm:$0xff]
    %v152 = vld [vmem:[%s3 + $0x278] sm:$0xff]
    %v153 = vld [vmem:[%s3 + $0x280] sm:$0xff]
    %v154 = vld [vmem:[%s3 + $0x288] sm:$0xff]
    %v155 = vld [vmem:[%s3 + $0x290] sm:$0xff]
    %v156 = vld [vmem:[%s3 + $0x298] sm:$0xff]
    %v157 = vld [vmem:[%s3 + $0x2a0] sm:$0xff]
    %v158 = vld [vmem:[%s3 + $0x2a8] sm:$0xff]
    %v159 = vld [vmem:[%s3 + $0x2b0] sm:$0xff]
    %v160 = vld [vmem:[%s3 + $0x2b8] sm:$0xff]
    %v161 = vld [vmem:[%s3 + $0x2c0] sm:$0xff]
    %v162 = vld [vmem:[%s3 + $0x2c8] sm:$0xff]
    %v163 = vld [vmem:[%s3 + $0x2d0] sm:$0xff]
    %v164 = vld [vmem:[%s3 + $0x2d8] sm:$0xff]
    %v165 = vld [vmem:[%s3 + $0x2e0] sm:$0xff]
    %v166 = vld [vmem:[%s3 + $0x2e8] sm:$0xff]
    %v167 = vld [vmem:[%s3 + $0x2f0] sm:$0xff]
    %v168 = vld [vmem:[%s3 + $0x2f8] sm:$0xff]
    %v169 = vld [vmem:[%s3 + $0x300] sm:$0xff]
    %v170 = vld [vmem:[%s3 + $0x308] sm:$0xff]
    %v171 = vld [vmem:[%s3 + $0x310] sm:$0xff]
    %v172 = vld [vmem:[%s3 + $0x318] sm:$0xff]
    %v173 = vld [vmem:[%s3 + $0x320] sm:$0xff]
    %v174 = vld [vmem:[%s3 + $0x328] sm:$0xff]
    %v175 = vld [vmem:[%s3 + $0x330] sm:$0xff]
    %v176 = vld [vmem:[%s3 + $0x338] sm:$0xff]
    %v177 = vld [vmem:[%s3 + $0x340] sm:$0xff]
    %v178 = vld [vmem:[%s3 + $0x348] sm:$0xff]
    %v179 = vld [vmem:[%s3 + $0x350] sm:$0xff]
    %v180 = vld [vmem:[%s3 + $0x358] sm:$0xff]
    %v181 = vld [vmem:[%s3 + $0x360] sm:$0xff]
    %v182 = vld [vmem:[%s3 + $0x368] sm:$0xff]
    %v183 = vld [vmem:[%s3 + $0x370] sm:$0xff]
    %v184 = vld [vmem:[%s3 + $0x378] sm:$0xff]
    %v185 = vld [vmem:[%s3 + $0x380] sm:$0xff]
    %v186 = vld [vmem:[%s3 + $0x388] sm:$0xff]
    %v187 = vld [vmem:[%s3 + $0x390] sm:$0xff]
    %v188 = vld [vmem:[%s3 + $0x398] sm:$0xff]
    %v189 = vld [vmem:[%s3 + $0x3a0] sm:$0xff]
    %v190 = vld [vmem:[%s3 + $0x3a8] sm:$0xff]
    %v191 = vld [vmem:[%s3 + $0x3b0] sm:$0xff]
    %v192 = vld [vmem:[%s3 + $0x3b8] sm:$0xff]
    %v193 = vld [vmem:[%s3 + $0x3c0] sm:$0xff]
    %v194 = vld [vmem:[%s3 + $0x3c8] sm:$0xff]
    %v195 = vld [vmem:[%s3 + $0x3d0] sm:$0xff]
    %v196 = vld [vmem:[%s3 + $0x3d8] sm:$0xff]
    %v197 = vld [vmem:[%s3 + $0x3e0] sm:$0xff]
    %v198 = vld [vmem:[%s3 + $0x3e8] sm:$0xff]
    %v199 = vld [vmem:[%s3 + $0x3f0] sm:$0xff]
    %v200 = vld [vmem:[%s3 + $0x3f8] sm:$0xff]
    %v201 = vld [vmem:[%s3 + $0x400] sm:$0xff]
    %v202 = vld [vmem:[%s3 + $0x408] sm:$0xff]
    %v203 = vld [vmem:[%s3 + $0x410] sm:$0xff]
    %v204 = vld [vmem:[%s3 + $0x418] sm:$0xff]
    %v205 = vld [vmem:[%s3 + $0x420] sm:$0xff]
    %v206 = vld [vmem:[%s3 + $0x428] sm:$0xff]
    %v207 = vld [vmem:[%s3 + $0x430] sm:$0xff]
    %v208 = vld [vmem:[%s3 + $0x438] sm:$0xff]
    %v209 = vld [vmem:[%s3 + $0x440] sm:$0xff]
    %v210 = vld [vmem:[%s3 + $0x448] sm:$0xff]
    %v211 = vld [vmem:[%s3 + $0x450] sm:$0xff]
    %v212 = vld [vmem:[%s3 + $0x458] sm:$0xff]
    %v213 = vld [vmem:[%s3 + $0x460] sm:$0xff]
    %v214 = vld [vmem:[%s3 + $0x468] sm:$0xff]
    %v215 = vld [vmem:[%s3 + $0x470] sm:$0xff]
    %v216 = vld [vmem:[%s3 + $0x478] sm:$0xff]
    %v217 = vld [vmem:[%s3 + $0x480] sm:$0xff]
    %v218 = vld [vmem:[%s3 + $0x488] sm:$0xff]
    %v219 = vld [vmem:[%s3 + $0x490] sm:$0xff]
    %v220 = vld [vmem:[%s3 + $0x498] sm:$0xff]
    %v221 = vld [vmem:[%s3 + $0x4a0] sm:$0xff]
    %v222 = vld [vmem:[%s3 + $0x4a8] sm:$0xff]
    %v223 = vld [vmem:[%s3 + $0x4b0] sm:$0xff]
    %v224 = vld [vmem:[%s3 + $0x4b8] sm:$0xff]
    %v225 = vld [vmem:[%s3 + $0x4c0] sm:$0xff]
    %v226 = vld [vmem:[%s3 + $0x4c8] sm:$0xff]
    %v227 = vld [vmem:[%s3 + $0x4d0] sm:$0xff]
    %v228 = vld [vmem:[%s3 + $0x4d8] sm:$0xff]
    %v229 = vld [vmem:[%s3 + $0x4e0] sm:$0xff]
    %v230 = vld [vmem:[%s3 + $0x4e8] sm:$0xff]
    %v231 = vld [vmem:[%s3 + $0x4f0] sm:$0xff]
    %v232 = vld [vmem:[%s3 + $0x4f8] sm:$0xff]
    %v233 = vld [vmem:[%s3 + $0x500] sm:$0xff]
    %v234 = vld [vmem:[%s3 + $0x508] sm:$0xff]
    %v235 = vld [vmem:[%s3 + $0x510] sm:$0xff]
    %v236 = vld [vmem:[%s3 + $0x518] sm:$0xff]
    %v237 = vld [vmem:[%s3 + $0x520] sm:$0xff]
    %v238 = vld [vmem:[%s3 + $0x528] sm:$0xff]
    %v239 = vld [vmem:[%s3 + $0x530] sm:$0xff]
    %v240 = vld [vmem:[%s3 + $0x538] sm:$0xff]
    %v241 = vld [vmem:[%s3 + $0x540] sm:$0xff]
    %v242 = vld [vmem:[%s3 + $0x548] sm:$0xff]
    %v243 = vld [vmem:[%s3 + $0x550] sm:$0xff]
    %v244 = vld [vmem:[%s3 + $0x558] sm:$0xff]
    %v245 = vld [vmem:[%s3 + $0x560] sm:$0xff]
    %v246 = vld [vmem:[%s3 + $0x568] sm:$0xff]
    %v247 = vld [vmem:[%s3 + $0x570] sm:$0xff]
    %v248 = vld [vmem:[%s3 + $0x578] sm:$0xff]
    %v249 = vld [vmem:[%s3 + $0x580] sm:$0xff]
    %v250 = vld [vmem:[%s3 + $0x588] sm:$0xff]
    %v251 = vld [vmem:[%s3 + $0x590] sm:$0xff]
    %v252 = vld [vmem:[%s3 + $0x598] sm:$0xff]
    %v253 = vld [vmem:[%s3 + $0x5a0] sm:$0xff]
    %v254 = vld [vmem:[%s3 + $0x5a8] sm:$0xff]
    %v255 = vld [vmem:[%s3 + $0x5b0] sm:$0xff]
    %v256 = vld [vmem:[%s3 + $0x5b8] sm:$0xff]
    %v257 = vld [vmem:[%s3 + $0x5c0] sm:$0xff]
    %v258 = vld [vmem:[%s3 + $0x5c8] sm:$0xff]
    %v259 = vld [vmem:[%s3 + $0x5d0] sm:$0xff]
    %v260 = vld [vmem:[%s3 + $0x5d8] sm:$0xff]
    %v261 = vld [vmem:[%s3 + $0x5e0] sm:$0xff]
    %v262 = vld [vmem:[%s3 + $0x5e8] sm:$0xff]
    %v263 = vld [vmem:[%s3 + $0x5f0] sm:$0xff]
    %v264 = vld [vmem:[%s3 + $0x5f8] sm:$0xff]
    %v265 = vld [vmem:[%s3 + $0x600] sm:$0xff]
    %v266 = vld [vmem:[%s3 + $0x608] sm:$0xff]
    %v267 = vld [vmem:[%s3 + $0x610] sm:$0xff]
    %v268 = vld [vmem:[%s3 + $0x618] sm:$0xff]
    %v269 = vld [vmem:[%s4] sm:$0xff]
    %v270 = vld [vmem:[%s4 + $0x8] sm:$0xff]
    %v271 = vld [vmem:[%s4 + $0x10] sm:$0x11]
    %v272 = vld [vmem:[%s4 + $0x18] sm:$0x11]
    %v277 = vunpack.c.l.b16 %v269
    %v278 = vunpack.c.h.b16 %v269
    %v279 = vunpack.c.l.b16 %v270
    %v280 = vunpack.c.h.b16 %v270
    %v281 = vunpack.c.l.b16 %v271
    %v282 = vunpack.c.h.b16 %v271
    %v283 = vunpack.c.l.b16 %v272
    %v284 = vunpack.c.h.b16 %v272
    %v285 = vpack.c.b16 %v281, %v277
    %v286 = vpack.c.b16 %v282, %v278
    %v287 = vpack.c.b16 %v283, %v279
    %v288 = vpack.c.b16 %v284, %v280
    %vm289 = vcmask 80896
    %v291 = vsel %vm289, %v72, 0
    %vm293 = vcmask 1044480
    %v295 = vsel %vm293, %v285, 0
    %v298 = vsel %vm293, %v286, 0
    %v301 = vsel %vm293, %v287, 0
    %v304 = vsel %vm293, %v288, 0
    %306 = vmatprep.subr.bf16.mxu0 %v298
    %307 = vmatpush1.bf16.msra.mxu0 %v295
    %308 = vmatprep.subr.bf16.mxu0 0
    %309 = vmatpush1.bf16.msra.mxu0 0
    %310 = vmatprep.subr.bf16.mxu0 0
    %311 = vmatpush1.bf16.msra.mxu0 0
    %312 = vmatprep.subr.bf16.mxu0 0
    %313 = vmatpush1.bf16.msra.mxu0 0
    %314 = vmatprep.subr.bf16.mxu0 0
    %315 = vmatpush1.bf16.msra.mxu0 0
    %316 = vmatprep.subr.bf16.mxu0 0
    %317 = vmatpush1.bf16.msra.mxu0 0
    %318 = vmatprep.subr.bf16.mxu0 0
    %319 = vmatpush1.bf16.msra.mxu0 0
    %320 = vmatprep.subr.bf16.mxu0 0
    %321 = vmatpush1.bf16.msra.mxu0 0
    %322 = vmatprep.subr.bf16.mxu0 0
    %323 = vmatpush1.bf16.msra.mxu0 0
    %324 = vmatprep.subr.bf16.mxu0 0
    %325 = vmatpush1.bf16.msra.mxu0 0
    %326 = vmatprep.subr.bf16.mxu0 0
    %327 = vmatpush1.bf16.msra.mxu0 0
    %328 = vmatprep.subr.bf16.mxu0 0
    %329 = vmatpush1.bf16.msra.mxu0 0
    %330 = vmatprep.subr.bf16.mxu0 0
    %331 = vmatpush1.bf16.msra.mxu0 0
    %332 = vmatprep.subr.bf16.mxu0 0
    %333 = vmatpush1.bf16.msra.mxu0 0
    %334 = vmatprep.subr.bf16.mxu0 0
    %335 = vmatpush1.bf16.msra.mxu0 0
    %336 = vmatprep.subr.bf16.mxu0 0
    %337 = vmatpush1.bf16.msra.mxu0 0
    %338 = vmatprep.mubr.bf16.mxu0 0
    %339 = vmatmul.mubr.bf16.gmra.mrb[0].mxu0 %v291
    %v340 = vpop.f32.mrb[0].mxu0
    %v341 = vadd.f32 0.0, %v340
    %v342 = vpop.f32.mrb[0].mxu0
    %v343 = vadd.f32 0.0, %v342
    %v344 = vpop.f32.mrb[0].mxu0
    %v345 = vpop.f32.mrb[0].mxu0
    %346 = vdwg.mxu0
    %347 = vmatprep.subr.bf16.mxu0 %v304
    %348 = vmatpush1.bf16.msra.mxu0 %v301
    %349 = vmatprep.subr.bf16.mxu0 0
    %350 = vmatpush1.bf16.msra.mxu0 0
    %351 = vmatprep.subr.bf16.mxu0 0
    %352 = vmatpush1.bf16.msra.mxu0 0
    %353 = vmatprep.subr.bf16.mxu0 0
    %354 = vmatpush1.bf16.msra.mxu0 0
    %355 = vmatprep.subr.bf16.mxu0 0
    %356 = vmatpush1.bf16.msra.mxu0 0
    %357 = vmatprep.subr.bf16.mxu0 0
    %358 = vmatpush1.bf16.msra.mxu0 0
    %359 = vmatprep.subr.bf16.mxu0 0
    %360 = vmatpush1.bf16.msra.mxu0 0
    %361 = vmatprep.subr.bf16.mxu0 0
    %362 = vmatpush1.bf16.msra.mxu0 0
    %363 = vmatprep.subr.bf16.mxu0 0
    %364 = vmatpush1.bf16.msra.mxu0 0
    %365 = vmatprep.subr.bf16.mxu0 0
    %366 = vmatpush1.bf16.msra.mxu0 0
    %367 = vmatprep.subr.bf16.mxu0 0
    %368 = vmatpush1.bf16.msra.mxu0 0
    %369 = vmatprep.subr.bf16.mxu0 0
    %370 = vmatpush1.bf16.msra.mxu0 0
    %371 = vmatprep.subr.bf16.mxu0 0
    %372 = vmatpush1.bf16.msra.mxu0 0
    %373 = vmatprep.subr.bf16.mxu0 0
    %374 = vmatpush1.bf16.msra.mxu0 0
    %375 = vmatprep.subr.bf16.mxu0 0
    %376 = vmatpush1.bf16.msra.mxu0 0
    %377 = vmatprep.subr.bf16.mxu0 0
    %378 = vmatpush1.bf16.msra.mxu0 0
    %379 = vmatprep.mubr.bf16.mxu0 0
    %380 = vmatmul.mubr.bf16.gmra.mrb[0].mxu0 %v291
    %v381 = vpop.f32.mrb[0].mxu0
    %v382 = vadd.f32 0.0, %v381
    %v383 = vpop.f32.mrb[0].mxu0
    %v384 = vadd.f32 0.0, %v383
    %v385 = vpop.f32.mrb[0].mxu0
    %v386 = vpop.f32.mrb[0].mxu0
    %387 = vdwg.mxu0
    %v584 = vunpack.c.l.b16 %v73
    %v585 = vunpack.c.h.b16 %v73
    %v586 = vunpack.c.l.b16 %v74
    %v587 = vunpack.c.h.b16 %v74
    %v588 = vunpack.c.l.b16 %v75
    %v589 = vunpack.c.h.b16 %v75
    %v590 = vunpack.c.l.b16 %v76
    %v591 = vunpack.c.h.b16 %v76
    %v592 = vunpack.c.l.b16 %v77
    %v593 = vunpack.c.h.b16 %v77
    %v594 = vunpack.c.l.b16 %v78
    %v595 = vunpack.c.h.b16 %v78
    %v596 = vunpack.c.l.b16 %v79
    %v597 = vunpack.c.h.b16 %v79
    %v598 = vunpack.c.l.b16 %v80
    %v599 = vunpack.c.h.b16 %v80
    %v600 = vunpack.c.l.b16 %v81
    %v601 = vunpack.c.h.b16 %v81
    %v602 = vunpack.c.l.b16 %v82
    %v603 = vunpack.c.h.b16 %v82
    %v604 = vunpack.c.l.b16 %v83
    %v605 = vunpack.c.h.b16 %v83
    %v606 = vunpack.c.l.b16 %v84
    %v607 = vunpack.c.h.b16 %v84
    %v608 = vunpack.c.l.b16 %v85
    %v609 = vunpack.c.h.b16 %v85
    %v610 = vunpack.c.l.b16 %v86
    %v611 = vunpack.c.h.b16 %v86
    %v612 = vunpack.c.l.b16 %v87
    %v613 = vunpack.c.h.b16 %v87
    %v614 = vunpack.c.l.b16 %v88
    %v615 = vunpack.c.h.b16 %v88
    %v616 = vunpack.c.l.b16 %v89
    %v617 = vunpack.c.h.b16 %v89
    %v618 = vunpack.c.l.b16 %v90
    %v619 = vunpack.c.h.b16 %v90
    %v620 = vunpack.c.l.b16 %v91
    %v621 = vunpack.c.h.b16 %v91
    %v622 = vunpack.c.l.b16 %v92
    %v623 = vunpack.c.h.b16 %v92
    %v624 = vunpack.c.l.b16 %v93
    %v625 = vunpack.c.h.b16 %v93
    %v626 = vunpack.c.l.b16 %v94
    %v627 = vunpack.c.h.b16 %v94
    %v628 = vunpack.c.l.b16 %v95
    %v629 = vunpack.c.h.b16 %v95
    %v630 = vunpack.c.l.b16 %v96
    %v631 = vunpack.c.h.b16 %v96
    %v632 = vunpack.c.l.b16 %v97
    %v633 = vunpack.c.h.b16 %v97
    %v634 = vunpack.c.l.b16 %v98
    %v635 = vunpack.c.h.b16 %v98
    %v636 = vunpack.c.l.b16 %v99
    %v637 = vunpack.c.h.b16 %v99
    %v638 = vunpack.c.l.b16 %v100
    %v639 = vunpack.c.h.b16 %v100
    %v640 = vunpack.c.l.b16 %v101
    %v641 = vunpack.c.h.b16 %v101
    %v642 = vunpack.c.l.b16 %v102
    %v643 = vunpack.c.h.b16 %v102
    %v644 = vunpack.c.l.b16 %v103
    %v645 = vunpack.c.h.b16 %v103
    %v646 = vunpack.c.l.b16 %v104
    %v647 = vunpack.c.h.b16 %v104
    %v648 = vunpack.c.l.b16 %v105
    %v649 = vunpack.c.h.b16 %v105
    %v650 = vunpack.c.l.b16 %v106
    %v651 = vunpack.c.h.b16 %v106
    %v652 = vunpack.c.l.b16 %v107
    %v653 = vunpack.c.h.b16 %v107
    %v654 = vunpack.c.l.b16 %v108
    %v655 = vunpack.c.h.b16 %v108
    %v656 = vunpack.c.l.b16 %v109
    %v657 = vunpack.c.h.b16 %v109
    %v658 = vunpack.c.l.b16 %v110
    %v659 = vunpack.c.h.b16 %v110
    %v660 = vunpack.c.l.b16 %v111
    %v661 = vunpack.c.h.b16 %v111
    %v662 = vunpack.c.l.b16 %v112
    %v663 = vunpack.c.h.b16 %v112
    %v664 = vunpack.c.l.b16 %v113
    %v665 = vunpack.c.h.b16 %v113
    %v666 = vunpack.c.l.b16 %v114
    %v667 = vunpack.c.h.b16 %v114
    %v668 = vunpack.c.l.b16 %v115
    %v669 = vunpack.c.h.b16 %v115
    %v670 = vunpack.c.l.b16 %v116
    %v671 = vunpack.c.h.b16 %v116
    %v672 = vunpack.c.l.b16 %v117
    %v673 = vunpack.c.h.b16 %v117
    %v674 = vunpack.c.l.b16 %v118
    %v675 = vunpack.c.h.b16 %v118
    %v676 = vunpack.c.l.b16 %v119
    %v677 = vunpack.c.h.b16 %v119
    %v678 = vunpack.c.l.b16 %v120
    %v679 = vunpack.c.h.b16 %v120
    %v680 = vunpack.c.l.b16 %v121
    %v681 = vunpack.c.h.b16 %v121
    %v682 = vunpack.c.l.b16 %v122
    %v683 = vunpack.c.h.b16 %v122
    %v684 = vunpack.c.l.b16 %v123
    %v685 = vunpack.c.h.b16 %v123
    %v686 = vunpack.c.l.b16 %v124
    %v687 = vunpack.c.h.b16 %v124
    %v688 = vunpack.c.l.b16 %v125
    %v689 = vunpack.c.h.b16 %v125
    %v690 = vunpack.c.l.b16 %v126
    %v691 = vunpack.c.h.b16 %v126
    %v692 = vunpack.c.l.b16 %v127
    %v693 = vunpack.c.h.b16 %v127
    %v694 = vunpack.c.l.b16 %v128
    %v695 = vunpack.c.h.b16 %v128
    %v696 = vunpack.c.l.b16 %v129
    %v697 = vunpack.c.h.b16 %v129
    %v698 = vunpack.c.l.b16 %v130
    %v699 = vunpack.c.h.b16 %v130
    %v700 = vunpack.c.l.b16 %v131
    %v701 = vunpack.c.h.b16 %v131
    %v702 = vunpack.c.l.b16 %v132
    %v703 = vunpack.c.h.b16 %v132
    %v704 = vunpack.c.l.b16 %v133
    %v705 = vunpack.c.h.b16 %v133
    %v706 = vunpack.c.l.b16 %v134
    %v707 = vunpack.c.h.b16 %v134
    %v708 = vunpack.c.l.b16 %v135
    %v709 = vunpack.c.h.b16 %v135
    %v710 = vunpack.c.l.b16 %v136
    %v711 = vunpack.c.h.b16 %v136
    %v712 = vunpack.c.l.b16 %v137
    %v713 = vunpack.c.h.b16 %v137
    %v714 = vunpack.c.l.b16 %v138
    %v715 = vunpack.c.h.b16 %v138
    %v716 = vunpack.c.l.b16 %v139
    %v717 = vunpack.c.h.b16 %v139
    %v718 = vunpack.c.l.b16 %v140
    %v719 = vunpack.c.h.b16 %v140
    %v720 = vunpack.c.l.b16 %v141
    %v721 = vunpack.c.h.b16 %v141
    %v722 = vunpack.c.l.b16 %v142
    %v723 = vunpack.c.h.b16 %v142
    %v724 = vunpack.c.l.b16 %v143
    %v725 = vunpack.c.h.b16 %v143
    %v726 = vunpack.c.l.b16 %v144
    %v727 = vunpack.c.h.b16 %v144
    %v728 = vunpack.c.l.b16 %v145
    %v729 = vunpack.c.h.b16 %v145
    %v730 = vunpack.c.l.b16 %v146
    %v731 = vunpack.c.h.b16 %v146
    %v732 = vunpack.c.l.b16 %v147
    %v733 = vunpack.c.h.b16 %v147
    %v734 = vunpack.c.l.b16 %v148
    %v735 = vunpack.c.h.b16 %v148
    %v736 = vunpack.c.l.b16 %v149
    %v737 = vunpack.c.h.b16 %v149
    %v738 = vunpack.c.l.b16 %v150
    %v739 = vunpack.c.h.b16 %v150
    %v740 = vunpack.c.l.b16 %v151
    %v741 = vunpack.c.h.b16 %v151
    %v742 = vunpack.c.l.b16 %v152
    %v743 = vunpack.c.h.b16 %v152
    %v744 = vunpack.c.l.b16 %v153
    %v745 = vunpack.c.h.b16 %v153
    %v746 = vunpack.c.l.b16 %v154
    %v747 = vunpack.c.h.b16 %v154
    %v748 = vunpack.c.l.b16 %v155
    %v749 = vunpack.c.h.b16 %v155
    %v750 = vunpack.c.l.b16 %v156
    %v751 = vunpack.c.h.b16 %v156
    %v752 = vunpack.c.l.b16 %v157
    %v753 = vunpack.c.h.b16 %v157
    %v754 = vunpack.c.l.b16 %v158
    %v755 = vunpack.c.h.b16 %v158
    %v756 = vunpack.c.l.b16 %v159
    %v757 = vunpack.c.h.b16 %v159
    %v758 = vunpack.c.l.b16 %v160
    %v759 = vunpack.c.h.b16 %v160
    %v760 = vunpack.c.l.b16 %v161
    %v761 = vunpack.c.h.b16 %v161
    %v762 = vunpack.c.l.b16 %v162
    %v763 = vunpack.c.h.b16 %v162
    %v764 = vunpack.c.l.b16 %v163
    %v765 = vunpack.c.h.b16 %v163
    %v766 = vunpack.c.l.b16 %v164
    %v767 = vunpack.c.h.b16 %v164
    %v768 = vunpack.c.l.b16 %v165
    %v769 = vunpack.c.h.b16 %v165
    %v770 = vunpack.c.l.b16 %v166
    %v771 = vunpack.c.h.b16 %v166
    %v772 = vunpack.c.l.b16 %v167
    %v773 = vunpack.c.h.b16 %v167
    %v774 = vunpack.c.l.b16 %v168
    %v775 = vunpack.c.h.b16 %v168
    %v776 = vunpack.c.l.b16 %v169
    %v777 = vunpack.c.h.b16 %v169
    %v778 = vunpack.c.l.b16 %v170
    %v779 = vunpack.c.h.b16 %v170
    %v780 = vunpack.c.l.b16 %v171
    %v781 = vunpack.c.h.b16 %v171
    %v782 = vunpack.c.l.b16 %v172
    %v783 = vunpack.c.h.b16 %v172
    %v784 = vunpack.c.l.b16 %v173
    %v785 = vunpack.c.h.b16 %v173
    %v786 = vunpack.c.l.b16 %v174
    %v787 = vunpack.c.h.b16 %v174
    %v788 = vunpack.c.l.b16 %v175
    %v789 = vunpack.c.h.b16 %v175
    %v790 = vunpack.c.l.b16 %v176
    %v791 = vunpack.c.h.b16 %v176
    %v792 = vunpack.c.l.b16 %v177
    %v793 = vunpack.c.h.b16 %v177
    %v794 = vunpack.c.l.b16 %v178
    %v795 = vunpack.c.h.b16 %v178
    %v796 = vunpack.c.l.b16 %v179
    %v797 = vunpack.c.h.b16 %v179
    %v798 = vunpack.c.l.b16 %v180
    %v799 = vunpack.c.h.b16 %v180
    %v800 = vunpack.c.l.b16 %v181
    %v801 = vunpack.c.h.b16 %v181
    %v802 = vunpack.c.l.b16 %v182
    %v803 = vunpack.c.h.b16 %v182
    %v804 = vunpack.c.l.b16 %v183
    %v805 = vunpack.c.h.b16 %v183
    %v806 = vunpack.c.l.b16 %v184
    %v807 = vunpack.c.h.b16 %v184
    %v808 = vunpack.c.l.b16 %v185
    %v809 = vunpack.c.h.b16 %v185
    %v810 = vunpack.c.l.b16 %v186
    %v811 = vunpack.c.h.b16 %v186
    %v812 = vunpack.c.l.b16 %v187
    %v813 = vunpack.c.h.b16 %v187
    %v814 = vunpack.c.l.b16 %v188
    %v815 = vunpack.c.h.b16 %v188
    %v816 = vunpack.c.l.b16 %v189
    %v817 = vunpack.c.h.b16 %v189
    %v818 = vunpack.c.l.b16 %v190
    %v819 = vunpack.c.h.b16 %v190
    %v820 = vunpack.c.l.b16 %v191
    %v821 = vunpack.c.h.b16 %v191
    %v822 = vunpack.c.l.b16 %v192
    %v823 = vunpack.c.h.b16 %v192
    %v824 = vunpack.c.l.b16 %v193
    %v825 = vunpack.c.h.b16 %v193
    %v826 = vunpack.c.l.b16 %v194
    %v827 = vunpack.c.h.b16 %v194
    %v828 = vunpack.c.l.b16 %v195
    %v829 = vunpack.c.h.b16 %v195
    %v830 = vunpack.c.l.b16 %v196
    %v831 = vunpack.c.h.b16 %v196
    %v832 = vunpack.c.l.b16 %v197
    %v833 = vunpack.c.h.b16 %v197
    %v834 = vunpack.c.l.b16 %v198
    %v835 = vunpack.c.h.b16 %v198
    %v836 = vunpack.c.l.b16 %v199
    %v837 = vunpack.c.h.b16 %v199
    %v838 = vunpack.c.l.b16 %v200
    %v839 = vunpack.c.h.b16 %v200
    %v840 = vunpack.c.l.b16 %v201
    %v841 = vunpack.c.h.b16 %v201
    %v842 = vunpack.c.l.b16 %v202
    %v843 = vunpack.c.h.b16 %v202
    %v844 = vunpack.c.l.b16 %v203
    %v845 = vunpack.c.h.b16 %v203
    %v846 = vunpack.c.l.b16 %v204
    %v847 = vunpack.c.h.b16 %v204
    %v848 = vunpack.c.l.b16 %v205
    %v849 = vunpack.c.h.b16 %v205
    %v850 = vunpack.c.l.b16 %v206
    %v851 = vunpack.c.h.b16 %v206
    %v852 = vunpack.c.l.b16 %v207
    %v853 = vunpack.c.h.b16 %v207
    %v854 = vunpack.c.l.b16 %v208
    %v855 = vunpack.c.h.b16 %v208
    %v856 = vunpack.c.l.b16 %v209
    %v857 = vunpack.c.h.b16 %v209
    %v858 = vunpack.c.l.b16 %v210
    %v859 = vunpack.c.h.b16 %v210
    %v860 = vunpack.c.l.b16 %v211
    %v861 = vunpack.c.h.b16 %v211
    %v862 = vunpack.c.l.b16 %v212
    %v863 = vunpack.c.h.b16 %v212
    %v864 = vunpack.c.l.b16 %v213
    %v865 = vunpack.c.h.b16 %v213
    %v866 = vunpack.c.l.b16 %v214
    %v867 = vunpack.c.h.b16 %v214
    %v868 = vunpack.c.l.b16 %v215
    %v869 = vunpack.c.h.b16 %v215
    %v870 = vunpack.c.l.b16 %v216
    %v871 = vunpack.c.h.b16 %v216
    %v872 = vunpack.c.l.b16 %v217
    %v873 = vunpack.c.h.b16 %v217
    %v874 = vunpack.c.l.b16 %v218
    %v875 = vunpack.c.h.b16 %v218
    %v876 = vunpack.c.l.b16 %v219
    %v877 = vunpack.c.h.b16 %v219
    %v878 = vunpack.c.l.b16 %v220
    %v879 = vunpack.c.h.b16 %v220
    %v880 = vunpack.c.l.b16 %v221
    %v881 = vunpack.c.h.b16 %v221
    %v882 = vunpack.c.l.b16 %v222
    %v883 = vunpack.c.h.b16 %v222
    %v884 = vunpack.c.l.b16 %v223
    %v885 = vunpack.c.h.b16 %v223
    %v886 = vunpack.c.l.b16 %v224
    %v887 = vunpack.c.h.b16 %v224
    %v888 = vunpack.c.l.b16 %v225
    %v889 = vunpack.c.h.b16 %v225
    %v890 = vunpack.c.l.b16 %v226
    %v891 = vunpack.c.h.b16 %v226
    %v892 = vunpack.c.l.b16 %v227
    %v893 = vunpack.c.h.b16 %v227
    %v894 = vunpack.c.l.b16 %v228
    %v895 = vunpack.c.h.b16 %v228
    %v896 = vunpack.c.l.b16 %v229
    %v897 = vunpack.c.h.b16 %v229
    %v898 = vunpack.c.l.b16 %v230
    %v899 = vunpack.c.h.b16 %v230
    %v900 = vunpack.c.l.b16 %v231
    %v901 = vunpack.c.h.b16 %v231
    %v902 = vunpack.c.l.b16 %v232
    %v903 = vunpack.c.h.b16 %v232
    %v904 = vunpack.c.l.b16 %v233
    %v905 = vunpack.c.h.b16 %v233
    %v906 = vunpack.c.l.b16 %v234
    %v907 = vunpack.c.h.b16 %v234
    %v908 = vunpack.c.l.b16 %v235
    %v909 = vunpack.c.h.b16 %v235
    %v910 = vunpack.c.l.b16 %v236
    %v911 = vunpack.c.h.b16 %v236
    %v912 = vunpack.c.l.b16 %v237
    %v913 = vunpack.c.h.b16 %v237
    %v914 = vunpack.c.l.b16 %v238
    %v915 = vunpack.c.h.b16 %v238
    %v916 = vunpack.c.l.b16 %v239
    %v917 = vunpack.c.h.b16 %v239
    %v918 = vunpack.c.l.b16 %v240
    %v919 = vunpack.c.h.b16 %v240
    %v920 = vunpack.c.l.b16 %v241
    %v921 = vunpack.c.h.b16 %v241
    %v922 = vunpack.c.l.b16 %v242
    %v923 = vunpack.c.h.b16 %v242
    %v924 = vunpack.c.l.b16 %v243
    %v925 = vunpack.c.h.b16 %v243
    %v926 = vunpack.c.l.b16 %v244
    %v927 = vunpack.c.h.b16 %v244
    %v928 = vunpack.c.l.b16 %v245
    %v929 = vunpack.c.h.b16 %v245
    %v930 = vunpack.c.l.b16 %v246
    %v931 = vunpack.c.h.b16 %v246
    %v932 = vunpack.c.l.b16 %v247
    %v933 = vunpack.c.h.b16 %v247
    %v934 = vunpack.c.l.b16 %v248
    %v935 = vunpack.c.h.b16 %v248
    %v936 = vunpack.c.l.b16 %v249
    %v937 = vunpack.c.h.b16 %v249
    %v938 = vunpack.c.l.b16 %v250
    %v939 = vunpack.c.h.b16 %v250
    %v940 = vunpack.c.l.b16 %v251
    %v941 = vunpack.c.h.b16 %v251
    %v942 = vunpack.c.l.b16 %v252
    %v943 = vunpack.c.h.b16 %v252
    %v944 = vunpack.c.l.b16 %v253
    %v945 = vunpack.c.h.b16 %v253
    %v946 = vunpack.c.l.b16 %v254
    %v947 = vunpack.c.h.b16 %v254
    %v948 = vunpack.c.l.b16 %v255
    %v949 = vunpack.c.h.b16 %v255
    %v950 = vunpack.c.l.b16 %v256
    %v951 = vunpack.c.h.b16 %v256
    %v952 = vunpack.c.l.b16 %v257
    %v953 = vunpack.c.h.b16 %v257
    %v954 = vunpack.c.l.b16 %v258
    %v955 = vunpack.c.h.b16 %v258
    %v956 = vunpack.c.l.b16 %v259
    %v957 = vunpack.c.h.b16 %v259
    %v958 = vunpack.c.l.b16 %v260
    %v959 = vunpack.c.h.b16 %v260
    %v960 = vunpack.c.l.b16 %v261
    %v961 = vunpack.c.h.b16 %v261
    %v962 = vunpack.c.l.b16 %v262
    %v963 = vunpack.c.h.b16 %v262
    %v964 = vunpack.c.l.b16 %v263
    %v965 = vunpack.c.h.b16 %v263
    %v966 = vunpack.c.l.b16 %v264
    %v967 = vunpack.c.h.b16 %v264
    %v968 = vunpack.c.l.b16 %v265
    %v969 = vunpack.c.h.b16 %v265
    %v970 = vunpack.c.l.b16 %v266
    %v971 = vunpack.c.h.b16 %v266
    %v972 = vunpack.c.l.b16 %v267
    %v973 = vunpack.c.h.b16 %v267
    %v974 = vunpack.c.l.b16 %v268
    %v975 = vunpack.c.h.b16 %v268
    %v976 = vpack.c.b16 %v588, %v584
    %v977 = vpack.c.b16 %v589, %v585
    %v978 = vpack.c.b16 %v590, %v586
    %v979 = vpack.c.b16 %v591, %v587
    %v980 = vpack.c.b16 %v596, %v592
    %v981 = vpack.c.b16 %v597, %v593
    %v982 = vpack.c.b16 %v598, %v594
    %v983 = vpack.c.b16 %v599, %v595
    %v984 = vpack.c.b16 %v604, %v600
    %v985 = vpack.c.b16 %v605, %v601
    %v986 = vpack.c.b16 %v606, %v602
    %v987 = vpack.c.b16 %v607, %v603
    %v988 = vpack.c.b16 %v612, %v608
    %v989 = vpack.c.b16 %v613, %v609
    %v990 = vpack.c.b16 %v614, %v610
    %v991 = vpack.c.b16 %v615, %v611
    %v992 = vpack.c.b16 %v620, %v616
    %v993 = vpack.c.b16 %v621, %v617
    %v994 = vpack.c.b16 %v622, %v618
    %v995 = vpack.c.b16 %v623, %v619
    %v996 = vpack.c.b16 %v628, %v624
    %v997 = vpack.c.b16 %v629, %v625
    %v998 = vpack.c.b16 %v630, %v626
    %v999 = vpack.c.b16 %v631, %v627
    %v1000 = vpack.c.b16 %v636, %v632
    %v1001 = vpack.c.b16 %v637, %v633
    %v1002 = vpack.c.b16 %v638, %v634
    %v1003 = vpack.c.b16 %v639, %v635
    %v1004 = vpack.c.b16 %v644, %v640
    %v1005 = vpack.c.b16 %v645, %v641
    %v1006 = vpack.c.b16 %v646, %v642
    %v1007 = vpack.c.b16 %v647, %v643
    %v1008 = vpack.c.b16 %v652, %v648
    %v1009 = vpack.c.b16 %v653, %v649
    %v1010 = vpack.c.b16 %v654, %v650
    %v1011 = vpack.c.b16 %v655, %v651
    %v1012 = vpack.c.b16 %v660, %v656
    %v1013 = vpack.c.b16 %v661, %v657
    %v1014 = vpack.c.b16 %v662, %v658
    %v1015 = vpack.c.b16 %v663, %v659
    %v1016 = vpack.c.b16 %v668, %v664
    %v1017 = vpack.c.b16 %v669, %v665
    %v1018 = vpack.c.b16 %v670, %v666
    %v1019 = vpack.c.b16 %v671, %v667
    %v1020 = vpack.c.b16 %v676, %v672
    %v1021 = vpack.c.b16 %v677, %v673
    %v1022 = vpack.c.b16 %v678, %v674
    %v1023 = vpack.c.b16 %v679, %v675
    %v1024 = vpack.c.b16 %v684, %v680
    %v1025 = vpack.c.b16 %v685, %v681
    %v1026 = vpack.c.b16 %v686, %v682
    %v1027 = vpack.c.b16 %v687, %v683
    %v1028 = vpack.c.b16 %v692, %v688
    %v1029 = vpack.c.b16 %v693, %v689
    %v1030 = vpack.c.b16 %v694, %v690
    %v1031 = vpack.c.b16 %v695, %v691
    %v1032 = vpack.c.b16 %v700, %v696
    %v1033 = vpack.c.b16 %v701, %v697
    %v1034 = vpack.c.b16 %v702, %v698
    %v1035 = vpack.c.b16 %v703, %v699
    %v1036 = vpack.c.b16 %v708, %v704
    %v1037 = vpack.c.b16 %v709, %v705
    %v1038 = vpack.c.b16 %v710, %v706
    %v1039 = vpack.c.b16 %v711, %v707
    %v1040 = vpack.c.b16 %v716, %v712
    %v1041 = vpack.c.b16 %v717, %v713
    %v1042 = vpack.c.b16 %v718, %v714
    %v1043 = vpack.c.b16 %v719, %v715
    %v1044 = vpack.c.b16 %v724, %v720
    %v1045 = vpack.c.b16 %v725, %v721
    %v1046 = vpack.c.b16 %v726, %v722
    %v1047 = vpack.c.b16 %v727, %v723
    %v1048 = vpack.c.b16 %v732, %v728
    %v1049 = vpack.c.b16 %v733, %v729
    %v1050 = vpack.c.b16 %v734, %v730
    %v1051 = vpack.c.b16 %v735, %v731
    %v1052 = vpack.c.b16 %v740, %v736
    %v1053 = vpack.c.b16 %v741, %v737
    %v1054 = vpack.c.b16 %v742, %v738
    %v1055 = vpack.c.b16 %v743, %v739
    %v1056 = vpack.c.b16 %v748, %v744
    %v1057 = vpack.c.b16 %v749, %v745
    %v1058 = vpack.c.b16 %v750, %v746
    %v1059 = vpack.c.b16 %v751, %v747
    %v1060 = vpack.c.b16 %v756, %v752
    %v1061 = vpack.c.b16 %v757, %v753
    %v1062 = vpack.c.b16 %v758, %v754
    %v1063 = vpack.c.b16 %v759, %v755
    %v1064 = vpack.c.b16 %v764, %v760
    %v1065 = vpack.c.b16 %v765, %v761
    %v1066 = vpack.c.b16 %v766, %v762
    %v1067 = vpack.c.b16 %v767, %v763
    %v1068 = vpack.c.b16 %v772, %v768
    %v1069 = vpack.c.b16 %v773, %v769
    %v1070 = vpack.c.b16 %v774, %v770
    %v1071 = vpack.c.b16 %v775, %v771
    %v1072 = vpack.c.b16 %v780, %v776
    %v1073 = vpack.c.b16 %v781, %v777
    %v1074 = vpack.c.b16 %v782, %v778
    %v1075 = vpack.c.b16 %v783, %v779
    %v1076 = vpack.c.b16 %v788, %v784
    %v1077 = vpack.c.b16 %v789, %v785
    %v1078 = vpack.c.b16 %v790, %v786
    %v1079 = vpack.c.b16 %v791, %v787
    %v1080 = vpack.c.b16 %v796, %v792
    %v1081 = vpack.c.b16 %v797, %v793
    %v1082 = vpack.c.b16 %v798, %v794
    %v1083 = vpack.c.b16 %v799, %v795
    %v1084 = vpack.c.b16 %v804, %v800
    %v1085 = vpack.c.b16 %v805, %v801
    %v1086 = vpack.c.b16 %v806, %v802
    %v1087 = vpack.c.b16 %v807, %v803
    %v1088 = vpack.c.b16 %v812, %v808
    %v1089 = vpack.c.b16 %v813, %v809
    %v1090 = vpack.c.b16 %v814, %v810
    %v1091 = vpack.c.b16 %v815, %v811
    %v1092 = vpack.c.b16 %v820, %v816
    %v1093 = vpack.c.b16 %v821, %v817
    %v1094 = vpack.c.b16 %v822, %v818
    %v1095 = vpack.c.b16 %v823, %v819
    %v1096 = vpack.c.b16 %v828, %v824
    %v1097 = vpack.c.b16 %v829, %v825
    %v1098 = vpack.c.b16 %v830, %v826
    %v1099 = vpack.c.b16 %v831, %v827
    %v1100 = vpack.c.b16 %v836, %v832
    %v1101 = vpack.c.b16 %v837, %v833
    %v1102 = vpack.c.b16 %v838, %v834
    %v1103 = vpack.c.b16 %v839, %v835
    %v1104 = vpack.c.b16 %v844, %v840
    %v1105 = vpack.c.b16 %v845, %v841
    %v1106 = vpack.c.b16 %v846, %v842
    %v1107 = vpack.c.b16 %v847, %v843
    %v1108 = vpack.c.b16 %v852, %v848
    %v1109 = vpack.c.b16 %v853, %v849
    %v1110 = vpack.c.b16 %v854, %v850
    %v1111 = vpack.c.b16 %v855, %v851
    %v1112 = vpack.c.b16 %v860, %v856
    %v1113 = vpack.c.b16 %v861, %v857
    %v1114 = vpack.c.b16 %v862, %v858
    %v1115 = vpack.c.b16 %v863, %v859
    %v1116 = vpack.c.b16 %v868, %v864
    %v1117 = vpack.c.b16 %v869, %v865
    %v1118 = vpack.c.b16 %v870, %v866
    %v1119 = vpack.c.b16 %v871, %v867
    %v1120 = vpack.c.b16 %v876, %v872
    %v1121 = vpack.c.b16 %v877, %v873
    %v1122 = vpack.c.b16 %v878, %v874
    %v1123 = vpack.c.b16 %v879, %v875
    %v1124 = vpack.c.b16 %v884, %v880
    %v1125 = vpack.c.b16 %v885, %v881
    %v1126 = vpack.c.b16 %v886, %v882
    %v1127 = vpack.c.b16 %v887, %v883
    %v1128 = vpack.c.b16 %v892, %v888
    %v1129 = vpack.c.b16 %v893, %v889
    %v1130 = vpack.c.b16 %v894, %v890
    %v1131 = vpack.c.b16 %v895, %v891
    %v1132 = vpack.c.b16 %v900, %v896
    %v1133 = vpack.c.b16 %v901, %v897
    %v1134 = vpack.c.b16 %v902, %v898
    %v1135 = vpack.c.b16 %v903, %v899
    %v1136 = vpack.c.b16 %v908, %v904
    %v1137 = vpack.c.b16 %v909, %v905
    %v1138 = vpack.c.b16 %v910, %v906
    %v1139 = vpack.c.b16 %v911, %v907
    %v1140 = vpack.c.b16 %v916, %v912
    %v1141 = vpack.c.b16 %v917, %v913
    %v1142 = vpack.c.b16 %v918, %v914
    %v1143 = vpack.c.b16 %v919, %v915
    %v1144 = vpack.c.b16 %v924, %v920
    %v1145 = vpack.c.b16 %v925, %v921
    %v1146 = vpack.c.b16 %v926, %v922
    %v1147 = vpack.c.b16 %v927, %v923
    %v1148 = vpack.c.b16 %v932, %v928
    %v1149 = vpack.c.b16 %v933, %v929
    %v1150 = vpack.c.b16 %v934, %v930
    %v1151 = vpack.c.b16 %v935, %v931
    %v1152 = vpack.c.b16 %v940, %v936
    %v1153 = vpack.c.b16 %v941, %v937
    %v1154 = vpack.c.b16 %v942, %v938
    %v1155 = vpack.c.b16 %v943, %v939
    %v1156 = vpack.c.b16 %v948, %v944
    %v1157 = vpack.c.b16 %v949, %v945
    %v1158 = vpack.c.b16 %v950, %v946
    %v1159 = vpack.c.b16 %v951, %v947
    %v1160 = vpack.c.b16 %v956, %v952
    %v1161 = vpack.c.b16 %v957, %v953
    %v1162 = vpack.c.b16 %v958, %v954
    %v1163 = vpack.c.b16 %v959, %v955
    %v1164 = vpack.c.b16 %v964, %v960
    %v1165 = vpack.c.b16 %v965, %v961
    %v1166 = vpack.c.b16 %v966, %v962
    %v1167 = vpack.c.b16 %v967, %v963
    %v1168 = vpack.c.b16 %v972, %v968
    %v1169 = vpack.c.b16 %v973, %v969
    %v1170 = vpack.c.b16 %v974, %v970
    %v1171 = vpack.c.b16 %v975, %v971
    %vm1368 = vcmask 130048
    %v1370 = vsel %vm1368, %v70, 0
    %1372 = vmatprep.subr.bf16.mxu0 %v977
    %1373 = vmatpush1.bf16.msra.mxu0 %v976
    %1374 = vmatprep.subr.bf16.mxu0 %v981
    %1375 = vmatpush1.bf16.msra.mxu0 %v980
    %1376 = vmatprep.subr.bf16.mxu0 %v985
    %1377 = vmatpush1.bf16.msra.mxu0 %v984
    %1378 = vmatprep.subr.bf16.mxu0 %v989
    %1379 = vmatpush1.bf16.msra.mxu0 %v988
    %1380 = vmatprep.subr.bf16.mxu0 %v993
    %1381 = vmatpush1.bf16.msra.mxu0 %v992
    %1382 = vmatprep.subr.bf16.mxu0 %v997
    %1383 = vmatpush1.bf16.msra.mxu0 %v996
    %1384 = vmatprep.subr.bf16.mxu0 %v1001
    %1385 = vmatpush1.bf16.msra.mxu0 %v1000
    %1386 = vmatprep.subr.bf16.mxu0 %v1005
    %1387 = vmatpush1.bf16.msra.mxu0 %v1004
    %1388 = vmatprep.subr.bf16.mxu0 %v1009
    %1389 = vmatpush1.bf16.msra.mxu0 %v1008
    %1390 = vmatprep.subr.bf16.mxu0 %v1013
    %1391 = vmatpush1.bf16.msra.mxu0 %v1012
    %1392 = vmatprep.subr.bf16.mxu0 %v1017
    %1393 = vmatpush1.bf16.msra.mxu0 %v1016
    %1394 = vmatprep.subr.bf16.mxu0 %v1021
    %1395 = vmatpush1.bf16.msra.mxu0 %v1020
    %1396 = vmatprep.subr.bf16.mxu0 %v1025
    %1397 = vmatpush1.bf16.msra.mxu0 %v1024
    %1398 = vmatprep.subr.bf16.mxu0 %v1029
    %1399 = vmatpush1.bf16.msra.mxu0 %v1028
    %1400 = vmatprep.subr.bf16.mxu0 %v1033
    %1401 = vmatpush1.bf16.msra.mxu0 %v1032
    %1402 = vmatprep.subr.bf16.mxu0 %v1037
    %1403 = vmatpush1.bf16.msra.mxu0 %v1036
    %1404 = vmatprep.mubr.bf16.mxu0 %v65
    %1405 = vmatmul.mubr.bf16.gmra.mrb[0].mxu0 %v64
    %v1406 = vpop.f32.mrb[0].mxu0
    %v1407 = vadd.f32 %v341, %v1406
    %v1408 = vpop.f32.mrb[0].mxu0
    %v1409 = vadd.f32 %v343, %v1408
    %v1410 = vpop.f32.mrb[0].mxu0
    %v1411 = vpop.f32.mrb[0].mxu0
    %1412 = vdwg.mxu0
    %1413 = vmatprep.subr.bf16.mxu0 %v1041
    %1414 = vmatpush1.bf16.msra.mxu0 %v1040
    %1415 = vmatprep.subr.bf16.mxu0 %v1045
    %1416 = vmatpush1.bf16.msra.mxu0 %v1044
    %1417 = vmatprep.subr.bf16.mxu0 %v1049
    %1418 = vmatpush1.bf16.msra.mxu0 %v1048
    %1419 = vmatprep.subr.bf16.mxu0 %v1053
    %1420 = vmatpush1.bf16.msra.mxu0 %v1052
    %1421 = vmatprep.subr.bf16.mxu0 %v1057
    %1422 = vmatpush1.bf16.msra.mxu0 %v1056
    %1423 = vmatprep.subr.bf16.mxu0 %v1061
    %1424 = vmatpush1.bf16.msra.mxu0 %v1060
    %1425 = vmatprep.subr.bf16.mxu0 %v1065
    %1426 = vmatpush1.bf16.msra.mxu0 %v1064
    %1427 = vmatprep.subr.bf16.mxu0 %v1069
    %1428 = vmatpush1.bf16.msra.mxu0 %v1068
    %1429 = vmatprep.subr.bf16.mxu0 %v1073
    %1430 = vmatpush1.bf16.msra.mxu0 %v1072
    %1431 = vmatprep.subr.bf16.mxu0 %v1077
    %1432 = vmatpush1.bf16.msra.mxu0 %v1076
    %1433 = vmatprep.subr.bf16.mxu0 %v1081
    %1434 = vmatpush1.bf16.msra.mxu0 %v1080
    %1435 = vmatprep.subr.bf16.mxu0 %v1085
    %1436 = vmatpush1.bf16.msra.mxu0 %v1084
    %1437 = vmatprep.subr.bf16.mxu0 %v1089
    %1438 = vmatpush1.bf16.msra.mxu0 %v1088
    %1439 = vmatprep.subr.bf16.mxu0 %v1093
    %1440 = vmatpush1.bf16.msra.mxu0 %v1092
    %1441 = vmatprep.subr.bf16.mxu0 %v1097
    %1442 = vmatpush1.bf16.msra.mxu0 %v1096
    %1443 = vmatprep.subr.bf16.mxu0 %v1101
    %1444 = vmatpush1.bf16.msra.mxu0 %v1100
    %1445 = vmatprep.mubr.bf16.mxu0 %v67
    %1446 = vmatmul.mubr.bf16.gmra.mrb[0].mxu0 %v66
    %v1447 = vpop.f32.mrb[0].mxu0
    %v1448 = vadd.f32 %v1407, %v1447
    %v1449 = vpop.f32.mrb[0].mxu0
    %v1450 = vadd.f32 %v1409, %v1449
    %v1451 = vpop.f32.mrb[0].mxu0
    %v1452 = vpop.f32.mrb[0].mxu0
    %1453 = vdwg.mxu0
    %1454 = vmatprep.subr.bf16.mxu0 %v1105
    %1455 = vmatpush1.bf16.msra.mxu0 %v1104
    %1456 = vmatprep.subr.bf16.mxu0 %v1109
    %1457 = vmatpush1.bf16.msra.mxu0 %v1108
    %1458 = vmatprep.subr.bf16.mxu0 %v1113
    %1459 = vmatpush1.bf16.msra.mxu0 %v1112
    %1460 = vmatprep.subr.bf16.mxu0 %v1117
    %1461 = vmatpush1.bf16.msra.mxu0 %v1116
    %1462 = vmatprep.subr.bf16.mxu0 %v1121
    %1463 = vmatpush1.bf16.msra.mxu0 %v1120
    %1464 = vmatprep.subr.bf16.mxu0 %v1125
    %1465 = vmatpush1.bf16.msra.mxu0 %v1124
    %1466 = vmatprep.subr.bf16.mxu0 %v1129
    %1467 = vmatpush1.bf16.msra.mxu0 %v1128
    %1468 = vmatprep.subr.bf16.mxu0 %v1133
    %1469 = vmatpush1.bf16.msra.mxu0 %v1132
    %1470 = vmatprep.subr.bf16.mxu0 %v1137
    %1471 = vmatpush1.bf16.msra.mxu0 %v1136
    %1472 = vmatprep.subr.bf16.mxu0 %v1141
    %1473 = vmatpush1.bf16.msra.mxu0 %v1140
    %1474 = vmatprep.subr.bf16.mxu0 %v1145
    %1475 = vmatpush1.bf16.msra.mxu0 %v1144
    %1476 = vmatprep.subr.bf16.mxu0 %v1149
    %1477 = vmatpush1.bf16.msra.mxu0 %v1148
    %1478 = vmatprep.subr.bf16.mxu0 %v1153
    %1479 = vmatpush1.bf16.msra.mxu0 %v1152
    %1480 = vmatprep.subr.bf16.mxu0 %v1157
    %1481 = vmatpush1.bf16.msra.mxu0 %v1156
    %1482 = vmatprep.subr.bf16.mxu0 %v1161
    %1483 = vmatpush1.bf16.msra.mxu0 %v1160
    %1484 = vmatprep.subr.bf16.mxu0 %v1165
    %1485 = vmatpush1.bf16.msra.mxu0 %v1164
    %1486 = vmatprep.mubr.bf16.mxu0 %v69
    %1487 = vmatmul.mubr.bf16.gmra.mrb[0].mxu0 %v68
    %v1488 = vpop.f32.mrb[0].mxu0
    %v1489 = vadd.f32 %v1448, %v1488
    %v1490 = vpop.f32.mrb[0].mxu0
    %v1491 = vadd.f32 %v1450, %v1490
    %v1492 = vpop.f32.mrb[0].mxu0
    %v1493 = vpop.f32.mrb[0].mxu0
    %1494 = vdwg.mxu0
    %1495 = vmatprep.subr.bf16.mxu0 %v1169
    %1496 = vmatpush1.bf16.msra.mxu0 %v1168
    %1497 = vmatprep.subr.bf16.mxu0 0
    %1498 = vmatpush1.bf16.msra.mxu0 0
    %1499 = vmatprep.subr.bf16.mxu0 0
    %1500 = vmatpush1.bf16.msra.mxu0 0
    %1501 = vmatprep.subr.bf16.mxu0 0
    %1502 = vmatpush1.bf16.msra.mxu0 0
    %1503 = vmatprep.subr.bf16.mxu0 0
    %1504 = vmatpush1.bf16.msra.mxu0 0
    %1505 = vmatprep.subr.bf16.mxu0 0
    %1506 = vmatpush1.bf16.msra.mxu0 0
    %1507 = vmatprep.subr.bf16.mxu0 0
    %1508 = vmatpush1.bf16.msra.mxu0 0
    %1509 = vmatprep.subr.bf16.mxu0 0
    %1510 = vmatpush1.bf16.msra.mxu0 0
    %1511 = vmatprep.subr.bf16.mxu0 0
    %1512 = vmatpush1.bf16.msra.mxu0 0
    %1513 = vmatprep.subr.bf16.mxu0 0
    %1514 = vmatpush1.bf16.msra.mxu0 0
    %1515 = vmatprep.subr.bf16.mxu0 0
    %1516 = vmatpush1.bf16.msra.mxu0 0
    %1517 = vmatprep.subr.bf16.mxu0 0
    %1518 = vmatpush1.bf16.msra.mxu0 0
    %1519 = vmatprep.subr.bf16.mxu0 0
    %1520 = vmatpush1.bf16.msra.mxu0 0
    %1521 = vmatprep.subr.bf16.mxu0 0
    %1522 = vmatpush1.bf16.msra.mxu0 0
    %1523 = vmatprep.subr.bf16.mxu0 0
    %1524 = vmatpush1.bf16.msra.mxu0 0
    %1525 = vmatprep.subr.bf16.mxu0 0
    %1526 = vmatpush1.bf16.msra.mxu0 0
    %1527 = vmatprep.mubr.bf16.mxu0 0
    %1528 = vmatmul.mubr.bf16.gmra.mrb[0].mxu0 %v1370
    %v1529 = vpop.f32.mrb[0].mxu0
    %v1530 = vadd.f32 %v1489, %v1529
    %v1531 = vpop.f32.mrb[0].mxu0
    %v1532 = vadd.f32 %v1491, %v1531
    %v1533 = vpop.f32.mrb[0].mxu0
    %v1534 = vpop.f32.mrb[0].mxu0
    %1535 = vdwg.mxu0
    %1536 = vmatprep.subr.bf16.mxu0 %v979
    %1537 = vmatpush1.bf16.msra.mxu0 %v978
    %1538 = vmatprep.subr.bf16.mxu0 %v983
    %1539 = vmatpush1.bf16.msra.mxu0 %v982
    %1540 = vmatprep.subr.bf16.mxu0 %v987
    %1541 = vmatpush1.bf16.msra.mxu0 %v986
    %1542 = vmatprep.subr.bf16.mxu0 %v991
    %1543 = vmatpush1.bf16.msra.mxu0 %v990
    %1544 = vmatprep.subr.bf16.mxu0 %v995
    %1545 = vmatpush1.bf16.msra.mxu0 %v994
    %1546 = vmatprep.subr.bf16.mxu0 %v999
    %1547 = vmatpush1.bf16.msra.mxu0 %v998
    %1548 = vmatprep.subr.bf16.mxu0 %v1003
    %1549 = vmatpush1.bf16.msra.mxu0 %v1002
    %1550 = vmatprep.subr.bf16.mxu0 %v1007
    %1551 = vmatpush1.bf16.msra.mxu0 %v1006
    %1552 = vmatprep.subr.bf16.mxu0 %v1011
    %1553 = vmatpush1.bf16.msra.mxu0 %v1010
    %1554 = vmatprep.subr.bf16.mxu0 %v1015
    %1555 = vmatpush1.bf16.msra.mxu0 %v1014
    %1556 = vmatprep.subr.bf16.mxu0 %v1019
    %1557 = vmatpush1.bf16.msra.mxu0 %v1018
    %1558 = vmatprep.subr.bf16.mxu0 %v1023
    %1559 = vmatpush1.bf16.msra.mxu0 %v1022
    %1560 = vmatprep.subr.bf16.mxu0 %v1027
    %1561 = vmatpush1.bf16.msra.mxu0 %v1026
    %1562 = vmatprep.subr.bf16.mxu0 %v1031
    %1563 = vmatpush1.bf16.msra.mxu0 %v1030
    %1564 = vmatprep.subr.bf16.mxu0 %v1035
    %1565 = vmatpush1.bf16.msra.mxu0 %v1034
    %1566 = vmatprep.subr.bf16.mxu0 %v1039
    %1567 = vmatpush1.bf16.msra.mxu0 %v1038
    %1568 = vmatprep.mubr.bf16.mxu0 %v65
    %1569 = vmatmul.mubr.bf16.gmra.mrb[0].mxu0 %v64
    %v1570 = vpop.f32.mrb[0].mxu0
    %v1571 = vadd.f32 %v382, %v1570
    %v1572 = vpop.f32.mrb[0].mxu0
    %v1573 = vadd.f32 %v384, %v1572
    %v1574 = vpop.f32.mrb[0].mxu0
    %v1575 = vpop.f32.mrb[0].mxu0
    %1576 = vdwg.mxu0
    %1577 = vmatprep.subr.bf16.mxu0 %v1043
    %1578 = vmatpush1.bf16.msra.mxu0 %v1042
    %1579 = vmatprep.subr.bf16.mxu0 %v1047
    %1580 = vmatpush1.bf16.msra.mxu0 %v1046
    %1581 = vmatprep.subr.bf16.mxu0 %v1051
    %1582 = vmatpush1.bf16.msra.mxu0 %v1050
    %1583 = vmatprep.subr.bf16.mxu0 %v1055
    %1584 = vmatpush1.bf16.msra.mxu0 %v1054
    %1585 = vmatprep.subr.bf16.mxu0 %v1059
    %1586 = vmatpush1.bf16.msra.mxu0 %v1058
    %1587 = vmatprep.subr.bf16.mxu0 %v1063
    %1588 = vmatpush1.bf16.msra.mxu0 %v1062
    %1589 = vmatprep.subr.bf16.mxu0 %v1067
    %1590 = vmatpush1.bf16.msra.mxu0 %v1066
    %1591 = vmatprep.subr.bf16.mxu0 %v1071
    %1592 = vmatpush1.bf16.msra.mxu0 %v1070
    %1593 = vmatprep.subr.bf16.mxu0 %v1075
    %1594 = vmatpush1.bf16.msra.mxu0 %v1074
    %1595 = vmatprep.subr.bf16.mxu0 %v1079
    %1596 = vmatpush1.bf16.msra.mxu0 %v1078
    %1597 = vmatprep.subr.bf16.mxu0 %v1083
    %1598 = vmatpush1.bf16.msra.mxu0 %v1082
    %1599 = vmatprep.subr.bf16.mxu0 %v1087
    %1600 = vmatpush1.bf16.msra.mxu0 %v1086
    %1601 = vmatprep.subr.bf16.mxu0 %v1091
    %1602 = vmatpush1.bf16.msra.mxu0 %v1090
    %1603 = vmatprep.subr.bf16.mxu0 %v1095
    %1604 = vmatpush1.bf16.msra.mxu0 %v1094
    %1605 = vmatprep.subr.bf16.mxu0 %v1099
    %1606 = vmatpush1.bf16.msra.mxu0 %v1098
    %1607 = vmatprep.subr.bf16.mxu0 %v1103
    %1608 = vmatpush1.bf16.msra.mxu0 %v1102
    %1609 = vmatprep.mubr.bf16.mxu0 %v67
    %1610 = vmatmul.mubr.bf16.gmra.mrb[0].mxu0 %v66
    %v1611 = vpop.f32.mrb[0].mxu0
    %v1612 = vadd.f32 %v1571, %v1611
    %v1613 = vpop.f32.mrb[0].mxu0
    %v1614 = vadd.f32 %v1573, %v1613
    %v1615 = vpop.f32.mrb[0].mxu0
    %v1616 = vpop.f32.mrb[0].mxu0
    %1617 = vdwg.mxu0
    %1618 = vmatprep.subr.bf16.mxu0 %v1107
    %1619 = vmatpush1.bf16.msra.mxu0 %v1106
    %1620 = vmatprep.subr.bf16.mxu0 %v1111
    %1621 = vmatpush1.bf16.msra.mxu0 %v1110
    %1622 = vmatprep.subr.bf16.mxu0 %v1115
    %1623 = vmatpush1.bf16.msra.mxu0 %v1114
    %1624 = vmatprep.subr.bf16.mxu0 %v1119
    %1625 = vmatpush1.bf16.msra.mxu0 %v1118
    %1626 = vmatprep.subr.bf16.mxu0 %v1123
    %1627 = vmatpush1.bf16.msra.mxu0 %v1122
    %1628 = vmatprep.subr.bf16.mxu0 %v1127
    %1629 = vmatpush1.bf16.msra.mxu0 %v1126
    %1630 = vmatprep.subr.bf16.mxu0 %v1131
    %1631 = vmatpush1.bf16.msra.mxu0 %v1130
    %1632 = vmatprep.subr.bf16.mxu0 %v1135
    %1633 = vmatpush1.bf16.msra.mxu0 %v1134
    %1634 = vmatprep.subr.bf16.mxu0 %v1139
    %1635 = vmatpush1.bf16.msra.mxu0 %v1138
    %1636 = vmatprep.subr.bf16.mxu0 %v1143
    %1637 = vmatpush1.bf16.msra.mxu0 %v1142
    %1638 = vmatprep.subr.bf16.mxu0 %v1147
    %1639 = vmatpush1.bf16.msra.mxu0 %v1146
    %1640 = vmatprep.subr.bf16.mxu0 %v1151
    %1641 = vmatpush1.bf16.msra.mxu0 %v1150
    %1642 = vmatprep.subr.bf16.mxu0 %v1155
    %1643 = vmatpush1.bf16.msra.mxu0 %v1154
    %1644 = vmatprep.subr.bf16.mxu0 %v1159
    %1645 = vmatpush1.bf16.msra.mxu0 %v1158
    %1646 = vmatprep.subr.bf16.mxu0 %v1163
    %1647 = vmatpush1.bf16.msra.mxu0 %v1162
    %1648 = vmatprep.subr.bf16.mxu0 %v1167
    %1649 = vmatpush1.bf16.msra.mxu0 %v1166
    %1650 = vmatprep.mubr.bf16.mxu0 %v69
    %1651 = vmatmul.mubr.bf16.gmra.mrb[0].mxu0 %v68
    %v1652 = vpop.f32.mrb[0].mxu0
    %v1653 = vadd.f32 %v1612, %v1652
    %v1654 = vpop.f32.mrb[0].mxu0
    %v1655 = vadd.f32 %v1614, %v1654
    %v1656 = vpop.f32.mrb[0].mxu0
    %v1657 = vpop.f32.mrb[0].mxu0
    %1658 = vdwg.mxu0
    %1659 = vmatprep.subr.bf16.mxu0 %v1171
    %1660 = vmatpush1.bf16.msra.mxu0 %v1170
    %1661 = vmatprep.subr.bf16.mxu0 0
    %1662 = vmatpush1.bf16.msra.mxu0 0
    %1663 = vmatprep.subr.bf16.mxu0 0
    %1664 = vmatpush1.bf16.msra.mxu0 0
    %1665 = vmatprep.subr.bf16.mxu0 0
    %1666 = vmatpush1.bf16.msra.mxu0 0
    %1667 = vmatprep.subr.bf16.mxu0 0
    %1668 = vmatpush1.bf16.msra.mxu0 0
    %1669 = vmatprep.subr.bf16.mxu0 0
    %1670 = vmatpush1.bf16.msra.mxu0 0
    %1671 = vmatprep.subr.bf16.mxu0 0
    %1672 = vmatpush1.bf16.msra.mxu0 0
    %1673 = vmatprep.subr.bf16.mxu0 0
    %1674 = vmatpush1.bf16.msra.mxu0 0
    %1675 = vmatprep.subr.bf16.mxu0 0
    %1676 = vmatpush1.bf16.msra.mxu0 0
    %1677 = vmatprep.subr.bf16.mxu0 0
    %1678 = vmatpush1.bf16.msra.mxu0 0
    %1679 = vmatprep.subr.bf16.mxu0 0
    %1680 = vmatpush1.bf16.msra.mxu0 0
    %1681 = vmatprep.subr.bf16.mxu0 0
    %1682 = vmatpush1.bf16.msra.mxu0 0
    %1683 = vmatprep.subr.bf16.mxu0 0
    %1684 = vmatpush1.bf16.msra.mxu0 0
    %1685 = vmatprep.subr.bf16.mxu0 0
    %1686 = vmatpush1.bf16.msra.mxu0 0
    %1687 = vmatprep.subr.bf16.mxu0 0
    %1688 = vmatpush1.bf16.msra.mxu0 0
    %1689 = vmatprep.subr.bf16.mxu0 0
    %1690 = vmatpush1.bf16.msra.mxu0 0
    %1691 = vmatprep.mubr.bf16.mxu0 0
    %1692 = vmatmul.mubr.bf16.gmra.mrb[0].mxu0 %v1370
    %v1693 = vpop.f32.mrb[0].mxu0
    %v1694 = vadd.f32 %v1653, %v1693
    %v1695 = vpop.f32.mrb[0].mxu0
    %v1696 = vadd.f32 %v1655, %v1695
    %v1697 = vpop.f32.mrb[0].mxu0
    %v1698 = vpop.f32.mrb[0].mxu0
    %1699 = vdwg.mxu0
    %v1700 = vld [vmem:[%s5] sm:$0xf]
    %v1702 = vlaneseq
    %v1703 = vshrl.u32 %v1702, 7
    %v1704 = vsub.s32 0, %v1703
    %v1705 = vrot.slane %v1700, %v1704
    %v1706 = vlaneseq
    %v1707 = vshrl.u32 %v1706, 7
    %v1708 = vsub.s32 1, %v1707
    %v1709 = vrot.slane %v1700, %v1708
    %v1710 = vlaneseq
    %v1711 = vshrl.u32 %v1710, 7
    %v1712 = vsub.s32 2, %v1711
    %v1713 = vrot.slane %v1700, %v1712
    %v1714 = vlaneseq
    %v1715 = vshrl.u32 %v1714, 7
    %v1716 = vsub.s32 3, %v1715
    %v1717 = vrot.slane %v1700, %v1716
    %v1722 = vadd.f32 %v1530, %v1705
    %v1723 = vadd.f32 %v1532, %v1709
    %v1724 = vadd.f32 %v1694, %v1713
    %v1725 = vadd.f32 %v1696, %v1717
    %v1726 = vmax.f32 %v1722, 0.0
    %v1727 = vmax.f32 %v1723, 0.0
    %v1728 = vmax.f32 %v1724, 0.0
    %v1729 = vmax.f32 %v1725, 0.0
    %v1730 = vpack.c.bf16 %v1726, %v1726
    %v1731 = vpack.c.bf16 %v1727, %v1727
    %v1732 = vpack.c.bf16 %v1728, %v1728
    %v1733 = vpack.c.bf16 %v1729, %v1729
    %v1734 = vld [vmem:[%s6] sm:$0xff]
    %v1735 = vld [vmem:[%s6 + $0x8] sm:$0xff]
    %v1736 = vld [vmem:[%s6 + $0x10] sm:$0xff]
    %v1737 = vld [vmem:[%s6 + $0x18] sm:$0xff]
    %v1738 = vld [vmem:[%s6 + $0x20] sm:$0xff]
    %v1739 = vld [vmem:[%s6 + $0x28] sm:$0xff]
    %v1740 = vld [vmem:[%s6 + $0x30] sm:$0xff]
    %v1741 = vld [vmem:[%s6 + $0x38] sm:$0xff]
    %v1742 = vld [vmem:[%s6 + $0x40] sm:$0xff]
    %v1743 = vld [vmem:[%s6 + $0x48] sm:$0xff]
    %v1744 = vld [vmem:[%s6 + $0x50] sm:$0xff]
    %v1745 = vld [vmem:[%s6 + $0x58] sm:$0xff]
    %v1746 = vld [vmem:[%s6 + $0x60] sm:$0xff]
    %v1747 = vld [vmem:[%s6 + $0x68] sm:$0xff]
    %v1748 = vld [vmem:[%s6 + $0x70] sm:$0xff]
    %v1749 = vld [vmem:[%s6 + $0x78] sm:$0xff]
    %v1750 = vld [vmem:[%s6 + $0x80] sm:$0xff]
    %v1751 = vld [vmem:[%s6 + $0x88] sm:$0xff]
    %v1752 = vld [vmem:[%s6 + $0x90] sm:$0xff]
    %v1753 = vld [vmem:[%s6 + $0x98] sm:$0xff]
    %v1754 = vld [vmem:[%s6 + $0xa0] sm:$0xff]
    %v1755 = vld [vmem:[%s6 + $0xa8] sm:$0xff]
    %v1756 = vld [vmem:[%s6 + $0xb0] sm:$0xff]
    %v1757 = vld [vmem:[%s6 + $0xb8] sm:$0xff]
    %v1758 = vld [vmem:[%s6 + $0xc0] sm:$0xff]
    %v1759 = vld [vmem:[%s6 + $0xc8] sm:$0xff]
    %v1760 = vld [vmem:[%s6 + $0xd0] sm:$0xff]
    %v1761 = vld [vmem:[%s6 + $0xd8] sm:$0xff]
    %v1762 = vld [vmem:[%s6 + $0xe0] sm:$0xff]
    %v1763 = vld [vmem:[%s6 + $0xe8] sm:$0xff]
    %v1764 = vld [vmem:[%s6 + $0xf0] sm:$0xff]
    %v1765 = vld [vmem:[%s6 + $0xf8] sm:$0xff]
    %v1766 = vld [vmem:[%s6 + $0x100] sm:$0xff]
    %v1767 = vld [vmem:[%s6 + $0x108] sm:$0xff]
    %v1768 = vld [vmem:[%s6 + $0x110] sm:$0xff]
    %v1769 = vld [vmem:[%s6 + $0x118] sm:$0xff]
    %v1770 = vld [vmem:[%s6 + $0x120] sm:$0xff]
    %v1771 = vld [vmem:[%s6 + $0x128] sm:$0xff]
    %v1772 = vld [vmem:[%s6 + $0x130] sm:$0xff]
    %v1773 = vld [vmem:[%s6 + $0x138] sm:$0xff]
    %v1774 = vld [vmem:[%s6 + $0x140] sm:$0xff]
    %v1775 = vld [vmem:[%s6 + $0x148] sm:$0xff]
    %v1776 = vld [vmem:[%s6 + $0x150] sm:$0xff]
    %v1777 = vld [vmem:[%s6 + $0x158] sm:$0xff]
    %v1778 = vld [vmem:[%s6 + $0x160] sm:$0xff]
    %v1779 = vld [vmem:[%s6 + $0x168] sm:$0xff]
    %v1780 = vld [vmem:[%s6 + $0x170] sm:$0xff]
    %v1781 = vld [vmem:[%s6 + $0x178] sm:$0xff]
    %v1782 = vld [vmem:[%s6 + $0x180] sm:$0xff]
    %v1783 = vld [vmem:[%s6 + $0x188] sm:$0xff]
    %v1784 = vld [vmem:[%s6 + $0x190] sm:$0xff]
    %v1785 = vld [vmem:[%s6 + $0x198] sm:$0xff]
    %v1786 = vld [vmem:[%s6 + $0x1a0] sm:$0xff]
    %v1787 = vld [vmem:[%s6 + $0x1a8] sm:$0xff]
    %v1788 = vld [vmem:[%s6 + $0x1b0] sm:$0xff]
    %v1789 = vld [vmem:[%s6 + $0x1b8] sm:$0xff]
    %v1790 = vld [vmem:[%s6 + $0x1c0] sm:$0xff]
    %v1791 = vld [vmem:[%s6 + $0x1c8] sm:$0xff]
    %v1792 = vld [vmem:[%s6 + $0x1d0] sm:$0xff]
    %v1793 = vld [vmem:[%s6 + $0x1d8] sm:$0xff]
    %v1794 = vld [vmem:[%s6 + $0x1e0] sm:$0xff]
    %v1795 = vld [vmem:[%s6 + $0x1e8] sm:$0xff]
    %v1796 = vld [vmem:[%s6 + $0x1f0] sm:$0xff]
    %v1797 = vld [vmem:[%s6 + $0x1f8] sm:$0xff]
    %v1798 = vld [vmem:[%s6 + $0x200] sm:$0xff]
    %v1799 = vld [vmem:[%s6 + $0x208] sm:$0xff]
    %v1800 = vld [vmem:[%s6 + $0x210] sm:$0xff]
    %v1801 = vld [vmem:[%s6 + $0x218] sm:$0xff]
    %v1802 = vld [vmem:[%s6 + $0x220] sm:$0xff]
    %v1803 = vld [vmem:[%s6 + $0x228] sm:$0xff]
    %v1804 = vld [vmem:[%s6 + $0x230] sm:$0xff]
    %v1805 = vld [vmem:[%s6 + $0x238] sm:$0xff]
    %v1806 = vld [vmem:[%s6 + $0x240] sm:$0xff]
    %v1807 = vld [vmem:[%s6 + $0x248] sm:$0xff]
    %v1808 = vld [vmem:[%s6 + $0x250] sm:$0xff]
    %v1809 = vld [vmem:[%s6 + $0x258] sm:$0xff]
    %v1810 = vld [vmem:[%s6 + $0x260] sm:$0xff]
    %v1811 = vld [vmem:[%s6 + $0x268] sm:$0xff]
    %v1812 = vld [vmem:[%s6 + $0x270] sm:$0xff]
    %v1813 = vld [vmem:[%s6 + $0x278] sm:$0xff]
    %v1814 = vld [vmem:[%s6 + $0x280] sm:$0xff]
    %v1815 = vld [vmem:[%s6 + $0x288] sm:$0xff]
    %v1816 = vld [vmem:[%s6 + $0x290] sm:$0xff]
    %v1817 = vld [vmem:[%s6 + $0x298] sm:$0xff]
    %v1818 = vld [vmem:[%s6 + $0x2a0] sm:$0xff]
    %v1819 = vld [vmem:[%s6 + $0x2a8] sm:$0xff]
    %v1820 = vld [vmem:[%s6 + $0x2b0] sm:$0xff]
    %v1821 = vld [vmem:[%s6 + $0x2b8] sm:$0xff]
    %v1822 = vld [vmem:[%s6 + $0x2c0] sm:$0xff]
    %v1823 = vld [vmem:[%s6 + $0x2c8] sm:$0xff]
    %v1824 = vld [vmem:[%s6 + $0x2d0] sm:$0xff]
    %v1825 = vld [vmem:[%s6 + $0x2d8] sm:$0xff]
    %v1826 = vld [vmem:[%s6 + $0x2e0] sm:$0xff]
    %v1827 = vld [vmem:[%s6 + $0x2e8] sm:$0xff]
    %v1828 = vld [vmem:[%s6 + $0x2f0] sm:$0xff]
    %v1829 = vld [vmem:[%s6 + $0x2f8] sm:$0xff]
    %v1830 = vld [vmem:[%s6 + $0x300] sm:$0xff]
    %v1831 = vld [vmem:[%s6 + $0x308] sm:$0xff]
    %v1832 = vld [vmem:[%s6 + $0x310] sm:$0xff]
    %v1833 = vld [vmem:[%s6 + $0x318] sm:$0xff]
    %v1834 = vld [vmem:[%s7] sm:$0xf]
    %v1836 = vlaneseq
    %v1837 = vshrl.u32 %v1836, 7
    %v1838 = vsub.s32 0, %v1837
    %v1839 = vrot.slane %v1834, %v1838
    %v1840 = vlaneseq
    %v1841 = vshrl.u32 %v1840, 7
    %v1842 = vsub.s32 1, %v1841
    %v1843 = vrot.slane %v1834, %v1842
    %v1844 = vlaneseq
    %v1845 = vshrl.u32 %v1844, 7
    %v1846 = vsub.s32 2, %v1845
    %v1847 = vrot.slane %v1834, %v1846
    %v1848 = vlaneseq
    %v1849 = vshrl.u32 %v1848, 7
    %v1850 = vsub.s32 3, %v1849
    %v1851 = vrot.slane %v1834, %v1850
    %v1956 = vunpack.c.l.b16 %v1734
    %v1957 = vunpack.c.h.b16 %v1734
    %v1958 = vunpack.c.l.b16 %v1735
    %v1959 = vunpack.c.h.b16 %v1735
    %v1960 = vunpack.c.l.b16 %v1736
    %v1961 = vunpack.c.h.b16 %v1736
    %v1962 = vunpack.c.l.b16 %v1737
    %v1963 = vunpack.c.h.b16 %v1737
    %v1964 = vunpack.c.l.b16 %v1738
    %v1965 = vunpack.c.h.b16 %v1738
    %v1966 = vunpack.c.l.b16 %v1739
    %v1967 = vunpack.c.h.b16 %v1739
    %v1968 = vunpack.c.l.b16 %v1740
    %v1969 = vunpack.c.h.b16 %v1740
    %v1970 = vunpack.c.l.b16 %v1741
    %v1971 = vunpack.c.h.b16 %v1741
    %v1972 = vunpack.c.l.b16 %v1742
    %v1973 = vunpack.c.h.b16 %v1742
    %v1974 = vunpack.c.l.b16 %v1743
    %v1975 = vunpack.c.h.b16 %v1743
    %v1976 = vunpack.c.l.b16 %v1744
    %v1977 = vunpack.c.h.b16 %v1744
    %v1978 = vunpack.c.l.b16 %v1745
    %v1979 = vunpack.c.h.b16 %v1745
    %v1980 = vunpack.c.l.b16 %v1746
    %v1981 = vunpack.c.h.b16 %v1746
    %v1982 = vunpack.c.l.b16 %v1747
    %v1983 = vunpack.c.h.b16 %v1747
    %v1984 = vunpack.c.l.b16 %v1748
    %v1985 = vunpack.c.h.b16 %v1748
    %v1986 = vunpack.c.l.b16 %v1749
    %v1987 = vunpack.c.h.b16 %v1749
    %v1988 = vunpack.c.l.b16 %v1750
    %v1989 = vunpack.c.h.b16 %v1750
    %v1990 = vunpack.c.l.b16 %v1751
    %v1991 = vunpack.c.h.b16 %v1751
    %v1992 = vunpack.c.l.b16 %v1752
    %v1993 = vunpack.c.h.b16 %v1752
    %v1994 = vunpack.c.l.b16 %v1753
    %v1995 = vunpack.c.h.b16 %v1753
    %v1996 = vunpack.c.l.b16 %v1754
    %v1997 = vunpack.c.h.b16 %v1754
    %v1998 = vunpack.c.l.b16 %v1755
    %v1999 = vunpack.c.h.b16 %v1755
    %v2000 = vunpack.c.l.b16 %v1756
    %v2001 = vunpack.c.h.b16 %v1756
    %v2002 = vunpack.c.l.b16 %v1757
    %v2003 = vunpack.c.h.b16 %v1757
    %v2004 = vunpack.c.l.b16 %v1758
    %v2005 = vunpack.c.h.b16 %v1758
    %v2006 = vunpack.c.l.b16 %v1759
    %v2007 = vunpack.c.h.b16 %v1759
    %v2008 = vunpack.c.l.b16 %v1760
    %v2009 = vunpack.c.h.b16 %v1760
    %v2010 = vunpack.c.l.b16 %v1761
    %v2011 = vunpack.c.h.b16 %v1761
    %v2012 = vunpack.c.l.b16 %v1762
    %v2013 = vunpack.c.h.b16 %v1762
    %v2014 = vunpack.c.l.b16 %v1763
    %v2015 = vunpack.c.h.b16 %v1763
    %v2016 = vunpack.c.l.b16 %v1764
    %v2017 = vunpack.c.h.b16 %v1764
    %v2018 = vunpack.c.l.b16 %v1765
    %v2019 = vunpack.c.h.b16 %v1765
    %v2020 = vunpack.c.l.b16 %v1766
    %v2021 = vunpack.c.h.b16 %v1766
    %v2022 = vunpack.c.l.b16 %v1767
    %v2023 = vunpack.c.h.b16 %v1767
    %v2024 = vunpack.c.l.b16 %v1768
    %v2025 = vunpack.c.h.b16 %v1768
    %v2026 = vunpack.c.l.b16 %v1769
    %v2027 = vunpack.c.h.b16 %v1769
    %v2028 = vunpack.c.l.b16 %v1770
    %v2029 = vunpack.c.h.b16 %v1770
    %v2030 = vunpack.c.l.b16 %v1771
    %v2031 = vunpack.c.h.b16 %v1771
    %v2032 = vunpack.c.l.b16 %v1772
    %v2033 = vunpack.c.h.b16 %v1772
    %v2034 = vunpack.c.l.b16 %v1773
    %v2035 = vunpack.c.h.b16 %v1773
    %v2036 = vunpack.c.l.b16 %v1774
    %v2037 = vunpack.c.h.b16 %v1774
    %v2038 = vunpack.c.l.b16 %v1775
    %v2039 = vunpack.c.h.b16 %v1775
    %v2040 = vunpack.c.l.b16 %v1776
    %v2041 = vunpack.c.h.b16 %v1776
    %v2042 = vunpack.c.l.b16 %v1777
    %v2043 = vunpack.c.h.b16 %v1777
    %v2044 = vunpack.c.l.b16 %v1778
    %v2045 = vunpack.c.h.b16 %v1778
    %v2046 = vunpack.c.l.b16 %v1779
    %v2047 = vunpack.c.h.b16 %v1779
    %v2048 = vunpack.c.l.b16 %v1780
    %v2049 = vunpack.c.h.b16 %v1780
    %v2050 = vunpack.c.l.b16 %v1781
    %v2051 = vunpack.c.h.b16 %v1781
    %v2052 = vunpack.c.l.b16 %v1782
    %v2053 = vunpack.c.h.b16 %v1782
    %v2054 = vunpack.c.l.b16 %v1783
    %v2055 = vunpack.c.h.b16 %v1783
    %v2056 = vunpack.c.l.b16 %v1784
    %v2057 = vunpack.c.h.b16 %v1784
    %v2058 = vunpack.c.l.b16 %v1785
    %v2059 = vunpack.c.h.b16 %v1785
    %v2060 = vunpack.c.l.b16 %v1786
    %v2061 = vunpack.c.h.b16 %v1786
    %v2062 = vunpack.c.l.b16 %v1787
    %v2063 = vunpack.c.h.b16 %v1787
    %v2064 = vunpack.c.l.b16 %v1788
    %v2065 = vunpack.c.h.b16 %v1788
    %v2066 = vunpack.c.l.b16 %v1789
    %v2067 = vunpack.c.h.b16 %v1789
    %v2068 = vunpack.c.l.b16 %v1790
    %v2069 = vunpack.c.h.b16 %v1790
    %v2070 = vunpack.c.l.b16 %v1791
    %v2071 = vunpack.c.h.b16 %v1791
    %v2072 = vunpack.c.l.b16 %v1792
    %v2073 = vunpack.c.h.b16 %v1792
    %v2074 = vunpack.c.l.b16 %v1793
    %v2075 = vunpack.c.h.b16 %v1793
    %v2076 = vunpack.c.l.b16 %v1794
    %v2077 = vunpack.c.h.b16 %v1794
    %v2078 = vunpack.c.l.b16 %v1795
    %v2079 = vunpack.c.h.b16 %v1795
    %v2080 = vunpack.c.l.b16 %v1796
    %v2081 = vunpack.c.h.b16 %v1796
    %v2082 = vunpack.c.l.b16 %v1797
    %v2083 = vunpack.c.h.b16 %v1797
    %v2084 = vunpack.c.l.b16 %v1798
    %v2085 = vunpack.c.h.b16 %v1798
    %v2086 = vunpack.c.l.b16 %v1799
    %v2087 = vunpack.c.h.b16 %v1799
    %v2088 = vunpack.c.l.b16 %v1800
    %v2089 = vunpack.c.h.b16 %v1800
    %v2090 = vunpack.c.l.b16 %v1801
    %v2091 = vunpack.c.h.b16 %v1801
    %v2092 = vunpack.c.l.b16 %v1802
    %v2093 = vunpack.c.h.b16 %v1802
    %v2094 = vunpack.c.l.b16 %v1803
    %v2095 = vunpack.c.h.b16 %v1803
    %v2096 = vunpack.c.l.b16 %v1804
    %v2097 = vunpack.c.h.b16 %v1804
    %v2098 = vunpack.c.l.b16 %v1805
    %v2099 = vunpack.c.h.b16 %v1805
    %v2100 = vunpack.c.l.b16 %v1806
    %v2101 = vunpack.c.h.b16 %v1806
    %v2102 = vunpack.c.l.b16 %v1807
    %v2103 = vunpack.c.h.b16 %v1807
    %v2104 = vunpack.c.l.b16 %v1808
    %v2105 = vunpack.c.h.b16 %v1808
    %v2106 = vunpack.c.l.b16 %v1809
    %v2107 = vunpack.c.h.b16 %v1809
    %v2108 = vunpack.c.l.b16 %v1810
    %v2109 = vunpack.c.h.b16 %v1810
    %v2110 = vunpack.c.l.b16 %v1811
    %v2111 = vunpack.c.h.b16 %v1811
    %v2112 = vunpack.c.l.b16 %v1812
    %v2113 = vunpack.c.h.b16 %v1812
    %v2114 = vunpack.c.l.b16 %v1813
    %v2115 = vunpack.c.h.b16 %v1813
    %v2116 = vunpack.c.l.b16 %v1814
    %v2117 = vunpack.c.h.b16 %v1814
    %v2118 = vunpack.c.l.b16 %v1815
    %v2119 = vunpack.c.h.b16 %v1815
    %v2120 = vunpack.c.l.b16 %v1816
    %v2121 = vunpack.c.h.b16 %v1816
    %v2122 = vunpack.c.l.b16 %v1817
    %v2123 = vunpack.c.h.b16 %v1817
    %v2124 = vunpack.c.l.b16 %v1818
    %v2125 = vunpack.c.h.b16 %v1818
    %v2126 = vunpack.c.l.b16 %v1819
    %v2127 = vunpack.c.h.b16 %v1819
    %v2128 = vunpack.c.l.b16 %v1820
    %v2129 = vunpack.c.h.b16 %v1820
    %v2130 = vunpack.c.l.b16 %v1821
    %v2131 = vunpack.c.h.b16 %v1821
    %v2132 = vunpack.c.l.b16 %v1822
    %v2133 = vunpack.c.h.b16 %v1822
    %v2134 = vunpack.c.l.b16 %v1823
    %v2135 = vunpack.c.h.b16 %v1823
    %v2136 = vunpack.c.l.b16 %v1824
    %v2137 = vunpack.c.h.b16 %v1824
    %v2138 = vunpack.c.l.b16 %v1825
    %v2139 = vunpack.c.h.b16 %v1825
    %v2140 = vunpack.c.l.b16 %v1826
    %v2141 = vunpack.c.h.b16 %v1826
    %v2142 = vunpack.c.l.b16 %v1827
    %v2143 = vunpack.c.h.b16 %v1827
    %v2144 = vunpack.c.l.b16 %v1828
    %v2145 = vunpack.c.h.b16 %v1828
    %v2146 = vunpack.c.l.b16 %v1829
    %v2147 = vunpack.c.h.b16 %v1829
    %v2148 = vunpack.c.l.b16 %v1830
    %v2149 = vunpack.c.h.b16 %v1830
    %v2150 = vunpack.c.l.b16 %v1831
    %v2151 = vunpack.c.h.b16 %v1831
    %v2152 = vunpack.c.l.b16 %v1832
    %v2153 = vunpack.c.h.b16 %v1832
    %v2154 = vunpack.c.l.b16 %v1833
    %v2155 = vunpack.c.h.b16 %v1833
    %v2156 = vpack.c.b16 %v1960, %v1956
    %v2157 = vpack.c.b16 %v1961, %v1957
    %v2158 = vpack.c.b16 %v1962, %v1958
    %v2159 = vpack.c.b16 %v1963, %v1959
    %v2160 = vpack.c.b16 %v1968, %v1964
    %v2161 = vpack.c.b16 %v1969, %v1965
    %v2162 = vpack.c.b16 %v1970, %v1966
    %v2163 = vpack.c.b16 %v1971, %v1967
    %v2164 = vpack.c.b16 %v1976, %v1972
    %v2165 = vpack.c.b16 %v1977, %v1973
    %v2166 = vpack.c.b16 %v1978, %v1974
    %v2167 = vpack.c.b16 %v1979, %v1975
    %v2168 = vpack.c.b16 %v1984, %v1980
    %v2169 = vpack.c.b16 %v1985, %v1981
    %v2170 = vpack.c.b16 %v1986, %v1982
    %v2171 = vpack.c.b16 %v1987, %v1983
    %v2172 = vpack.c.b16 %v1992, %v1988
    %v2173 = vpack.c.b16 %v1993, %v1989
    %v2174 = vpack.c.b16 %v1994, %v1990
    %v2175 = vpack.c.b16 %v1995, %v1991
    %v2176 = vpack.c.b16 %v2000, %v1996
    %v2177 = vpack.c.b16 %v2001, %v1997
    %v2178 = vpack.c.b16 %v2002, %v1998
    %v2179 = vpack.c.b16 %v2003, %v1999
    %v2180 = vpack.c.b16 %v2008, %v2004
    %v2181 = vpack.c.b16 %v2009, %v2005
    %v2182 = vpack.c.b16 %v2010, %v2006
    %v2183 = vpack.c.b16 %v2011, %v2007
    %v2184 = vpack.c.b16 %v2016, %v2012
    %v2185 = vpack.c.b16 %v2017, %v2013
    %v2186 = vpack.c.b16 %v2018, %v2014
    %v2187 = vpack.c.b16 %v2019, %v2015
    %v2188 = vpack.c.b16 %v2024, %v2020
    %v2189 = vpack.c.b16 %v2025, %v2021
    %v2190 = vpack.c.b16 %v2026, %v2022
    %v2191 = vpack.c.b16 %v2027, %v2023
    %v2192 = vpack.c.b16 %v2032, %v2028
    %v2193 = vpack.c.b16 %v2033, %v2029
    %v2194 = vpack.c.b16 %v2034, %v2030
    %v2195 = vpack.c.b16 %v2035, %v2031
    %v2196 = vpack.c.b16 %v2040, %v2036
    %v2197 = vpack.c.b16 %v2041, %v2037
    %v2198 = vpack.c.b16 %v2042, %v2038
    %v2199 = vpack.c.b16 %v2043, %v2039
    %v2200 = vpack.c.b16 %v2048, %v2044
    %v2201 = vpack.c.b16 %v2049, %v2045
    %v2202 = vpack.c.b16 %v2050, %v2046
    %v2203 = vpack.c.b16 %v2051, %v2047
    %v2204 = vpack.c.b16 %v2056, %v2052
    %v2205 = vpack.c.b16 %v2057, %v2053
    %v2206 = vpack.c.b16 %v2058, %v2054
    %v2207 = vpack.c.b16 %v2059, %v2055
    %v2208 = vpack.c.b16 %v2064, %v2060
    %v2209 = vpack.c.b16 %v2065, %v2061
    %v2210 = vpack.c.b16 %v2066, %v2062
    %v2211 = vpack.c.b16 %v2067, %v2063
    %v2212 = vpack.c.b16 %v2072, %v2068
    %v2213 = vpack.c.b16 %v2073, %v2069
    %v2214 = vpack.c.b16 %v2074, %v2070
    %v2215 = vpack.c.b16 %v2075, %v2071
    %v2216 = vpack.c.b16 %v2080, %v2076
    %v2217 = vpack.c.b16 %v2081, %v2077
    %v2218 = vpack.c.b16 %v2082, %v2078
    %v2219 = vpack.c.b16 %v2083, %v2079
    %v2220 = vpack.c.b16 %v2088, %v2084
    %v2221 = vpack.c.b16 %v2089, %v2085
    %v2222 = vpack.c.b16 %v2090, %v2086
    %v2223 = vpack.c.b16 %v2091, %v2087
    %v2224 = vpack.c.b16 %v2096, %v2092
    %v2225 = vpack.c.b16 %v2097, %v2093
    %v2226 = vpack.c.b16 %v2098, %v2094
    %v2227 = vpack.c.b16 %v2099, %v2095
    %v2228 = vpack.c.b16 %v2104, %v2100
    %v2229 = vpack.c.b16 %v2105, %v2101
    %v2230 = vpack.c.b16 %v2106, %v2102
    %v2231 = vpack.c.b16 %v2107, %v2103
    %v2232 = vpack.c.b16 %v2112, %v2108
    %v2233 = vpack.c.b16 %v2113, %v2109
    %v2234 = vpack.c.b16 %v2114, %v2110
    %v2235 = vpack.c.b16 %v2115, %v2111
    %v2236 = vpack.c.b16 %v2120, %v2116
    %v2237 = vpack.c.b16 %v2121, %v2117
    %v2238 = vpack.c.b16 %v2122, %v2118
    %v2239 = vpack.c.b16 %v2123, %v2119
    %v2240 = vpack.c.b16 %v2128, %v2124
    %v2241 = vpack.c.b16 %v2129, %v2125
    %v2242 = vpack.c.b16 %v2130, %v2126
    %v2243 = vpack.c.b16 %v2131, %v2127
    %v2244 = vpack.c.b16 %v2136, %v2132
    %v2245 = vpack.c.b16 %v2137, %v2133
    %v2246 = vpack.c.b16 %v2138, %v2134
    %v2247 = vpack.c.b16 %v2139, %v2135
    %v2248 = vpack.c.b16 %v2144, %v2140
    %v2249 = vpack.c.b16 %v2145, %v2141
    %v2250 = vpack.c.b16 %v2146, %v2142
    %v2251 = vpack.c.b16 %v2147, %v2143
    %v2252 = vpack.c.b16 %v2152, %v2148
    %v2253 = vpack.c.b16 %v2153, %v2149
    %v2254 = vpack.c.b16 %v2154, %v2150
    %v2255 = vpack.c.b16 %v2155, %v2151
    %v2357 = vsel %vm1368, %v1733, 0
    %2359 = vmatprep.subr.bf16.mxu0 %v2157
    %2360 = vmatpush1.bf16.msra.mxu0 %v2156
    %2361 = vmatprep.subr.bf16.mxu0 %v2161
    %2362 = vmatpush1.bf16.msra.mxu0 %v2160
    %2363 = vmatprep.subr.bf16.mxu0 %v2165
    %2364 = vmatpush1.bf16.msra.mxu0 %v2164
    %2365 = vmatprep.subr.bf16.mxu0 %v2169
    %2366 = vmatpush1.bf16.msra.mxu0 %v2168
    %2367 = vmatprep.subr.bf16.mxu0 %v2173
    %2368 = vmatpush1.bf16.msra.mxu0 %v2172
    %2369 = vmatprep.subr.bf16.mxu0 %v2177
    %2370 = vmatpush1.bf16.msra.mxu0 %v2176
    %2371 = vmatprep.subr.bf16.mxu0 %v2181
    %2372 = vmatpush1.bf16.msra.mxu0 %v2180
    %2373 = vmatprep.subr.bf16.mxu0 %v2185
    %2374 = vmatpush1.bf16.msra.mxu0 %v2184
    %2375 = vmatprep.subr.bf16.mxu0 %v2189
    %2376 = vmatpush1.bf16.msra.mxu0 %v2188
    %2377 = vmatprep.subr.bf16.mxu0 %v2193
    %2378 = vmatpush1.bf16.msra.mxu0 %v2192
    %2379 = vmatprep.subr.bf16.mxu0 %v2197
    %2380 = vmatpush1.bf16.msra.mxu0 %v2196
    %2381 = vmatprep.subr.bf16.mxu0 %v2201
    %2382 = vmatpush1.bf16.msra.mxu0 %v2200
    %2383 = vmatprep.subr.bf16.mxu0 %v2205
    %2384 = vmatpush1.bf16.msra.mxu0 %v2204
    %2385 = vmatprep.subr.bf16.mxu0 %v2209
    %2386 = vmatpush1.bf16.msra.mxu0 %v2208
    %2387 = vmatprep.subr.bf16.mxu0 %v2213
    %2388 = vmatpush1.bf16.msra.mxu0 %v2212
    %2389 = vmatprep.subr.bf16.mxu0 %v2217
    %2390 = vmatpush1.bf16.msra.mxu0 %v2216
    %2391 = vmatprep.mubr.bf16.mxu0 %v1731
    %2392 = vmatmul.mubr.bf16.gmra.mrb[0].mxu0 %v1730
    %v2393 = vpop.f32.mrb[0].mxu0
    %v2394 = vadd.f32 %v1839, %v2393
    %v2395 = vpop.f32.mrb[0].mxu0
    %v2396 = vadd.f32 %v1843, %v2395
    %v2397 = vpop.f32.mrb[0].mxu0
    %v2398 = vpop.f32.mrb[0].mxu0
    %2399 = vdwg.mxu0
    %2400 = vmatprep.subr.bf16.mxu0 %v2221
    %2401 = vmatpush1.bf16.msra.mxu0 %v2220
    %2402 = vmatprep.subr.bf16.mxu0 %v2225
    %2403 = vmatpush1.bf16.msra.mxu0 %v2224
    %2404 = vmatprep.subr.bf16.mxu0 %v2229
    %2405 = vmatpush1.bf16.msra.mxu0 %v2228
    %2406 = vmatprep.subr.bf16.mxu0 %v2233
    %2407 = vmatpush1.bf16.msra.mxu0 %v2232
    %2408 = vmatprep.subr.bf16.mxu0 %v2237
    %2409 = vmatpush1.bf16.msra.mxu0 %v2236
    %2410 = vmatprep.subr.bf16.mxu0 %v2241
    %2411 = vmatpush1.bf16.msra.mxu0 %v2240
    %2412 = vmatprep.subr.bf16.mxu0 %v2245
    %2413 = vmatpush1.bf16.msra.mxu0 %v2244
    %2414 = vmatprep.subr.bf16.mxu0 %v2249
    %2415 = vmatpush1.bf16.msra.mxu0 %v2248
    %2416 = vmatprep.subr.bf16.mxu0 %v2253
    %2417 = vmatpush1.bf16.msra.mxu0 %v2252
    %2418 = vmatprep.subr.bf16.mxu0 0
    %2419 = vmatpush1.bf16.msra.mxu0 0
    %2420 = vmatprep.subr.bf16.mxu0 0
    %2421 = vmatpush1.bf16.msra.mxu0 0
    %2422 = vmatprep.subr.bf16.mxu0 0
    %2423 = vmatpush1.bf16.msra.mxu0 0
    %2424 = vmatprep.subr.bf16.mxu0 0
    %2425 = vmatpush1.bf16.msra.mxu0 0
    %2426 = vmatprep.subr.bf16.mxu0 0
    %2427 = vmatpush1.bf16.msra.mxu0 0
    %2428 = vmatprep.subr.bf16.mxu0 0
    %2429 = vmatpush1.bf16.msra.mxu0 0
    %2430 = vmatprep.subr.bf16.mxu0 0
    %2431 = vmatpush1.bf16.msra.mxu0 0
    %2432 = vmatprep.mubr.bf16.mxu0 %v2357
    %2433 = vmatmul.mubr.bf16.gmra.mrb[0].mxu0 %v1732
    %v2434 = vpop.f32.mrb[0].mxu0
    %v2435 = vadd.f32 %v2394, %v2434
    %v2436 = vpop.f32.mrb[0].mxu0
    %v2437 = vadd.f32 %v2396, %v2436
    %v2438 = vpop.f32.mrb[0].mxu0
    %v2439 = vpop.f32.mrb[0].mxu0
    %2440 = vdwg.mxu0
    %2441 = vmatprep.subr.bf16.mxu0 %v2159
    %2442 = vmatpush1.bf16.msra.mxu0 %v2158
    %2443 = vmatprep.subr.bf16.mxu0 %v2163
    %2444 = vmatpush1.bf16.msra.mxu0 %v2162
    %2445 = vmatprep.subr.bf16.mxu0 %v2167
    %2446 = vmatpush1.bf16.msra.mxu0 %v2166
    %2447 = vmatprep.subr.bf16.mxu0 %v2171
    %2448 = vmatpush1.bf16.msra.mxu0 %v2170
    %2449 = vmatprep.subr.bf16.mxu0 %v2175
    %2450 = vmatpush1.bf16.msra.mxu0 %v2174
    %2451 = vmatprep.subr.bf16.mxu0 %v2179
    %2452 = vmatpush1.bf16.msra.mxu0 %v2178
    %2453 = vmatprep.subr.bf16.mxu0 %v2183
    %2454 = vmatpush1.bf16.msra.mxu0 %v2182
    %2455 = vmatprep.subr.bf16.mxu0 %v2187
    %2456 = vmatpush1.bf16.msra.mxu0 %v2186
    %2457 = vmatprep.subr.bf16.mxu0 %v2191
    %2458 = vmatpush1.bf16.msra.mxu0 %v2190
    %2459 = vmatprep.subr.bf16.mxu0 %v2195
    %2460 = vmatpush1.bf16.msra.mxu0 %v2194
    %2461 = vmatprep.subr.bf16.mxu0 %v2199
    %2462 = vmatpush1.bf16.msra.mxu0 %v2198
    %2463 = vmatprep.subr.bf16.mxu0 %v2203
    %2464 = vmatpush1.bf16.msra.mxu0 %v2202
    %2465 = vmatprep.subr.bf16.mxu0 %v2207
    %2466 = vmatpush1.bf16.msra.mxu0 %v2206
    %2467 = vmatprep.subr.bf16.mxu0 %v2211
    %2468 = vmatpush1.bf16.msra.mxu0 %v2210
    %2469 = vmatprep.subr.bf16.mxu0 %v2215
    %2470 = vmatpush1.bf16.msra.mxu0 %v2214
    %2471 = vmatprep.subr.bf16.mxu0 %v2219
    %2472 = vmatpush1.bf16.msra.mxu0 %v2218
    %2473 = vmatprep.mubr.bf16.mxu0 %v1731
    %2474 = vmatmul.mubr.bf16.gmra.mrb[0].mxu0 %v1730
    %v2475 = vpop.f32.mrb[0].mxu0
    %v2476 = vadd.f32 %v1847, %v2475
    %v2477 = vpop.f32.mrb[0].mxu0
    %v2478 = vadd.f32 %v1851, %v2477
    %v2479 = vpop.f32.mrb[0].mxu0
    %v2480 = vpop.f32.mrb[0].mxu0
    %2481 = vdwg.mxu0
    %2482 = vmatprep.subr.bf16.mxu0 %v2223
    %2483 = vmatpush1.bf16.msra.mxu0 %v2222
    %2484 = vmatprep.subr.bf16.mxu0 %v2227
    %2485 = vmatpush1.bf16.msra.mxu0 %v2226
    %2486 = vmatprep.subr.bf16.mxu0 %v2231
    %2487 = vmatpush1.bf16.msra.mxu0 %v2230
    %2488 = vmatprep.subr.bf16.mxu0 %v2235
    %2489 = vmatpush1.bf16.msra.mxu0 %v2234
    %2490 = vmatprep.subr.bf16.mxu0 %v2239
    %2491 = vmatpush1.bf16.msra.mxu0 %v2238
    %2492 = vmatprep.subr.bf16.mxu0 %v2243
    %2493 = vmatpush1.bf16.msra.mxu0 %v2242
    %2494 = vmatprep.subr.bf16.mxu0 %v2247
    %2495 = vmatpush1.bf16.msra.mxu0 %v2246
    %2496 = vmatprep.subr.bf16.mxu0 %v2251
    %2497 = vmatpush1.bf16.msra.mxu0 %v2250
    %2498 = vmatprep.subr.bf16.mxu0 %v2255
    %2499 = vmatpush1.bf16.msra.mxu0 %v2254
    %2500 = vmatprep.subr.bf16.mxu0 0
    %2501 = vmatpush1.bf16.msra.mxu0 0
    %2502 = vmatprep.subr.bf16.mxu0 0
    %2503 = vmatpush1.bf16.msra.mxu0 0
    %2504 = vmatprep.subr.bf16.mxu0 0
    %2505 = vmatpush1.bf16.msra.mxu0 0
    %2506 = vmatprep.subr.bf16.mxu0 0
    %2507 = vmatpush1.bf16.msra.mxu0 0
    %2508 = vmatprep.subr.bf16.mxu0 0
    %2509 = vmatpush1.bf16.msra.mxu0 0
    %2510 = vmatprep.subr.bf16.mxu0 0
    %2511 = vmatpush1.bf16.msra.mxu0 0
    %2512 = vmatprep.subr.bf16.mxu0 0
    %2513 = vmatpush1.bf16.msra.mxu0 0
    %2514 = vmatprep.mubr.bf16.mxu0 %v2357
    %2515 = vmatmul.mubr.bf16.gmra.mrb[0].mxu0 %v1732
    %v2516 = vpop.f32.mrb[0].mxu0
    %v2517 = vadd.f32 %v2476, %v2516
    %v2518 = vpop.f32.mrb[0].mxu0
    %v2519 = vadd.f32 %v2478, %v2518
    %v2520 = vpop.f32.mrb[0].mxu0
    %v2521 = vpop.f32.mrb[0].mxu0
    %2522 = vdwg.mxu0
    %v2523 = vmax.f32 %v2435, 0.0
    %v2524 = vmax.f32 %v2437, 0.0
    %v2525 = vmax.f32 %v2517, 0.0
    %v2526 = vmax.f32 %v2519, 0.0
    %v2527 = vld [vmem:[%s8] sm:$0xff]
    %v2528 = vld [vmem:[%s8 + $0x8] sm:$0xff]
    %v2529 = vld [vmem:[%s8 + $0x10] sm:$0xff]
    %v2530 = vld [vmem:[%s8 + $0x18] sm:$0xff]
    %v2531 = vld [vmem:[%s8 + $0x20] sm:$0xff]
    %v2532 = vld [vmem:[%s8 + $0x28] sm:$0xff]
    %v2533 = vld [vmem:[%s8 + $0x30] sm:$0xff]
    %v2534 = vld [vmem:[%s8 + $0x38] sm:$0xff]
    %v2535 = vld [vmem:[%s8 + $0x40] sm:$0xff]
    %v2536 = vld [vmem:[%s8 + $0x48] sm:$0xff]
    %v2537 = vld [vmem:[%s8 + $0x50] sm:$0xff]
    %v2538 = vld [vmem:[%s8 + $0x58] sm:$0xff]
    %v2539 = vld [vmem:[%s8 + $0x60] sm:$0xff]
    %v2540 = vld [vmem:[%s8 + $0x68] sm:$0xff]
    %v2541 = vld [vmem:[%s8 + $0x70] sm:$0xff]
    %v2542 = vld [vmem:[%s8 + $0x78] sm:$0xff]
    %v2543 = vld [vmem:[%s8 + $0x80] sm:$0xff]
    %v2544 = vld [vmem:[%s8 + $0x88] sm:$0xff]
    %v2545 = vld [vmem:[%s8 + $0x90] sm:$0xff]
    %v2546 = vld [vmem:[%s8 + $0x98] sm:$0xff]
    %v2547 = vld [vmem:[%s8 + $0xa0] sm:$0xff]
    %v2548 = vld [vmem:[%s8 + $0xa8] sm:$0xff]
    %v2549 = vld [vmem:[%s8 + $0xb0] sm:$0xff]
    %v2550 = vld [vmem:[%s8 + $0xb8] sm:$0xff]
    %v2551 = vld [vmem:[%s8 + $0xc0] sm:$0xff]
    %v2552 = vld [vmem:[%s8 + $0xc8] sm:$0xff]
    %v2553 = vld [vmem:[%s8 + $0xd0] sm:$0xff]
    %v2554 = vld [vmem:[%s8 + $0xd8] sm:$0xff]
    %v2555 = vld [vmem:[%s8 + $0xe0] sm:$0xff]
    %v2556 = vld [vmem:[%s8 + $0xe8] sm:$0xff]
    %v2557 = vld [vmem:[%s8 + $0xf0] sm:$0xff]
    %v2558 = vld [vmem:[%s8 + $0xf8] sm:$0xff]
    %v2559 = vld [vmem:[%s8 + $0x100] sm:$0xff]
    %v2560 = vld [vmem:[%s8 + $0x108] sm:$0xff]
    %v2561 = vld [vmem:[%s8 + $0x110] sm:$0xff]
    %v2562 = vld [vmem:[%s8 + $0x118] sm:$0xff]
    %v2563 = vld [vmem:[%s8 + $0x120] sm:$0xff]
    %v2564 = vld [vmem:[%s8 + $0x128] sm:$0xff]
    %v2565 = vld [vmem:[%s8 + $0x130] sm:$0xff]
    %v2566 = vld [vmem:[%s8 + $0x138] sm:$0xff]
    %v2567 = vld [vmem:[%s8 + $0x140] sm:$0xff]
    %v2568 = vld [vmem:[%s8 + $0x148] sm:$0xff]
    %v2569 = vld [vmem:[%s8 + $0x150] sm:$0xff]
    %v2570 = vld [vmem:[%s8 + $0x158] sm:$0xff]
    %v2571 = vld [vmem:[%s8 + $0x160] sm:$0xff]
    %v2572 = vld [vmem:[%s8 + $0x168] sm:$0xff]
    %v2573 = vld [vmem:[%s8 + $0x170] sm:$0xff]
    %v2574 = vld [vmem:[%s8 + $0x178] sm:$0xff]
    %v2575 = vld [vmem:[%s8 + $0x180] sm:$0xff]
    %v2576 = vld [vmem:[%s8 + $0x188] sm:$0xff]
    %v2577 = vld [vmem:[%s9] sm:$0x1]
    %v2579 = vlaneseq
    %v2580 = vshrl.u32 %v2579, 7
    %v2581 = vsub.s32 0, %v2580
    %v2582 = vrot.slane %v2577, %v2581
    %v2585 = vsel %vm1368, %v2526, 0
    %2587 = vmatprep.subr.mxu0 0.0
    %2588 = vmatpush1.msra.mxu0 %v2527
    %2589 = vmatprep.subr.mxu0 0.0
    %2590 = vmatpush1.msra.mxu0 %v2528
    %2591 = vmatprep.subr.mxu0 0.0
    %2592 = vmatpush1.msra.mxu0 %v2529
    %2593 = vmatprep.subr.mxu0 0.0
    %2594 = vmatpush1.msra.mxu0 %v2530
    %2595 = vmatprep.subr.mxu0 0.0
    %2596 = vmatpush1.msra.mxu0 %v2531
    %2597 = vmatprep.subr.mxu0 0.0
    %2598 = vmatpush1.msra.mxu0 %v2532
    %2599 = vmatprep.subr.mxu0 0.0
    %2600 = vmatpush1.msra.mxu0 %v2533
    %2601 = vmatprep.subr.mxu0 0.0
    %2602 = vmatpush1.msra.mxu0 %v2534
    %2603 = vmatprep.subr.mxu0 0.0
    %2604 = vmatpush1.msra.mxu0 %v2535
    %2605 = vmatprep.subr.mxu0 0.0
    %2606 = vmatpush1.msra.mxu0 %v2536
    %2607 = vmatprep.subr.mxu0 0.0
    %2608 = vmatpush1.msra.mxu0 %v2537
    %2609 = vmatprep.subr.mxu0 0.0
    %2610 = vmatpush1.msra.mxu0 %v2538
    %2611 = vmatprep.subr.mxu0 0.0
    %2612 = vmatpush1.msra.mxu0 %v2539
    %2613 = vmatprep.subr.mxu0 0.0
    %2614 = vmatpush1.msra.mxu0 %v2540
    %2615 = vmatprep.subr.mxu0 0.0
    %2616 = vmatpush1.msra.mxu0 %v2541
    %2617 = vmatprep.subr.mxu0 0.0
    %2618 = vmatpush1.msra.mxu0 %v2542
    %2619 = vmatprep.subr.mxu0 0.0
    %2620 = vmatpush1.msra.mxu0 %v2543
    %2621 = vmatprep.subr.mxu0 0.0
    %2622 = vmatpush1.msra.mxu0 %v2544
    %2623 = vmatprep.subr.mxu0 0.0
    %2624 = vmatpush1.msra.mxu0 %v2545
    %2625 = vmatprep.subr.mxu0 0.0
    %2626 = vmatpush1.msra.mxu0 %v2546
    %2627 = vmatprep.subr.mxu0 0.0
    %2628 = vmatpush1.msra.mxu0 %v2547
    %2629 = vmatprep.subr.mxu0 0.0
    %2630 = vmatpush1.msra.mxu0 %v2548
    %2631 = vmatprep.subr.mxu0 0.0
    %2632 = vmatpush1.msra.mxu0 %v2549
    %2633 = vmatprep.subr.mxu0 0.0
    %2634 = vmatpush1.msra.mxu0 %v2550
    %2635 = vmatprep.subr.mxu0 0.0
    %2636 = vmatpush1.msra.mxu0 %v2551
    %2637 = vmatprep.subr.mxu0 0.0
    %2638 = vmatpush1.msra.mxu0 %v2552
    %2639 = vmatprep.subr.mxu0 0.0
    %2640 = vmatpush1.msra.mxu0 %v2553
    %2641 = vmatprep.subr.mxu0 0.0
    %2642 = vmatpush1.msra.mxu0 %v2554
    %2643 = vmatprep.subr.mxu0 0.0
    %2644 = vmatpush1.msra.mxu0 %v2555
    %2645 = vmatprep.subr.mxu0 0.0
    %2646 = vmatpush1.msra.mxu0 %v2556
    %2647 = vmatprep.subr.mxu0 0.0
    %2648 = vmatpush1.msra.mxu0 %v2557
    %2649 = vmatprep.subr.mxu0 0.0
    %2650 = vmatpush1.msra.mxu0 %v2558
    %2651 = vmatprep.mubr.f32.mxu0 %v2524
    %2652 = vmatmul.mubr.f32.gmra.mrb[0].mxu0 %v2523
    %v2653 = vpop.f32.mrb[0].mxu0
    %v2654 = vadd.f32 %v2582, %v2653
    %v2655 = vpop.f32.mrb[0].mxu0
    %2656 = vdwg.mxu0
    %2657 = vmatprep.subr.mxu0 0.0
    %2658 = vmatpush1.msra.mxu0 %v2559
    %2659 = vmatprep.subr.mxu0 0.0
    %2660 = vmatpush1.msra.mxu0 %v2560
    %2661 = vmatprep.subr.mxu0 0.0
    %2662 = vmatpush1.msra.mxu0 %v2561
    %2663 = vmatprep.subr.mxu0 0.0
    %2664 = vmatpush1.msra.mxu0 %v2562
    %2665 = vmatprep.subr.mxu0 0.0
    %2666 = vmatpush1.msra.mxu0 %v2563
    %2667 = vmatprep.subr.mxu0 0.0
    %2668 = vmatpush1.msra.mxu0 %v2564
    %2669 = vmatprep.subr.mxu0 0.0
    %2670 = vmatpush1.msra.mxu0 %v2565
    %2671 = vmatprep.subr.mxu0 0.0
    %2672 = vmatpush1.msra.mxu0 %v2566
    %2673 = vmatprep.subr.mxu0 0.0
    %2674 = vmatpush1.msra.mxu0 %v2567
    %2675 = vmatprep.subr.mxu0 0.0
    %2676 = vmatpush1.msra.mxu0 %v2568
    %2677 = vmatprep.subr.mxu0 0.0
    %2678 = vmatpush1.msra.mxu0 %v2569
    %2679 = vmatprep.subr.mxu0 0.0
    %2680 = vmatpush1.msra.mxu0 %v2570
    %2681 = vmatprep.subr.mxu0 0.0
    %2682 = vmatpush1.msra.mxu0 %v2571
    %2683 = vmatprep.subr.mxu0 0.0
    %2684 = vmatpush1.msra.mxu0 %v2572
    %2685 = vmatprep.subr.mxu0 0.0
    %2686 = vmatpush1.msra.mxu0 %v2573
    %2687 = vmatprep.subr.mxu0 0.0
    %2688 = vmatpush1.msra.mxu0 %v2574
    %2689 = vmatprep.subr.mxu0 0.0
    %2690 = vmatpush1.msra.mxu0 %v2575
    %2691 = vmatprep.subr.mxu0 0.0
    %2692 = vmatpush1.msra.mxu0 %v2576
    %2693 = vmatprep.subr.mxu0 0.0
    %2694 = vmatpush1.msra.mxu0 0.0
    %2695 = vmatprep.subr.mxu0 0.0
    %2696 = vmatpush1.msra.mxu0 0.0
    %2697 = vmatprep.subr.mxu0 0.0
    %2698 = vmatpush1.msra.mxu0 0.0
    %2699 = vmatprep.subr.mxu0 0.0
    %2700 = vmatpush1.msra.mxu0 0.0
    %2701 = vmatprep.subr.mxu0 0.0
    %2702 = vmatpush1.msra.mxu0 0.0
    %2703 = vmatprep.subr.mxu0 0.0
    %2704 = vmatpush1.msra.mxu0 0.0
    %2705 = vmatprep.subr.mxu0 0.0
    %2706 = vmatpush1.msra.mxu0 0.0
    %2707 = vmatprep.subr.mxu0 0.0
    %2708 = vmatpush1.msra.mxu0 0.0
    %2709 = vmatprep.subr.mxu0 0.0
    %2710 = vmatpush1.msra.mxu0 0.0
    %2711 = vmatprep.subr.mxu0 0.0
    %2712 = vmatpush1.msra.mxu0 0.0
    %2713 = vmatprep.subr.mxu0 0.0
    %2714 = vmatpush1.msra.mxu0 0.0
    %2715 = vmatprep.subr.mxu0 0.0
    %2716 = vmatpush1.msra.mxu0 0.0
    %2717 = vmatprep.subr.mxu0 0.0
    %2718 = vmatpush1.msra.mxu0 0.0
    %2719 = vmatprep.subr.mxu0 0.0
    %2720 = vmatpush1.msra.mxu0 0.0
    %2721 = vmatprep.mubr.f32.mxu0 %v2585
    %2722 = vmatmul.mubr.f32.gmra.mrb[0].mxu0 %v2525
    %v2723 = vpop.f32.mrb[0].mxu0
    %v2724 = vadd.f32 %v2654, %v2723
    %v2725 = vpop.f32.mrb[0].mxu0
    %2726 = vdwg.mxu0
    %v2727 = vmul.f32 %v2724, 0.5
    %v2728 = vmul.f32 %v2727, 1.442695
    %v2729 = vpow.pop %v2728
    %v2730 = vld [vmem:[%s2] sm:$0xff]
    %2732 = vrot.lane.b32.xlu0 %v2729, 108
    %v2733 = vpop.permute.xlu0 %2732
    %v2735 = vmul.f32 %v2730, %v2733
    %v2736 = vadd.f32 %v2724, %v2735
    %2738 = vrot.lane.b32.xlu0 %v71, 20
    %v2739 = vpop.permute.xlu0 %2738
    %vm2741 = vcmask 162816
    %v2742 = vsel %vm2741, %v2736, %v2739
    %v2743 = vpack.c.bf16 %v2742, %v2742
    %v2744 = vld [vmem:[%s10] sm:$0xff]
    %v2745 = vld [vmem:[%s10 + $0x8] sm:$0xff]
    %v2746 = vld [vmem:[%s10 + $0x10] sm:$0xff]
    %v2747 = vld [vmem:[%s10 + $0x18] sm:$0xff]
    %v2748 = vld [vmem:[%s10 + $0x20] sm:$0xff]
    %v2749 = vld [vmem:[%s10 + $0x28] sm:$0xff]
    %v2750 = vld [vmem:[%s10 + $0x30] sm:$0x77]
    %v2751 = vld [vmem:[%s10 + $0x38] sm:$0x77]
    %v2752 = vld [vmem:[%s11] sm:$0xf]
    %v2754 = vlaneseq
    %v2755 = vshrl.u32 %v2754, 7
    %v2756 = vsub.s32 0, %v2755
    %v2757 = vrot.slane %v2752, %v2756
    %v2758 = vlaneseq
    %v2759 = vshrl.u32 %v2758, 7
    %v2760 = vsub.s32 1, %v2759
    %v2761 = vrot.slane %v2752, %v2760
    %v2762 = vlaneseq
    %v2763 = vshrl.u32 %v2762, 7
    %v2764 = vsub.s32 2, %v2763
    %v2765 = vrot.slane %v2752, %v2764
    %v2766 = vlaneseq
    %v2767 = vshrl.u32 %v2766, 7
    %v2768 = vsub.s32 3, %v2767
    %v2769 = vrot.slane %v2752, %v2768
    %v2782 = vunpack.c.l.b16 %v2744
    %v2783 = vunpack.c.h.b16 %v2744
    %v2784 = vunpack.c.l.b16 %v2745
    %v2785 = vunpack.c.h.b16 %v2745
    %v2786 = vunpack.c.l.b16 %v2746
    %v2787 = vunpack.c.h.b16 %v2746
    %v2788 = vunpack.c.l.b16 %v2747
    %v2789 = vunpack.c.h.b16 %v2747
    %v2790 = vunpack.c.l.b16 %v2748
    %v2791 = vunpack.c.h.b16 %v2748
    %v2792 = vunpack.c.l.b16 %v2749
    %v2793 = vunpack.c.h.b16 %v2749
    %v2794 = vunpack.c.l.b16 %v2750
    %v2795 = vunpack.c.h.b16 %v2750
    %v2796 = vunpack.c.l.b16 %v2751
    %v2797 = vunpack.c.h.b16 %v2751
    %v2798 = vpack.c.b16 %v2786, %v2782
    %v2799 = vpack.c.b16 %v2787, %v2783
    %v2800 = vpack.c.b16 %v2788, %v2784
    %v2801 = vpack.c.b16 %v2789, %v2785
    %v2802 = vpack.c.b16 %v2794, %v2790
    %v2803 = vpack.c.b16 %v2795, %v2791
    %v2804 = vpack.c.b16 %v2796, %v2792
    %v2805 = vpack.c.b16 %v2797, %v2793
    %vm2810 = vcmask 244736
    %v2812 = vsel %vm2810, %v2743, 0
    %vm2814 = vcmask 1046528
    %v2816 = vsel %vm2814, %v2802, 0
    %v2819 = vsel %vm2814, %v2803, 0
    %v2822 = vsel %vm2814, %v2804, 0
    %v2825 = vsel %vm2814, %v2805, 0
    %2827 = vmatprep.subr.bf16.mxu0 %v2799
    %2828 = vmatpush1.bf16.msra.mxu0 %v2798
    %2829 = vmatprep.subr.bf16.mxu0 %v2819
    %2830 = vmatpush1.bf16.msra.mxu0 %v2816
    %2831 = vmatprep.subr.bf16.mxu0 0
    %2832 = vmatpush1.bf16.msra.mxu0 0
    %2833 = vmatprep.subr.bf16.mxu0 0
    %2834 = vmatpush1.bf16.msra.mxu0 0
    %2835 = vmatprep.subr.bf16.mxu0 0
    %2836 = vmatpush1.bf16.msra.mxu0 0
    %2837 = vmatprep.subr.bf16.mxu0 0
    %2838 = vmatpush1.bf16.msra.mxu0 0
    %2839 = vmatprep.subr.bf16.mxu0 0
    %2840 = vmatpush1.bf16.msra.mxu0 0
    %2841 = vmatprep.subr.bf16.mxu0 0
    %2842 = vmatpush1.bf16.msra.mxu0 0
    %2843 = vmatprep.subr.bf16.mxu0 0
    %2844 = vmatpush1.bf16.msra.mxu0 0
    %2845 = vmatprep.subr.bf16.mxu0 0
    %2846 = vmatpush1.bf16.msra.mxu0 0
    %2847 = vmatprep.subr.bf16.mxu0 0
    %2848 = vmatpush1.bf16.msra.mxu0 0
    %2849 = vmatprep.subr.bf16.mxu0 0
    %2850 = vmatpush1.bf16.msra.mxu0 0
    %2851 = vmatprep.subr.bf16.mxu0 0
    %2852 = vmatpush1.bf16.msra.mxu0 0
    %2853 = vmatprep.subr.bf16.mxu0 0
    %2854 = vmatpush1.bf16.msra.mxu0 0
    %2855 = vmatprep.subr.bf16.mxu0 0
    %2856 = vmatpush1.bf16.msra.mxu0 0
    %2857 = vmatprep.subr.bf16.mxu0 0
    %2858 = vmatpush1.bf16.msra.mxu0 0
    %2859 = vmatprep.mubr.bf16.mxu0 0
    %2860 = vmatmul.mubr.bf16.gmra.mrb[0].mxu0 %v2812
    %v2861 = vpop.f32.mrb[0].mxu0
    %v2862 = vadd.f32 %v2757, %v2861
    %v2863 = vpop.f32.mrb[0].mxu0
    %v2864 = vadd.f32 %v2761, %v2863
    %v2865 = vpop.f32.mrb[0].mxu0
    %v2866 = vpop.f32.mrb[0].mxu0
    %2867 = vdwg.mxu0
    %2868 = vmatprep.subr.bf16.mxu0 %v2801
    %2869 = vmatpush1.bf16.msra.mxu0 %v2800
    %2870 = vmatprep.subr.bf16.mxu0 %v2825
    %2871 = vmatpush1.bf16.msra.mxu0 %v2822
    %2872 = vmatprep.subr.bf16.mxu0 0
    %2873 = vmatpush1.bf16.msra.mxu0 0
    %2874 = vmatprep.subr.bf16.mxu0 0
    %2875 = vmatpush1.bf16.msra.mxu0 0
    %2876 = vmatprep.subr.bf16.mxu0 0
    %2877 = vmatpush1.bf16.msra.mxu0 0
    %2878 = vmatprep.subr.bf16.mxu0 0
    %2879 = vmatpush1.bf16.msra.mxu0 0
    %2880 = vmatprep.subr.bf16.mxu0 0
    %2881 = vmatpush1.bf16.msra.mxu0 0
    %2882 = vmatprep.subr.bf16.mxu0 0
    %2883 = vmatpush1.bf16.msra.mxu0 0
    %2884 = vmatprep.subr.bf16.mxu0 0
    %2885 = vmatpush1.bf16.msra.mxu0 0
    %2886 = vmatprep.subr.bf16.mxu0 0
    %2887 = vmatpush1.bf16.msra.mxu0 0
    %2888 = vmatprep.subr.bf16.mxu0 0
    %2889 = vmatpush1.bf16.msra.mxu0 0
    %2890 = vmatprep.subr.bf16.mxu0 0
    %2891 = vmatpush1.bf16.msra.mxu0 0
    %2892 = vmatprep.subr.bf16.mxu0 0
    %2893 = vmatpush1.bf16.msra.mxu0 0
    %2894 = vmatprep.subr.bf16.mxu0 0
    %2895 = vmatpush1.bf16.msra.mxu0 0
    %2896 = vmatprep.subr.bf16.mxu0 0
    %2897 = vmatpush1.bf16.msra.mxu0 0
    %2898 = vmatprep.subr.bf16.mxu0 0
    %2899 = vmatpush1.bf16.msra.mxu0 0
    %2900 = vmatprep.mubr.bf16.mxu0 0
    %2901 = vmatmul.mubr.bf16.gmra.mrb[0].mxu0 %v2812
    %v2902 = vpop.f32.mrb[0].mxu0
    %v2903 = vadd.f32 %v2765, %v2902
    %v2904 = vpop.f32.mrb[0].mxu0
    %v2905 = vadd.f32 %v2769, %v2904
    %v2906 = vpop.f32.mrb[0].mxu0
    %v2907 = vpop.f32.mrb[0].mxu0
    %2908 = vdwg.mxu0
    %v2909 = vmax.f32 %v2862, 0.0
    %v2910 = vmax.f32 %v2864, 0.0
    %v2911 = vmax.f32 %v2903, 0.0
    %v2912 = vmax.f32 %v2905, 0.0
    %v2913 = vpack.c.bf16 %v2909, %v2909
    %v2914 = vpack.c.bf16 %v2910, %v2910
    %v2915 = vpack.c.bf16 %v2911, %v2911
    %v2916 = vpack.c.bf16 %v2912, %v2912
    %v2917 = vld [vmem:[%s12] sm:$0xff]
    %v2918 = vld [vmem:[%s12 + $0x8] sm:$0xff]
    %v2919 = vld [vmem:[%s12 + $0x10] sm:$0xff]
    %v2920 = vld [vmem:[%s12 + $0x18] sm:$0xff]
    %v2921 = vld [vmem:[%s12 + $0x20] sm:$0xff]
    %v2922 = vld [vmem:[%s12 + $0x28] sm:$0xff]
    %v2923 = vld [vmem:[%s12 + $0x30] sm:$0xff]
    %v2924 = vld [vmem:[%s12 + $0x38] sm:$0xff]
    %v2925 = vld [vmem:[%s12 + $0x40] sm:$0xff]
    %v2926 = vld [vmem:[%s12 + $0x48] sm:$0xff]
    %v2927 = vld [vmem:[%s12 + $0x50] sm:$0xff]
    %v2928 = vld [vmem:[%s12 + $0x58] sm:$0xff]
    %v2929 = vld [vmem:[%s12 + $0x60] sm:$0xff]
    %v2930 = vld [vmem:[%s12 + $0x68] sm:$0xff]
    %v2931 = vld [vmem:[%s12 + $0x70] sm:$0xff]
    %v2932 = vld [vmem:[%s12 + $0x78] sm:$0xff]
    %v2933 = vld [vmem:[%s12 + $0x80] sm:$0xff]
    %v2934 = vld [vmem:[%s12 + $0x88] sm:$0xff]
    %v2935 = vld [vmem:[%s12 + $0x90] sm:$0xff]
    %v2936 = vld [vmem:[%s12 + $0x98] sm:$0xff]
    %v2937 = vld [vmem:[%s12 + $0xa0] sm:$0xff]
    %v2938 = vld [vmem:[%s12 + $0xa8] sm:$0xff]
    %v2939 = vld [vmem:[%s12 + $0xb0] sm:$0xff]
    %v2940 = vld [vmem:[%s12 + $0xb8] sm:$0xff]
    %v2941 = vld [vmem:[%s12 + $0xc0] sm:$0xff]
    %v2942 = vld [vmem:[%s12 + $0xc8] sm:$0xff]
    %v2943 = vld [vmem:[%s12 + $0xd0] sm:$0xff]
    %v2944 = vld [vmem:[%s12 + $0xd8] sm:$0xff]
    %v2945 = vld [vmem:[%s12 + $0xe0] sm:$0xff]
    %v2946 = vld [vmem:[%s12 + $0xe8] sm:$0xff]
    %v2947 = vld [vmem:[%s12 + $0xf0] sm:$0xff]
    %v2948 = vld [vmem:[%s12 + $0xf8] sm:$0xff]
    %v2949 = vld [vmem:[%s12 + $0x100] sm:$0xff]
    %v2950 = vld [vmem:[%s12 + $0x108] sm:$0xff]
    %v2951 = vld [vmem:[%s12 + $0x110] sm:$0xff]
    %v2952 = vld [vmem:[%s12 + $0x118] sm:$0xff]
    %v2953 = vld [vmem:[%s12 + $0x120] sm:$0xff]
    %v2954 = vld [vmem:[%s12 + $0x128] sm:$0xff]
    %v2955 = vld [vmem:[%s12 + $0x130] sm:$0xff]
    %v2956 = vld [vmem:[%s12 + $0x138] sm:$0xff]
    %v2957 = vld [vmem:[%s12 + $0x140] sm:$0xff]
    %v2958 = vld [vmem:[%s12 + $0x148] sm:$0xff]
    %v2959 = vld [vmem:[%s12 + $0x150] sm:$0xff]
    %v2960 = vld [vmem:[%s12 + $0x158] sm:$0xff]
    %v2961 = vld [vmem:[%s12 + $0x160] sm:$0xff]
    %v2962 = vld [vmem:[%s12 + $0x168] sm:$0xff]
    %v2963 = vld [vmem:[%s12 + $0x170] sm:$0xff]
    %v2964 = vld [vmem:[%s12 + $0x178] sm:$0xff]
    %v2965 = vld [vmem:[%s12 + $0x180] sm:$0xff]
    %v2966 = vld [vmem:[%s12 + $0x188] sm:$0xff]
    %v2967 = vld [vmem:[%s12 + $0x190] sm:$0xff]
    %v2968 = vld [vmem:[%s12 + $0x198] sm:$0xff]
    %v2969 = vld [vmem:[%s12 + $0x1a0] sm:$0xff]
    %v2970 = vld [vmem:[%s12 + $0x1a8] sm:$0xff]
    %v2971 = vld [vmem:[%s12 + $0x1b0] sm:$0xff]
    %v2972 = vld [vmem:[%s12 + $0x1b8] sm:$0xff]
    %v2973 = vld [vmem:[%s12 + $0x1c0] sm:$0xff]
    %v2974 = vld [vmem:[%s12 + $0x1c8] sm:$0xff]
    %v2975 = vld [vmem:[%s12 + $0x1d0] sm:$0xff]
    %v2976 = vld [vmem:[%s12 + $0x1d8] sm:$0xff]
    %v2977 = vld [vmem:[%s12 + $0x1e0] sm:$0xff]
    %v2978 = vld [vmem:[%s12 + $0x1e8] sm:$0xff]
    %v2979 = vld [vmem:[%s12 + $0x1f0] sm:$0xff]
    %v2980 = vld [vmem:[%s12 + $0x1f8] sm:$0xff]
    %v2981 = vld [vmem:[%s12 + $0x200] sm:$0xff]
    %v2982 = vld [vmem:[%s12 + $0x208] sm:$0xff]
    %v2983 = vld [vmem:[%s12 + $0x210] sm:$0xff]
    %v2984 = vld [vmem:[%s12 + $0x218] sm:$0xff]
    %v2985 = vld [vmem:[%s12 + $0x220] sm:$0xff]
    %v2986 = vld [vmem:[%s12 + $0x228] sm:$0xff]
    %v2987 = vld [vmem:[%s12 + $0x230] sm:$0xff]
    %v2988 = vld [vmem:[%s12 + $0x238] sm:$0xff]
    %v2989 = vld [vmem:[%s12 + $0x240] sm:$0xff]
    %v2990 = vld [vmem:[%s12 + $0x248] sm:$0xff]
    %v2991 = vld [vmem:[%s12 + $0x250] sm:$0xff]
    %v2992 = vld [vmem:[%s12 + $0x258] sm:$0xff]
    %v2993 = vld [vmem:[%s12 + $0x260] sm:$0xff]
    %v2994 = vld [vmem:[%s12 + $0x268] sm:$0xff]
    %v2995 = vld [vmem:[%s12 + $0x270] sm:$0xff]
    %v2996 = vld [vmem:[%s12 + $0x278] sm:$0xff]
    %v2997 = vld [vmem:[%s12 + $0x280] sm:$0xff]
    %v2998 = vld [vmem:[%s12 + $0x288] sm:$0xff]
    %v2999 = vld [vmem:[%s12 + $0x290] sm:$0xff]
    %v3000 = vld [vmem:[%s12 + $0x298] sm:$0xff]
    %v3001 = vld [vmem:[%s12 + $0x2a0] sm:$0xff]
    %v3002 = vld [vmem:[%s12 + $0x2a8] sm:$0xff]
    %v3003 = vld [vmem:[%s12 + $0x2b0] sm:$0xff]
    %v3004 = vld [vmem:[%s12 + $0x2b8] sm:$0xff]
    %v3005 = vld [vmem:[%s12 + $0x2c0] sm:$0xff]
    %v3006 = vld [vmem:[%s12 + $0x2c8] sm:$0xff]
    %v3007 = vld [vmem:[%s12 + $0x2d0] sm:$0xff]
    %v3008 = vld [vmem:[%s12 + $0x2d8] sm:$0xff]
    %v3009 = vld [vmem:[%s12 + $0x2e0] sm:$0xff]
    %v3010 = vld [vmem:[%s12 + $0x2e8] sm:$0xff]
    %v3011 = vld [vmem:[%s12 + $0x2f0] sm:$0xff]
    %v3012 = vld [vmem:[%s12 + $0x2f8] sm:$0xff]
    %v3013 = vld [vmem:[%s12 + $0x300] sm:$0xff]
    %v3014 = vld [vmem:[%s12 + $0x308] sm:$0xff]
    %v3015 = vld [vmem:[%s12 + $0x310] sm:$0xff]
    %v3016 = vld [vmem:[%s12 + $0x318] sm:$0xff]
    %v3017 = vld [vmem:[%s13] sm:$0xf]
    %v3019 = vlaneseq
    %v3020 = vshrl.u32 %v3019, 7
    %v3021 = vsub.s32 0, %v3020
    %v3022 = vrot.slane %v3017, %v3021
    %v3023 = vlaneseq
    %v3024 = vshrl.u32 %v3023, 7
    %v3025 = vsub.s32 1, %v3024
    %v3026 = vrot.slane %v3017, %v3025
    %v3027 = vlaneseq
    %v3028 = vshrl.u32 %v3027, 7
    %v3029 = vsub.s32 2, %v3028
    %v3030 = vrot.slane %v3017, %v3029
    %v3031 = vlaneseq
    %v3032 = vshrl.u32 %v3031, 7
    %v3033 = vsub.s32 3, %v3032
    %v3034 = vrot.slane %v3017, %v3033
    %v3139 = vunpack.c.l.b16 %v2917
    %v3140 = vunpack.c.h.b16 %v2917
    %v3141 = vunpack.c.l.b16 %v2918
    %v3142 = vunpack.c.h.b16 %v2918
    %v3143 = vunpack.c.l.b16 %v2919
    %v3144 = vunpack.c.h.b16 %v2919
    %v3145 = vunpack.c.l.b16 %v2920
    %v3146 = vunpack.c.h.b16 %v2920
    %v3147 = vunpack.c.l.b16 %v2921
    %v3148 = vunpack.c.h.b16 %v2921
    %v3149 = vunpack.c.l.b16 %v2922
    %v3150 = vunpack.c.h.b16 %v2922
    %v3151 = vunpack.c.l.b16 %v2923
    %v3152 = vunpack.c.h.b16 %v2923
    %v3153 = vunpack.c.l.b16 %v2924
    %v3154 = vunpack.c.h.b16 %v2924
    %v3155 = vunpack.c.l.b16 %v2925
    %v3156 = vunpack.c.h.b16 %v2925
    %v3157 = vunpack.c.l.b16 %v2926
    %v3158 = vunpack.c.h.b16 %v2926
    %v3159 = vunpack.c.l.b16 %v2927
    %v3160 = vunpack.c.h.b16 %v2927
    %v3161 = vunpack.c.l.b16 %v2928
    %v3162 = vunpack.c.h.b16 %v2928
    %v3163 = vunpack.c.l.b16 %v2929
    %v3164 = vunpack.c.h.b16 %v2929
    %v3165 = vunpack.c.l.b16 %v2930
    %v3166 = vunpack.c.h.b16 %v2930
    %v3167 = vunpack.c.l.b16 %v2931
    %v3168 = vunpack.c.h.b16 %v2931
    %v3169 = vunpack.c.l.b16 %v2932
    %v3170 = vunpack.c.h.b16 %v2932
    %v3171 = vunpack.c.l.b16 %v2933
    %v3172 = vunpack.c.h.b16 %v2933
    %v3173 = vunpack.c.l.b16 %v2934
    %v3174 = vunpack.c.h.b16 %v2934
    %v3175 = vunpack.c.l.b16 %v2935
    %v3176 = vunpack.c.h.b16 %v2935
    %v3177 = vunpack.c.l.b16 %v2936
    %v3178 = vunpack.c.h.b16 %v2936
    %v3179 = vunpack.c.l.b16 %v2937
    %v3180 = vunpack.c.h.b16 %v2937
    %v3181 = vunpack.c.l.b16 %v2938
    %v3182 = vunpack.c.h.b16 %v2938
    %v3183 = vunpack.c.l.b16 %v2939
    %v3184 = vunpack.c.h.b16 %v2939
    %v3185 = vunpack.c.l.b16 %v2940
    %v3186 = vunpack.c.h.b16 %v2940
    %v3187 = vunpack.c.l.b16 %v2941
    %v3188 = vunpack.c.h.b16 %v2941
    %v3189 = vunpack.c.l.b16 %v2942
    %v3190 = vunpack.c.h.b16 %v2942
    %v3191 = vunpack.c.l.b16 %v2943
    %v3192 = vunpack.c.h.b16 %v2943
    %v3193 = vunpack.c.l.b16 %v2944
    %v3194 = vunpack.c.h.b16 %v2944
    %v3195 = vunpack.c.l.b16 %v2945
    %v3196 = vunpack.c.h.b16 %v2945
    %v3197 = vunpack.c.l.b16 %v2946
    %v3198 = vunpack.c.h.b16 %v2946
    %v3199 = vunpack.c.l.b16 %v2947
    %v3200 = vunpack.c.h.b16 %v2947
    %v3201 = vunpack.c.l.b16 %v2948
    %v3202 = vunpack.c.h.b16 %v2948
    %v3203 = vunpack.c.l.b16 %v2949
    %v3204 = vunpack.c.h.b16 %v2949
    %v3205 = vunpack.c.l.b16 %v2950
    %v3206 = vunpack.c.h.b16 %v2950
    %v3207 = vunpack.c.l.b16 %v2951
    %v3208 = vunpack.c.h.b16 %v2951
    %v3209 = vunpack.c.l.b16 %v2952
    %v3210 = vunpack.c.h.b16 %v2952
    %v3211 = vunpack.c.l.b16 %v2953
    %v3212 = vunpack.c.h.b16 %v2953
    %v3213 = vunpack.c.l.b16 %v2954
    %v3214 = vunpack.c.h.b16 %v2954
    %v3215 = vunpack.c.l.b16 %v2955
    %v3216 = vunpack.c.h.b16 %v2955
    %v3217 = vunpack.c.l.b16 %v2956
    %v3218 = vunpack.c.h.b16 %v2956
    %v3219 = vunpack.c.l.b16 %v2957
    %v3220 = vunpack.c.h.b16 %v2957
    %v3221 = vunpack.c.l.b16 %v2958
    %v3222 = vunpack.c.h.b16 %v2958
    %v3223 = vunpack.c.l.b16 %v2959
    %v3224 = vunpack.c.h.b16 %v2959
    %v3225 = vunpack.c.l.b16 %v2960
    %v3226 = vunpack.c.h.b16 %v2960
    %v3227 = vunpack.c.l.b16 %v2961
    %v3228 = vunpack.c.h.b16 %v2961
    %v3229 = vunpack.c.l.b16 %v2962
    %v3230 = vunpack.c.h.b16 %v2962
    %v3231 = vunpack.c.l.b16 %v2963
    %v3232 = vunpack.c.h.b16 %v2963
    %v3233 = vunpack.c.l.b16 %v2964
    %v3234 = vunpack.c.h.b16 %v2964
    %v3235 = vunpack.c.l.b16 %v2965
    %v3236 = vunpack.c.h.b16 %v2965
    %v3237 = vunpack.c.l.b16 %v2966
    %v3238 = vunpack.c.h.b16 %v2966
    %v3239 = vunpack.c.l.b16 %v2967
    %v3240 = vunpack.c.h.b16 %v2967
    %v3241 = vunpack.c.l.b16 %v2968
    %v3242 = vunpack.c.h.b16 %v2968
    %v3243 = vunpack.c.l.b16 %v2969
    %v3244 = vunpack.c.h.b16 %v2969
    %v3245 = vunpack.c.l.b16 %v2970
    %v3246 = vunpack.c.h.b16 %v2970
    %v3247 = vunpack.c.l.b16 %v2971
    %v3248 = vunpack.c.h.b16 %v2971
    %v3249 = vunpack.c.l.b16 %v2972
    %v3250 = vunpack.c.h.b16 %v2972
    %v3251 = vunpack.c.l.b16 %v2973
    %v3252 = vunpack.c.h.b16 %v2973
    %v3253 = vunpack.c.l.b16 %v2974
    %v3254 = vunpack.c.h.b16 %v2974
    %v3255 = vunpack.c.l.b16 %v2975
    %v3256 = vunpack.c.h.b16 %v2975
    %v3257 = vunpack.c.l.b16 %v2976
    %v3258 = vunpack.c.h.b16 %v2976
    %v3259 = vunpack.c.l.b16 %v2977
    %v3260 = vunpack.c.h.b16 %v2977
    %v3261 = vunpack.c.l.b16 %v2978
    %v3262 = vunpack.c.h.b16 %v2978
    %v3263 = vunpack.c.l.b16 %v2979
    %v3264 = vunpack.c.h.b16 %v2979
    %v3265 = vunpack.c.l.b16 %v2980
    %v3266 = vunpack.c.h.b16 %v2980
    %v3267 = vunpack.c.l.b16 %v2981
    %v3268 = vunpack.c.h.b16 %v2981
    %v3269 = vunpack.c.l.b16 %v2982
    %v3270 = vunpack.c.h.b16 %v2982
    %v3271 = vunpack.c.l.b16 %v2983
    %v3272 = vunpack.c.h.b16 %v2983
    %v3273 = vunpack.c.l.b16 %v2984
    %v3274 = vunpack.c.h.b16 %v2984
    %v3275 = vunpack.c.l.b16 %v2985
    %v3276 = vunpack.c.h.b16 %v2985
    %v3277 = vunpack.c.l.b16 %v2986
    %v3278 = vunpack.c.h.b16 %v2986
    %v3279 = vunpack.c.l.b16 %v2987
    %v3280 = vunpack.c.h.b16 %v2987
    %v3281 = vunpack.c.l.b16 %v2988
    %v3282 = vunpack.c.h.b16 %v2988
    %v3283 = vunpack.c.l.b16 %v2989
    %v3284 = vunpack.c.h.b16 %v2989
    %v3285 = vunpack.c.l.b16 %v2990
    %v3286 = vunpack.c.h.b16 %v2990
    %v3287 = vunpack.c.l.b16 %v2991
    %v3288 = vunpack.c.h.b16 %v2991
    %v3289 = vunpack.c.l.b16 %v2992
    %v3290 = vunpack.c.h.b16 %v2992
    %v3291 = vunpack.c.l.b16 %v2993
    %v3292 = vunpack.c.h.b16 %v2993
    %v3293 = vunpack.c.l.b16 %v2994
    %v3294 = vunpack.c.h.b16 %v2994
    %v3295 = vunpack.c.l.b16 %v2995
    %v3296 = vunpack.c.h.b16 %v2995
    %v3297 = vunpack.c.l.b16 %v2996
    %v3298 = vunpack.c.h.b16 %v2996
    %v3299 = vunpack.c.l.b16 %v2997
    %v3300 = vunpack.c.h.b16 %v2997
    %v3301 = vunpack.c.l.b16 %v2998
    %v3302 = vunpack.c.h.b16 %v2998
    %v3303 = vunpack.c.l.b16 %v2999
    %v3304 = vunpack.c.h.b16 %v2999
    %v3305 = vunpack.c.l.b16 %v3000
    %v3306 = vunpack.c.h.b16 %v3000
    %v3307 = vunpack.c.l.b16 %v3001
    %v3308 = vunpack.c.h.b16 %v3001
    %v3309 = vunpack.c.l.b16 %v3002
    %v3310 = vunpack.c.h.b16 %v3002
    %v3311 = vunpack.c.l.b16 %v3003
    %v3312 = vunpack.c.h.b16 %v3003
    %v3313 = vunpack.c.l.b16 %v3004
    %v3314 = vunpack.c.h.b16 %v3004
    %v3315 = vunpack.c.l.b16 %v3005
    %v3316 = vunpack.c.h.b16 %v3005
    %v3317 = vunpack.c.l.b16 %v3006
    %v3318 = vunpack.c.h.b16 %v3006
    %v3319 = vunpack.c.l.b16 %v3007
    %v3320 = vunpack.c.h.b16 %v3007
    %v3321 = vunpack.c.l.b16 %v3008
    %v3322 = vunpack.c.h.b16 %v3008
    %v3323 = vunpack.c.l.b16 %v3009
    %v3324 = vunpack.c.h.b16 %v3009
    %v3325 = vunpack.c.l.b16 %v3010
    %v3326 = vunpack.c.h.b16 %v3010
    %v3327 = vunpack.c.l.b16 %v3011
    %v3328 = vunpack.c.h.b16 %v3011
    %v3329 = vunpack.c.l.b16 %v3012
    %v3330 = vunpack.c.h.b16 %v3012
    %v3331 = vunpack.c.l.b16 %v3013
    %v3332 = vunpack.c.h.b16 %v3013
    %v3333 = vunpack.c.l.b16 %v3014
    %v3334 = vunpack.c.h.b16 %v3014
    %v3335 = vunpack.c.l.b16 %v3015
    %v3336 = vunpack.c.h.b16 %v3015
    %v3337 = vunpack.c.l.b16 %v3016
    %v3338 = vunpack.c.h.b16 %v3016
    %v3339 = vpack.c.b16 %v3143, %v3139
    %v3340 = vpack.c.b16 %v3144, %v3140
    %v3341 = vpack.c.b16 %v3145, %v3141
    %v3342 = vpack.c.b16 %v3146, %v3142
    %v3343 = vpack.c.b16 %v3151, %v3147
    %v3344 = vpack.c.b16 %v3152, %v3148
    %v3345 = vpack.c.b16 %v3153, %v3149
    %v3346 = vpack.c.b16 %v3154, %v3150
    %v3347 = vpack.c.b16 %v3159, %v3155
    %v3348 = vpack.c.b16 %v3160, %v3156
    %v3349 = vpack.c.b16 %v3161, %v3157
    %v3350 = vpack.c.b16 %v3162, %v3158
    %v3351 = vpack.c.b16 %v3167, %v3163
    %v3352 = vpack.c.b16 %v3168, %v3164
    %v3353 = vpack.c.b16 %v3169, %v3165
    %v3354 = vpack.c.b16 %v3170, %v3166
    %v3355 = vpack.c.b16 %v3175, %v3171
    %v3356 = vpack.c.b16 %v3176, %v3172
    %v3357 = vpack.c.b16 %v3177, %v3173
    %v3358 = vpack.c.b16 %v3178, %v3174
    %v3359 = vpack.c.b16 %v3183, %v3179
    %v3360 = vpack.c.b16 %v3184, %v3180
    %v3361 = vpack.c.b16 %v3185, %v3181
    %v3362 = vpack.c.b16 %v3186, %v3182
    %v3363 = vpack.c.b16 %v3191, %v3187
    %v3364 = vpack.c.b16 %v3192, %v3188
    %v3365 = vpack.c.b16 %v3193, %v3189
    %v3366 = vpack.c.b16 %v3194, %v3190
    %v3367 = vpack.c.b16 %v3199, %v3195
    %v3368 = vpack.c.b16 %v3200, %v3196
    %v3369 = vpack.c.b16 %v3201, %v3197
    %v3370 = vpack.c.b16 %v3202, %v3198
    %v3371 = vpack.c.b16 %v3207, %v3203
    %v3372 = vpack.c.b16 %v3208, %v3204
    %v3373 = vpack.c.b16 %v3209, %v3205
    %v3374 = vpack.c.b16 %v3210, %v3206
    %v3375 = vpack.c.b16 %v3215, %v3211
    %v3376 = vpack.c.b16 %v3216, %v3212
    %v3377 = vpack.c.b16 %v3217, %v3213
    %v3378 = vpack.c.b16 %v3218, %v3214
    %v3379 = vpack.c.b16 %v3223, %v3219
    %v3380 = vpack.c.b16 %v3224, %v3220
    %v3381 = vpack.c.b16 %v3225, %v3221
    %v3382 = vpack.c.b16 %v3226, %v3222
    %v3383 = vpack.c.b16 %v3231, %v3227
    %v3384 = vpack.c.b16 %v3232, %v3228
    %v3385 = vpack.c.b16 %v3233, %v3229
    %v3386 = vpack.c.b16 %v3234, %v3230
    %v3387 = vpack.c.b16 %v3239, %v3235
    %v3388 = vpack.c.b16 %v3240, %v3236
    %v3389 = vpack.c.b16 %v3241, %v3237
    %v3390 = vpack.c.b16 %v3242, %v3238
    %v3391 = vpack.c.b16 %v3247, %v3243
    %v3392 = vpack.c.b16 %v3248, %v3244
    %v3393 = vpack.c.b16 %v3249, %v3245
    %v3394 = vpack.c.b16 %v3250, %v3246
    %v3395 = vpack.c.b16 %v3255, %v3251
    %v3396 = vpack.c.b16 %v3256, %v3252
    %v3397 = vpack.c.b16 %v3257, %v3253
    %v3398 = vpack.c.b16 %v3258, %v3254
    %v3399 = vpack.c.b16 %v3263, %v3259
    %v3400 = vpack.c.b16 %v3264, %v3260
    %v3401 = vpack.c.b16 %v3265, %v3261
    %v3402 = vpack.c.b16 %v3266, %v3262
    %v3403 = vpack.c.b16 %v3271, %v3267
    %v3404 = vpack.c.b16 %v3272, %v3268
    %v3405 = vpack.c.b16 %v3273, %v3269
    %v3406 = vpack.c.b16 %v3274, %v3270
    %v3407 = vpack.c.b16 %v3279, %v3275
    %v3408 = vpack.c.b16 %v3280, %v3276
    %v3409 = vpack.c.b16 %v3281, %v3277
    %v3410 = vpack.c.b16 %v3282, %v3278
    %v3411 = vpack.c.b16 %v3287, %v3283
    %v3412 = vpack.c.b16 %v3288, %v3284
    %v3413 = vpack.c.b16 %v3289, %v3285
    %v3414 = vpack.c.b16 %v3290, %v3286
    %v3415 = vpack.c.b16 %v3295, %v3291
    %v3416 = vpack.c.b16 %v3296, %v3292
    %v3417 = vpack.c.b16 %v3297, %v3293
    %v3418 = vpack.c.b16 %v3298, %v3294
    %v3419 = vpack.c.b16 %v3303, %v3299
    %v3420 = vpack.c.b16 %v3304, %v3300
    %v3421 = vpack.c.b16 %v3305, %v3301
    %v3422 = vpack.c.b16 %v3306, %v3302
    %v3423 = vpack.c.b16 %v3311, %v3307
    %v3424 = vpack.c.b16 %v3312, %v3308
    %v3425 = vpack.c.b16 %v3313, %v3309
    %v3426 = vpack.c.b16 %v3314, %v3310
    %v3427 = vpack.c.b16 %v3319, %v3315
    %v3428 = vpack.c.b16 %v3320, %v3316
    %v3429 = vpack.c.b16 %v3321, %v3317
    %v3430 = vpack.c.b16 %v3322, %v3318
    %v3431 = vpack.c.b16 %v3327, %v3323
    %v3432 = vpack.c.b16 %v3328, %v3324
    %v3433 = vpack.c.b16 %v3329, %v3325
    %v3434 = vpack.c.b16 %v3330, %v3326
    %v3435 = vpack.c.b16 %v3335, %v3331
    %v3436 = vpack.c.b16 %v3336, %v3332
    %v3437 = vpack.c.b16 %v3337, %v3333
    %v3438 = vpack.c.b16 %v3338, %v3334
    %v3540 = vsel %vm1368, %v2916, 0
    %3542 = vmatprep.subr.bf16.mxu0 %v3340
    %3543 = vmatpush1.bf16.msra.mxu0 %v3339
    %3544 = vmatprep.subr.bf16.mxu0 %v3344
    %3545 = vmatpush1.bf16.msra.mxu0 %v3343
    %3546 = vmatprep.subr.bf16.mxu0 %v3348
    %3547 = vmatpush1.bf16.msra.mxu0 %v3347
    %3548 = vmatprep.subr.bf16.mxu0 %v3352
    %3549 = vmatpush1.bf16.msra.mxu0 %v3351
    %3550 = vmatprep.subr.bf16.mxu0 %v3356
    %3551 = vmatpush1.bf16.msra.mxu0 %v3355
    %3552 = vmatprep.subr.bf16.mxu0 %v3360
    %3553 = vmatpush1.bf16.msra.mxu0 %v3359
    %3554 = vmatprep.subr.bf16.mxu0 %v3364
    %3555 = vmatpush1.bf16.msra.mxu0 %v3363
    %3556 = vmatprep.subr.bf16.mxu0 %v3368
    %3557 = vmatpush1.bf16.msra.mxu0 %v3367
    %3558 = vmatprep.subr.bf16.mxu0 %v3372
    %3559 = vmatpush1.bf16.msra.mxu0 %v3371
    %3560 = vmatprep.subr.bf16.mxu0 %v3376
    %3561 = vmatpush1.bf16.msra.mxu0 %v3375
    %3562 = vmatprep.subr.bf16.mxu0 %v3380
    %3563 = vmatpush1.bf16.msra.mxu0 %v3379
    %3564 = vmatprep.subr.bf16.mxu0 %v3384
    %3565 = vmatpush1.bf16.msra.mxu0 %v3383
    %3566 = vmatprep.subr.bf16.mxu0 %v3388
    %3567 = vmatpush1.bf16.msra.mxu0 %v3387
    %3568 = vmatprep.subr.bf16.mxu0 %v3392
    %3569 = vmatpush1.bf16.msra.mxu0 %v3391
    %3570 = vmatprep.subr.bf16.mxu0 %v3396
    %3571 = vmatpush1.bf16.msra.mxu0 %v3395
    %3572 = vmatprep.subr.bf16.mxu0 %v3400
    %3573 = vmatpush1.bf16.msra.mxu0 %v3399
    %3574 = vmatprep.mubr.bf16.mxu0 %v2914
    %3575 = vmatmul.mubr.bf16.gmra.mrb[0].mxu0 %v2913
    %v3576 = vpop.f32.mrb[0].mxu0
    %v3577 = vadd.f32 %v3022, %v3576
    %v3578 = vpop.f32.mrb[0].mxu0
    %v3579 = vadd.f32 %v3026, %v3578
    %v3580 = vpop.f32.mrb[0].mxu0
    %v3581 = vpop.f32.mrb[0].mxu0
    %3582 = vdwg.mxu0
    %3583 = vmatprep.subr.bf16.mxu0 %v3404
    %3584 = vmatpush1.bf16.msra.mxu0 %v3403
    %3585 = vmatprep.subr.bf16.mxu0 %v3408
    %3586 = vmatpush1.bf16.msra.mxu0 %v3407
    %3587 = vmatprep.subr.bf16.mxu0 %v3412
    %3588 = vmatpush1.bf16.msra.mxu0 %v3411
    %3589 = vmatprep.subr.bf16.mxu0 %v3416
    %3590 = vmatpush1.bf16.msra.mxu0 %v3415
    %3591 = vmatprep.subr.bf16.mxu0 %v3420
    %3592 = vmatpush1.bf16.msra.mxu0 %v3419
    %3593 = vmatprep.subr.bf16.mxu0 %v3424
    %3594 = vmatpush1.bf16.msra.mxu0 %v3423
    %3595 = vmatprep.subr.bf16.mxu0 %v3428
    %3596 = vmatpush1.bf16.msra.mxu0 %v3427
    %3597 = vmatprep.subr.bf16.mxu0 %v3432
    %3598 = vmatpush1.bf16.msra.mxu0 %v3431
    %3599 = vmatprep.subr.bf16.mxu0 %v3436
    %3600 = vmatpush1.bf16.msra.mxu0 %v3435
    %3601 = vmatprep.subr.bf16.mxu0 0
    %3602 = vmatpush1.bf16.msra.mxu0 0
    %3603 = vmatprep.subr.bf16.mxu0 0
    %3604 = vmatpush1.bf16.msra.mxu0 0
    %3605 = vmatprep.subr.bf16.mxu0 0
    %3606 = vmatpush1.bf16.msra.mxu0 0
    %3607 = vmatprep.subr.bf16.mxu0 0
    %3608 = vmatpush1.bf16.msra.mxu0 0
    %3609 = vmatprep.subr.bf16.mxu0 0
    %3610 = vmatpush1.bf16.msra.mxu0 0
    %3611 = vmatprep.subr.bf16.mxu0 0
    %3612 = vmatpush1.bf16.msra.mxu0 0
    %3613 = vmatprep.subr.bf16.mxu0 0
    %3614 = vmatpush1.bf16.msra.mxu0 0
    %3615 = vmatprep.mubr.bf16.mxu0 %v3540
    %3616 = vmatmul.mubr.bf16.gmra.mrb[0].mxu0 %v2915
    %v3617 = vpop.f32.mrb[0].mxu0
    %v3618 = vadd.f32 %v3577, %v3617
    %v3619 = vpop.f32.mrb[0].mxu0
    %v3620 = vadd.f32 %v3579, %v3619
    %v3621 = vpop.f32.mrb[0].mxu0
    %v3622 = vpop.f32.mrb[0].mxu0
    %3623 = vdwg.mxu0
    %3624 = vmatprep.subr.bf16.mxu0 %v3342
    %3625 = vmatpush1.bf16.msra.mxu0 %v3341
    %3626 = vmatprep.subr.bf16.mxu0 %v3346
    %3627 = vmatpush1.bf16.msra.mxu0 %v3345
    %3628 = vmatprep.subr.bf16.mxu0 %v3350
    %3629 = vmatpush1.bf16.msra.mxu0 %v3349
    %3630 = vmatprep.subr.bf16.mxu0 %v3354
    %3631 = vmatpush1.bf16.msra.mxu0 %v3353
    %3632 = vmatprep.subr.bf16.mxu0 %v3358
    %3633 = vmatpush1.bf16.msra.mxu0 %v3357
    %3634 = vmatprep.subr.bf16.mxu0 %v3362
    %3635 = vmatpush1.bf16.msra.mxu0 %v3361
    %3636 = vmatprep.subr.bf16.mxu0 %v3366
    %3637 = vmatpush1.bf16.msra.mxu0 %v3365
    %3638 = vmatprep.subr.bf16.mxu0 %v3370
    %3639 = vmatpush1.bf16.msra.mxu0 %v3369
    %3640 = vmatprep.subr.bf16.mxu0 %v3374
    %3641 = vmatpush1.bf16.msra.mxu0 %v3373
    %3642 = vmatprep.subr.bf16.mxu0 %v3378
    %3643 = vmatpush1.bf16.msra.mxu0 %v3377
    %3644 = vmatprep.subr.bf16.mxu0 %v3382
    %3645 = vmatpush1.bf16.msra.mxu0 %v3381
    %3646 = vmatprep.subr.bf16.mxu0 %v3386
    %3647 = vmatpush1.bf16.msra.mxu0 %v3385
    %3648 = vmatprep.subr.bf16.mxu0 %v3390
    %3649 = vmatpush1.bf16.msra.mxu0 %v3389
    %3650 = vmatprep.subr.bf16.mxu0 %v3394
    %3651 = vmatpush1.bf16.msra.mxu0 %v3393
    %3652 = vmatprep.subr.bf16.mxu0 %v3398
    %3653 = vmatpush1.bf16.msra.mxu0 %v3397
    %3654 = vmatprep.subr.bf16.mxu0 %v3402
    %3655 = vmatpush1.bf16.msra.mxu0 %v3401
    %3656 = vmatprep.mubr.bf16.mxu0 %v2914
    %3657 = vmatmul.mubr.bf16.gmra.mrb[0].mxu0 %v2913
    %v3658 = vpop.f32.mrb[0].mxu0
    %v3659 = vadd.f32 %v3030, %v3658
    %v3660 = vpop.f32.mrb[0].mxu0
    %v3661 = vadd.f32 %v3034, %v3660
    %v3662 = vpop.f32.mrb[0].mxu0
    %v3663 = vpop.f32.mrb[0].mxu0
    %3664 = vdwg.mxu0
    %3665 = vmatprep.subr.bf16.mxu0 %v3406
    %3666 = vmatpush1.bf16.msra.mxu0 %v3405
    %3667 = vmatprep.subr.bf16.mxu0 %v3410
    %3668 = vmatpush1.bf16.msra.mxu0 %v3409
    %3669 = vmatprep.subr.bf16.mxu0 %v3414
    %3670 = vmatpush1.bf16.msra.mxu0 %v3413
    %3671 = vmatprep.subr.bf16.mxu0 %v3418
    %3672 = vmatpush1.bf16.msra.mxu0 %v3417
    %3673 = vmatprep.subr.bf16.mxu0 %v3422
    %3674 = vmatpush1.bf16.msra.mxu0 %v3421
    %3675 = vmatprep.subr.bf16.mxu0 %v3426
    %3676 = vmatpush1.bf16.msra.mxu0 %v3425
    %3677 = vmatprep.subr.bf16.mxu0 %v3430
    %3678 = vmatpush1.bf16.msra.mxu0 %v3429
    %3679 = vmatprep.subr.bf16.mxu0 %v3434
    %3680 = vmatpush1.bf16.msra.mxu0 %v3433
    %3681 = vmatprep.subr.bf16.mxu0 %v3438
    %3682 = vmatpush1.bf16.msra.mxu0 %v3437
    %3683 = vmatprep.subr.bf16.mxu0 0
    %3684 = vmatpush1.bf16.msra.mxu0 0
    %3685 = vmatprep.subr.bf16.mxu0 0
    %3686 = vmatpush1.bf16.msra.mxu0 0
    %3687 = vmatprep.subr.bf16.mxu0 0
    %3688 = vmatpush1.bf16.msra.mxu0 0
    %3689 = vmatprep.subr.bf16.mxu0 0
    %3690 = vmatpush1.bf16.msra.mxu0 0
    %3691 = vmatprep.subr.bf16.mxu0 0
    %3692 = vmatpush1.bf16.msra.mxu0 0
    %3693 = vmatprep.subr.bf16.mxu0 0
    %3694 = vmatpush1.bf16.msra.mxu0 0
    %3695 = vmatprep.subr.bf16.mxu0 0
    %3696 = vmatpush1.bf16.msra.mxu0 0
    %3697 = vmatprep.mubr.bf16.mxu0 %v3540
    %3698 = vmatmul.mubr.bf16.gmra.mrb[0].mxu0 %v2915
    %v3699 = vpop.f32.mrb[0].mxu0
    %v3700 = vadd.f32 %v3659, %v3699
    %v3701 = vpop.f32.mrb[0].mxu0
    %v3702 = vadd.f32 %v3661, %v3701
    %v3703 = vpop.f32.mrb[0].mxu0
    %v3704 = vpop.f32.mrb[0].mxu0
    %3705 = vdwg.mxu0
    %v3706 = vmax.f32 %v3618, 0.0
    %v3707 = vmax.f32 %v3620, 0.0
    %v3708 = vmax.f32 %v3700, 0.0
    %v3709 = vmax.f32 %v3702, 0.0
    %v3710 = vpack.c.bf16 %v3706, %v3706
    %v3711 = vpack.c.bf16 %v3707, %v3707
    %v3712 = vpack.c.bf16 %v3708, %v3708
    %v3713 = vpack.c.bf16 %v3709, %v3709
    %v3714 = vld [vmem:[%s14] sm:$0xff]
    %v3715 = vld [vmem:[%s14 + $0x8] sm:$0xff]
    %v3716 = vld [vmem:[%s14 + $0x10] sm:$0xff]
    %v3717 = vld [vmem:[%s14 + $0x18] sm:$0xf]
    %v3718 = vld [vmem:[%s14 + $0x1c] sm:$0xff]
    %v3719 = vld [vmem:[%s14 + $0x24] sm:$0xff]
    %v3720 = vld [vmem:[%s14 + $0x2c] sm:$0xff]
    %v3721 = vld [vmem:[%s14 + $0x34] sm:$0xf]
    %v3722 = vld [vmem:[%s14 + $0x38] sm:$0xff]
    %v3723 = vld [vmem:[%s14 + $0x40] sm:$0xff]
    %v3724 = vld [vmem:[%s14 + $0x48] sm:$0xff]
    %v3725 = vld [vmem:[%s14 + $0x50] sm:$0xf]
    %v3726 = vld [vmem:[%s14 + $0x54] sm:$0xff]
    %v3727 = vld [vmem:[%s14 + $0x5c] sm:$0xff]
    %v3728 = vld [vmem:[%s14 + $0x64] sm:$0xff]
    %v3729 = vld [vmem:[%s14 + $0x6c] sm:$0xf]
    %v3730 = vld [vmem:[%s14 + $0x70] sm:$0xff]
    %v3731 = vld [vmem:[%s14 + $0x78] sm:$0xff]
    %v3732 = vld [vmem:[%s14 + $0x80] sm:$0xff]
    %v3733 = vld [vmem:[%s14 + $0x88] sm:$0xf]
    %v3734 = vld [vmem:[%s14 + $0x8c] sm:$0xff]
    %v3735 = vld [vmem:[%s14 + $0x94] sm:$0xff]
    %v3736 = vld [vmem:[%s14 + $0x9c] sm:$0xff]
    %v3737 = vld [vmem:[%s14 + $0xa4] sm:$0xf]
    %v3738 = vld [vmem:[%s14 + $0xa8] sm:$0xff]
    %v3739 = vld [vmem:[%s14 + $0xb0] sm:$0xff]
    %v3740 = vld [vmem:[%s14 + $0xb8] sm:$0xff]
    %v3741 = vld [vmem:[%s14 + $0xc0] sm:$0xf]
    %v3742 = vld [vmem:[%s14 + $0xc4] sm:$0xff]
    %v3743 = vld [vmem:[%s14 + $0xcc] sm:$0xff]
    %v3744 = vld [vmem:[%s14 + $0xd4] sm:$0xff]
    %v3745 = vld [vmem:[%s14 + $0xdc] sm:$0xf]
    %v3746 = vld [vmem:[%s14 + $0xe0] sm:$0xff]
    %v3747 = vld [vmem:[%s14 + $0xe8] sm:$0xff]
    %v3748 = vld [vmem:[%s14 + $0xf0] sm:$0xff]
    %v3749 = vld [vmem:[%s14 + $0xf8] sm:$0xf]
    %v3750 = vld [vmem:[%s14 + $0xfc] sm:$0xff]
    %v3751 = vld [vmem:[%s14 + $0x104] sm:$0xff]
    %v3752 = vld [vmem:[%s14 + $0x10c] sm:$0xff]
    %v3753 = vld [vmem:[%s14 + $0x114] sm:$0xf]
    %v3754 = vld [vmem:[%s14 + $0x118] sm:$0xff]
    %v3755 = vld [vmem:[%s14 + $0x120] sm:$0xff]
    %v3756 = vld [vmem:[%s14 + $0x128] sm:$0xff]
    %v3757 = vld [vmem:[%s14 + $0x130] sm:$0xf]
    %v3758 = vld [vmem:[%s14 + $0x134] sm:$0xff]
    %v3759 = vld [vmem:[%s14 + $0x13c] sm:$0xff]
    %v3760 = vld [vmem:[%s14 + $0x144] sm:$0xff]
    %v3761 = vld [vmem:[%s14 + $0x14c] sm:$0xf]
    %v3762 = vld [vmem:[%s14 + $0x150] sm:$0xff]
    %v3763 = vld [vmem:[%s14 + $0x158] sm:$0xff]
    %v3764 = vld [vmem:[%s14 + $0x160] sm:$0xff]
    %v3765 = vld [vmem:[%s14 + $0x168] sm:$0xf]
    %v3766 = vld [vmem:[%s14 + $0x16c] sm:$0xff]
    %v3767 = vld [vmem:[%s14 + $0x174] sm:$0xff]
    %v3768 = vld [vmem:[%s14 + $0x17c] sm:$0xff]
    %v3769 = vld [vmem:[%s14 + $0x184] sm:$0xf]
    %v3770 = vld [vmem:[%s14 + $0x188] sm:$0xff]
    %v3771 = vld [vmem:[%s14 + $0x190] sm:$0xff]
    %v3772 = vld [vmem:[%s14 + $0x198] sm:$0xff]
    %v3773 = vld [vmem:[%s14 + $0x1a0] sm:$0xf]
    %v3774 = vld [vmem:[%s14 + $0x1a4] sm:$0xff]
    %v3775 = vld [vmem:[%s14 + $0x1ac] sm:$0xff]
    %v3776 = vld [vmem:[%s14 + $0x1b4] sm:$0xff]
    %v3777 = vld [vmem:[%s14 + $0x1bc] sm:$0xf]
    %v3778 = vld [vmem:[%s14 + $0x1c0] sm:$0xff]
    %v3779 = vld [vmem:[%s14 + $0x1c8] sm:$0xff]
    %v3780 = vld [vmem:[%s14 + $0x1d0] sm:$0xff]
    %v3781 = vld [vmem:[%s14 + $0x1d8] sm:$0xf]
    %v3782 = vld [vmem:[%s14 + $0x1dc] sm:$0xff]
    %v3783 = vld [vmem:[%s14 + $0x1e4] sm:$0xff]
    %v3784 = vld [vmem:[%s14 + $0x1ec] sm:$0xff]
    %v3785 = vld [vmem:[%s14 + $0x1f4] sm:$0xf]
    %v3786 = vld [vmem:[%s14 + $0x1f8] sm:$0xff]
    %v3787 = vld [vmem:[%s14 + $0x200] sm:$0xff]
    %v3788 = vld [vmem:[%s14 + $0x208] sm:$0xff]
    %v3789 = vld [vmem:[%s14 + $0x210] sm:$0xf]
    %v3790 = vld [vmem:[%s14 + $0x214] sm:$0xff]
    %v3791 = vld [vmem:[%s14 + $0x21c] sm:$0xff]
    %v3792 = vld [vmem:[%s14 + $0x224] sm:$0xff]
    %v3793 = vld [vmem:[%s14 + $0x22c] sm:$0xf]
    %v3794 = vld [vmem:[%s14 + $0x230] sm:$0xff]
    %v3795 = vld [vmem:[%s14 + $0x238] sm:$0xff]
    %v3796 = vld [vmem:[%s14 + $0x240] sm:$0xff]
    %v3797 = vld [vmem:[%s14 + $0x248] sm:$0xf]
    %v3798 = vld [vmem:[%s14 + $0x24c] sm:$0xff]
    %v3799 = vld [vmem:[%s14 + $0x254] sm:$0xff]
    %v3800 = vld [vmem:[%s14 + $0x25c] sm:$0xff]
    %v3801 = vld [vmem:[%s14 + $0x264] sm:$0xf]
    %v3802 = vld [vmem:[%s14 + $0x268] sm:$0xff]
    %v3803 = vld [vmem:[%s14 + $0x270] sm:$0xff]
    %v3804 = vld [vmem:[%s14 + $0x278] sm:$0xff]
    %v3805 = vld [vmem:[%s14 + $0x280] sm:$0xf]
    %v3806 = vld [vmem:[%s14 + $0x284] sm:$0xff]
    %v3807 = vld [vmem:[%s14 + $0x28c] sm:$0xff]
    %v3808 = vld [vmem:[%s14 + $0x294] sm:$0xff]
    %v3809 = vld [vmem:[%s14 + $0x29c] sm:$0xf]
    %v3810 = vld [vmem:[%s14 + $0x2a0] sm:$0xff]
    %v3811 = vld [vmem:[%s14 + $0x2a8] sm:$0xff]
    %v3812 = vld [vmem:[%s14 + $0x2b0] sm:$0xff]
    %v3813 = vld [vmem:[%s14 + $0x2b8] sm:$0xf]
    %v3814 = vld [vmem:[%s14 + $0x2bc] sm:$0xff]
    %v3815 = vld [vmem:[%s14 + $0x2c4] sm:$0xff]
    %v3816 = vld [vmem:[%s14 + $0x2cc] sm:$0xff]
    %v3817 = vld [vmem:[%s14 + $0x2d4] sm:$0xf]
    %v3818 = vld [vmem:[%s14 + $0x2d8] sm:$0xff]
    %v3819 = vld [vmem:[%s14 + $0x2e0] sm:$0xff]
    %v3820 = vld [vmem:[%s14 + $0x2e8] sm:$0xff]
    %v3821 = vld [vmem:[%s14 + $0x2f0] sm:$0xf]
    %v3822 = vld [vmem:[%s14 + $0x2f4] sm:$0xff]
    %v3823 = vld [vmem:[%s14 + $0x2fc] sm:$0xff]
    %v3824 = vld [vmem:[%s14 + $0x304] sm:$0xff]
    %v3825 = vld [vmem:[%s14 + $0x30c] sm:$0xf]
    %v3826 = vld [vmem:[%s14 + $0x310] sm:$0xff]
    %v3827 = vld [vmem:[%s14 + $0x318] sm:$0xff]
    %v3828 = vld [vmem:[%s14 + $0x320] sm:$0xff]
    %v3829 = vld [vmem:[%s14 + $0x328] sm:$0xf]
    %v3830 = vld [vmem:[%s14 + $0x32c] sm:$0xff]
    %v3831 = vld [vmem:[%s14 + $0x334] sm:$0xff]
    %v3832 = vld [vmem:[%s14 + $0x33c] sm:$0xff]
    %v3833 = vld [vmem:[%s14 + $0x344] sm:$0xf]
    %v3834 = vld [vmem:[%s14 + $0x348] sm:$0xff]
    %v3835 = vld [vmem:[%s14 + $0x350] sm:$0xff]
    %v3836 = vld [vmem:[%s14 + $0x358] sm:$0xff]
    %v3837 = vld [vmem:[%s14 + $0x360] sm:$0xf]
    %v3838 = vld [vmem:[%s14 + $0x364] sm:$0xff]
    %v3839 = vld [vmem:[%s14 + $0x36c] sm:$0xff]
    %v3840 = vld [vmem:[%s14 + $0x374] sm:$0xff]
    %v3841 = vld [vmem:[%s14 + $0x37c] sm:$0xf]
    %v3842 = vld [vmem:[%s14 + $0x380] sm:$0xff]
    %v3843 = vld [vmem:[%s14 + $0x388] sm:$0xff]
    %v3844 = vld [vmem:[%s14 + $0x390] sm:$0xff]
    %v3845 = vld [vmem:[%s14 + $0x398] sm:$0xf]
    %v3846 = vld [vmem:[%s14 + $0x39c] sm:$0xff]
    %v3847 = vld [vmem:[%s14 + $0x3a4] sm:$0xff]
    %v3848 = vld [vmem:[%s14 + $0x3ac] sm:$0xff]
    %v3849 = vld [vmem:[%s14 + $0x3b4] sm:$0xf]
    %v3850 = vld [vmem:[%s14 + $0x3b8] sm:$0xff]
    %v3851 = vld [vmem:[%s14 + $0x3c0] sm:$0xff]
    %v3852 = vld [vmem:[%s14 + $0x3c8] sm:$0xff]
    %v3853 = vld [vmem:[%s14 + $0x3d0] sm:$0xf]
    %v3854 = vld [vmem:[%s14 + $0x3d4] sm:$0xff]
    %v3855 = vld [vmem:[%s14 + $0x3dc] sm:$0xff]
    %v3856 = vld [vmem:[%s14 + $0x3e4] sm:$0xff]
    %v3857 = vld [vmem:[%s14 + $0x3ec] sm:$0xf]
    %v3858 = vld [vmem:[%s14 + $0x3f0] sm:$0xff]
    %v3859 = vld [vmem:[%s14 + $0x3f8] sm:$0xff]
    %v3860 = vld [vmem:[%s14 + $0x400] sm:$0xff]
    %v3861 = vld [vmem:[%s14 + $0x408] sm:$0xf]
    %v3862 = vld [vmem:[%s14 + $0x40c] sm:$0xff]
    %v3863 = vld [vmem:[%s14 + $0x414] sm:$0xff]
    %v3864 = vld [vmem:[%s14 + $0x41c] sm:$0xff]
    %v3865 = vld [vmem:[%s14 + $0x424] sm:$0xf]
    %v3866 = vld [vmem:[%s14 + $0x428] sm:$0xff]
    %v3867 = vld [vmem:[%s14 + $0x430] sm:$0xff]
    %v3868 = vld [vmem:[%s14 + $0x438] sm:$0xff]
    %v3869 = vld [vmem:[%s14 + $0x440] sm:$0xf]
    %v3870 = vld [vmem:[%s14 + $0x444] sm:$0xff]
    %v3871 = vld [vmem:[%s14 + $0x44c] sm:$0xff]
    %v3872 = vld [vmem:[%s14 + $0x454] sm:$0xff]
    %v3873 = vld [vmem:[%s14 + $0x45c] sm:$0xf]
    %v3874 = vld [vmem:[%s14 + $0x460] sm:$0xff]
    %v3875 = vld [vmem:[%s14 + $0x468] sm:$0xff]
    %v3876 = vld [vmem:[%s14 + $0x470] sm:$0xff]
    %v3877 = vld [vmem:[%s14 + $0x478] sm:$0xf]
    %v3878 = vld [vmem:[%s14 + $0x47c] sm:$0xff]
    %v3879 = vld [vmem:[%s14 + $0x484] sm:$0xff]
    %v3880 = vld [vmem:[%s14 + $0x48c] sm:$0xff]
    %v3881 = vld [vmem:[%s14 + $0x494] sm:$0xf]
    %v3882 = vld [vmem:[%s14 + $0x498] sm:$0xff]
    %v3883 = vld [vmem:[%s14 + $0x4a0] sm:$0xff]
    %v3884 = vld [vmem:[%s14 + $0x4a8] sm:$0xff]
    %v3885 = vld [vmem:[%s14 + $0x4b0] sm:$0xf]
    %v3886 = vld [vmem:[%s14 + $0x4b4] sm:$0xff]
    %v3887 = vld [vmem:[%s14 + $0x4bc] sm:$0xff]
    %v3888 = vld [vmem:[%s14 + $0x4c4] sm:$0xff]
    %v3889 = vld [vmem:[%s14 + $0x4cc] sm:$0xf]
    %v3890 = vld [vmem:[%s14 + $0x4d0] sm:$0xff]
    %v3891 = vld [vmem:[%s14 + $0x4d8] sm:$0xff]
    %v3892 = vld [vmem:[%s14 + $0x4e0] sm:$0xff]
    %v3893 = vld [vmem:[%s14 + $0x4e8] sm:$0xf]
    %v3894 = vld [vmem:[%s14 + $0x4ec] sm:$0xff]
    %v3895 = vld [vmem:[%s14 + $0x4f4] sm:$0xff]
    %v3896 = vld [vmem:[%s14 + $0x4fc] sm:$0xff]
    %v3897 = vld [vmem:[%s14 + $0x504] sm:$0xf]
    %v3898 = vld [vmem:[%s14 + $0x508] sm:$0xff]
    %v3899 = vld [vmem:[%s14 + $0x510] sm:$0xff]
    %v3900 = vld [vmem:[%s14 + $0x518] sm:$0xff]
    %v3901 = vld [vmem:[%s14 + $0x520] sm:$0xf]
    %v3902 = vld [vmem:[%s14 + $0x524] sm:$0xff]
    %v3903 = vld [vmem:[%s14 + $0x52c] sm:$0xff]
    %v3904 = vld [vmem:[%s14 + $0x534] sm:$0xff]
    %v3905 = vld [vmem:[%s14 + $0x53c] sm:$0xf]
    %v3906 = vld [vmem:[%s14 + $0x540] sm:$0xff]
    %v3907 = vld [vmem:[%s14 + $0x548] sm:$0xff]
    %v3908 = vld [vmem:[%s14 + $0x550] sm:$0xff]
    %v3909 = vld [vmem:[%s14 + $0x558] sm:$0xf]
    %v3910 = vld [vmem:[%s14 + $0x55c] sm:$0xff]
    %v3911 = vld [vmem:[%s14 + $0x564] sm:$0xff]
    %v3912 = vld [vmem:[%s14 + $0x56c] sm:$0xff]
    %v3913 = vld [vmem:[%s14 + $0x574] sm:$0xf]
    %v3914 = vld [vmem:[%s15] sm:$0x7f]
    %v3916 = vlaneseq
    %v3917 = vshrl.u32 %v3916, 7
    %v3918 = vsub.s32 0, %v3917
    %v3919 = vrot.slane %v3914, %v3918
    %v3920 = vlaneseq
    %v3921 = vshrl.u32 %v3920, 7
    %v3922 = vsub.s32 1, %v3921
    %v3923 = vrot.slane %v3914, %v3922
    %v3924 = vlaneseq
    %v3925 = vshrl.u32 %v3924, 7
    %v3926 = vsub.s32 2, %v3925
    %v3927 = vrot.slane %v3914, %v3926
    %v3928 = vlaneseq
    %v3929 = vshrl.u32 %v3928, 7
    %v3930 = vsub.s32 3, %v3929
    %v3931 = vrot.slane %v3914, %v3930
    %v3932 = vlaneseq
    %v3933 = vshrl.u32 %v3932, 7
    %v3934 = vsub.s32 4, %v3933
    %v3935 = vrot.slane %v3914, %v3934
    %v3936 = vlaneseq
    %v3937 = vshrl.u32 %v3936, 7
    %v3938 = vsub.s32 5, %v3937
    %v3939 = vrot.slane %v3914, %v3938
    %v3940 = vlaneseq
    %v3941 = vshrl.u32 %v3940, 7
    %v3942 = vsub.s32 6, %v3941
    %v3943 = vrot.slane %v3914, %v3942
    %v4151 = vunpack.c.l.b16 %v3714
    %v4152 = vunpack.c.h.b16 %v3714
    %v4153 = vunpack.c.l.b16 %v3715
    %v4154 = vunpack.c.h.b16 %v3715
    %v4155 = vunpack.c.l.b16 %v3716
    %v4156 = vunpack.c.h.b16 %v3716
    %v4157 = vunpack.c.l.b16 %v3717
    %v4158 = vunpack.c.l.b16 %v3718
    %v4159 = vunpack.c.h.b16 %v3718
    %v4160 = vunpack.c.l.b16 %v3719
    %v4161 = vunpack.c.h.b16 %v3719
    %v4162 = vunpack.c.l.b16 %v3720
    %v4163 = vunpack.c.h.b16 %v3720
    %v4164 = vunpack.c.l.b16 %v3721
    %v4165 = vunpack.c.l.b16 %v3722
    %v4166 = vunpack.c.h.b16 %v3722
    %v4167 = vunpack.c.l.b16 %v3723
    %v4168 = vunpack.c.h.b16 %v3723
    %v4169 = vunpack.c.l.b16 %v3724
    %v4170 = vunpack.c.h.b16 %v3724
    %v4171 = vunpack.c.l.b16 %v3725
    %v4172 = vunpack.c.l.b16 %v3726
    %v4173 = vunpack.c.h.b16 %v3726
    %v4174 = vunpack.c.l.b16 %v3727
    %v4175 = vunpack.c.h.b16 %v3727
    %v4176 = vunpack.c.l.b16 %v3728
    %v4177 = vunpack.c.h.b16 %v3728
    %v4178 = vunpack.c.l.b16 %v3729
    %v4179 = vunpack.c.l.b16 %v3730
    %v4180 = vunpack.c.h.b16 %v3730
    %v4181 = vunpack.c.l.b16 %v3731
    %v4182 = vunpack.c.h.b16 %v3731
    %v4183 = vunpack.c.l.b16 %v3732
    %v4184 = vunpack.c.h.b16 %v3732
    %v4185 = vunpack.c.l.b16 %v3733
    %v4186 = vunpack.c.l.b16 %v3734
    %v4187 = vunpack.c.h.b16 %v3734
    %v4188 = vunpack.c.l.b16 %v3735
    %v4189 = vunpack.c.h.b16 %v3735
    %v4190 = vunpack.c.l.b16 %v3736
    %v4191 = vunpack.c.h.b16 %v3736
    %v4192 = vunpack.c.l.b16 %v3737
    %v4193 = vunpack.c.l.b16 %v3738
    %v4194 = vunpack.c.h.b16 %v3738
    %v4195 = vunpack.c.l.b16 %v3739
    %v4196 = vunpack.c.h.b16 %v3739
    %v4197 = vunpack.c.l.b16 %v3740
    %v4198 = vunpack.c.h.b16 %v3740
    %v4199 = vunpack.c.l.b16 %v3741
    %v4200 = vunpack.c.l.b16 %v3742
    %v4201 = vunpack.c.h.b16 %v3742
    %v4202 = vunpack.c.l.b16 %v3743
    %v4203 = vunpack.c.h.b16 %v3743
    %v4204 = vunpack.c.l.b16 %v3744
    %v4205 = vunpack.c.h.b16 %v3744
    %v4206 = vunpack.c.l.b16 %v3745
    %v4207 = vunpack.c.l.b16 %v3746
    %v4208 = vunpack.c.h.b16 %v3746
    %v4209 = vunpack.c.l.b16 %v3747
    %v4210 = vunpack.c.h.b16 %v3747
    %v4211 = vunpack.c.l.b16 %v3748
    %v4212 = vunpack.c.h.b16 %v3748
    %v4213 = vunpack.c.l.b16 %v3749
    %v4214 = vunpack.c.l.b16 %v3750
    %v4215 = vunpack.c.h.b16 %v3750
    %v4216 = vunpack.c.l.b16 %v3751
    %v4217 = vunpack.c.h.b16 %v3751
    %v4218 = vunpack.c.l.b16 %v3752
    %v4219 = vunpack.c.h.b16 %v3752
    %v4220 = vunpack.c.l.b16 %v3753
    %v4221 = vunpack.c.l.b16 %v3754
    %v4222 = vunpack.c.h.b16 %v3754
    %v4223 = vunpack.c.l.b16 %v3755
    %v4224 = vunpack.c.h.b16 %v3755
    %v4225 = vunpack.c.l.b16 %v3756
    %v4226 = vunpack.c.h.b16 %v3756
    %v4227 = vunpack.c.l.b16 %v3757
    %v4228 = vunpack.c.l.b16 %v3758
    %v4229 = vunpack.c.h.b16 %v3758
    %v4230 = vunpack.c.l.b16 %v3759
    %v4231 = vunpack.c.h.b16 %v3759
    %v4232 = vunpack.c.l.b16 %v3760
    %v4233 = vunpack.c.h.b16 %v3760
    %v4234 = vunpack.c.l.b16 %v3761
    %v4235 = vunpack.c.l.b16 %v3762
    %v4236 = vunpack.c.h.b16 %v3762
    %v4237 = vunpack.c.l.b16 %v3763
    %v4238 = vunpack.c.h.b16 %v3763
    %v4239 = vunpack.c.l.b16 %v3764
    %v4240 = vunpack.c.h.b16 %v3764
    %v4241 = vunpack.c.l.b16 %v3765
    %v4242 = vunpack.c.l.b16 %v3766
    %v4243 = vunpack.c.h.b16 %v3766
    %v4244 = vunpack.c.l.b16 %v3767
    %v4245 = vunpack.c.h.b16 %v3767
    %v4246 = vunpack.c.l.b16 %v3768
    %v4247 = vunpack.c.h.b16 %v3768
    %v4248 = vunpack.c.l.b16 %v3769
    %v4249 = vunpack.c.l.b16 %v3770
    %v4250 = vunpack.c.h.b16 %v3770
    %v4251 = vunpack.c.l.b16 %v3771
    %v4252 = vunpack.c.h.b16 %v3771
    %v4253 = vunpack.c.l.b16 %v3772
    %v4254 = vunpack.c.h.b16 %v3772
    %v4255 = vunpack.c.l.b16 %v3773
    %v4256 = vunpack.c.l.b16 %v3774
    %v4257 = vunpack.c.h.b16 %v3774
    %v4258 = vunpack.c.l.b16 %v3775
    %v4259 = vunpack.c.h.b16 %v3775
    %v4260 = vunpack.c.l.b16 %v3776
    %v4261 = vunpack.c.h.b16 %v3776
    %v4262 = vunpack.c.l.b16 %v3777
    %v4263 = vunpack.c.l.b16 %v3778
    %v4264 = vunpack.c.h.b16 %v3778
    %v4265 = vunpack.c.l.b16 %v3779
    %v4266 = vunpack.c.h.b16 %v3779
    %v4267 = vunpack.c.l.b16 %v3780
    %v4268 = vunpack.c.h.b16 %v3780
    %v4269 = vunpack.c.l.b16 %v3781
    %v4270 = vunpack.c.l.b16 %v3782
    %v4271 = vunpack.c.h.b16 %v3782
    %v4272 = vunpack.c.l.b16 %v3783
    %v4273 = vunpack.c.h.b16 %v3783
    %v4274 = vunpack.c.l.b16 %v3784
    %v4275 = vunpack.c.h.b16 %v3784
    %v4276 = vunpack.c.l.b16 %v3785
    %v4277 = vunpack.c.l.b16 %v3786
    %v4278 = vunpack.c.h.b16 %v3786
    %v4279 = vunpack.c.l.b16 %v3787
    %v4280 = vunpack.c.h.b16 %v3787
    %v4281 = vunpack.c.l.b16 %v3788
    %v4282 = vunpack.c.h.b16 %v3788
    %v4283 = vunpack.c.l.b16 %v3789
    %v4284 = vunpack.c.l.b16 %v3790
    %v4285 = vunpack.c.h.b16 %v3790
    %v4286 = vunpack.c.l.b16 %v3791
    %v4287 = vunpack.c.h.b16 %v3791
    %v4288 = vunpack.c.l.b16 %v3792
    %v4289 = vunpack.c.h.b16 %v3792
    %v4290 = vunpack.c.l.b16 %v3793
    %v4291 = vunpack.c.l.b16 %v3794
    %v4292 = vunpack.c.h.b16 %v3794
    %v4293 = vunpack.c.l.b16 %v3795
    %v4294 = vunpack.c.h.b16 %v3795
    %v4295 = vunpack.c.l.b16 %v3796
    %v4296 = vunpack.c.h.b16 %v3796
    %v4297 = vunpack.c.l.b16 %v3797
    %v4298 = vunpack.c.l.b16 %v3798
    %v4299 = vunpack.c.h.b16 %v3798
    %v4300 = vunpack.c.l.b16 %v3799
    %v4301 = vunpack.c.h.b16 %v3799
    %v4302 = vunpack.c.l.b16 %v3800
    %v4303 = vunpack.c.h.b16 %v3800
    %v4304 = vunpack.c.l.b16 %v3801
    %v4305 = vunpack.c.l.b16 %v3802
    %v4306 = vunpack.c.h.b16 %v3802
    %v4307 = vunpack.c.l.b16 %v3803
    %v4308 = vunpack.c.h.b16 %v3803
    %v4309 = vunpack.c.l.b16 %v3804
    %v4310 = vunpack.c.h.b16 %v3804
    %v4311 = vunpack.c.l.b16 %v3805
    %v4312 = vunpack.c.l.b16 %v3806
    %v4313 = vunpack.c.h.b16 %v3806
    %v4314 = vunpack.c.l.b16 %v3807
    %v4315 = vunpack.c.h.b16 %v3807
    %v4316 = vunpack.c.l.b16 %v3808
    %v4317 = vunpack.c.h.b16 %v3808
    %v4318 = vunpack.c.l.b16 %v3809
    %v4319 = vunpack.c.l.b16 %v3810
    %v4320 = vunpack.c.h.b16 %v3810
    %v4321 = vunpack.c.l.b16 %v3811
    %v4322 = vunpack.c.h.b16 %v3811
    %v4323 = vunpack.c.l.b16 %v3812
    %v4324 = vunpack.c.h.b16 %v3812
    %v4325 = vunpack.c.l.b16 %v3813
    %v4326 = vunpack.c.l.b16 %v3814
    %v4327 = vunpack.c.h.b16 %v3814
    %v4328 = vunpack.c.l.b16 %v3815
    %v4329 = vunpack.c.h.b16 %v3815
    %v4330 = vunpack.c.l.b16 %v3816
    %v4331 = vunpack.c.h.b16 %v3816
    %v4332 = vunpack.c.l.b16 %v3817
    %v4333 = vunpack.c.l.b16 %v3818
    %v4334 = vunpack.c.h.b16 %v3818
    %v4335 = vunpack.c.l.b16 %v3819
    %v4336 = vunpack.c.h.b16 %v3819
    %v4337 = vunpack.c.l.b16 %v3820
    %v4338 = vunpack.c.h.b16 %v3820
    %v4339 = vunpack.c.l.b16 %v3821
    %v4340 = vunpack.c.l.b16 %v3822
    %v4341 = vunpack.c.h.b16 %v3822
    %v4342 = vunpack.c.l.b16 %v3823
    %v4343 = vunpack.c.h.b16 %v3823
    %v4344 = vunpack.c.l.b16 %v3824
    %v4345 = vunpack.c.h.b16 %v3824
    %v4346 = vunpack.c.l.b16 %v3825
    %v4347 = vunpack.c.l.b16 %v3826
    %v4348 = vunpack.c.h.b16 %v3826
    %v4349 = vunpack.c.l.b16 %v3827
    %v4350 = vunpack.c.h.b16 %v3827
    %v4351 = vunpack.c.l.b16 %v3828
    %v4352 = vunpack.c.h.b16 %v3828
    %v4353 = vunpack.c.l.b16 %v3829
    %v4354 = vunpack.c.l.b16 %v3830
    %v4355 = vunpack.c.h.b16 %v3830
    %v4356 = vunpack.c.l.b16 %v3831
    %v4357 = vunpack.c.h.b16 %v3831
    %v4358 = vunpack.c.l.b16 %v3832
    %v4359 = vunpack.c.h.b16 %v3832
    %v4360 = vunpack.c.l.b16 %v3833
    %v4361 = vunpack.c.l.b16 %v3834
    %v4362 = vunpack.c.h.b16 %v3834
    %v4363 = vunpack.c.l.b16 %v3835
    %v4364 = vunpack.c.h.b16 %v3835
    %v4365 = vunpack.c.l.b16 %v3836
    %v4366 = vunpack.c.h.b16 %v3836
    %v4367 = vunpack.c.l.b16 %v3837
    %v4368 = vunpack.c.l.b16 %v3838
    %v4369 = vunpack.c.h.b16 %v3838
    %v4370 = vunpack.c.l.b16 %v3839
    %v4371 = vunpack.c.h.b16 %v3839
    %v4372 = vunpack.c.l.b16 %v3840
    %v4373 = vunpack.c.h.b16 %v3840
    %v4374 = vunpack.c.l.b16 %v3841
    %v4375 = vunpack.c.l.b16 %v3842
    %v4376 = vunpack.c.h.b16 %v3842
    %v4377 = vunpack.c.l.b16 %v3843
    %v4378 = vunpack.c.h.b16 %v3843
    %v4379 = vunpack.c.l.b16 %v3844
    %v4380 = vunpack.c.h.b16 %v3844
    %v4381 = vunpack.c.l.b16 %v3845
    %v4382 = vunpack.c.l.b16 %v3846
    %v4383 = vunpack.c.h.b16 %v3846
    %v4384 = vunpack.c.l.b16 %v3847
    %v4385 = vunpack.c.h.b16 %v3847
    %v4386 = vunpack.c.l.b16 %v3848
    %v4387 = vunpack.c.h.b16 %v3848
    %v4388 = vunpack.c.l.b16 %v3849
    %v4389 = vunpack.c.l.b16 %v3850
    %v4390 = vunpack.c.h.b16 %v3850
    %v4391 = vunpack.c.l.b16 %v3851
    %v4392 = vunpack.c.h.b16 %v3851
    %v4393 = vunpack.c.l.b16 %v3852
    %v4394 = vunpack.c.h.b16 %v3852
    %v4395 = vunpack.c.l.b16 %v3853
    %v4396 = vunpack.c.l.b16 %v3854
    %v4397 = vunpack.c.h.b16 %v3854
    %v4398 = vunpack.c.l.b16 %v3855
    %v4399 = vunpack.c.h.b16 %v3855
    %v4400 = vunpack.c.l.b16 %v3856
    %v4401 = vunpack.c.h.b16 %v3856
    %v4402 = vunpack.c.l.b16 %v3857
    %v4403 = vunpack.c.l.b16 %v3858
    %v4404 = vunpack.c.h.b16 %v3858
    %v4405 = vunpack.c.l.b16 %v3859
    %v4406 = vunpack.c.h.b16 %v3859
    %v4407 = vunpack.c.l.b16 %v3860
    %v4408 = vunpack.c.h.b16 %v3860
    %v4409 = vunpack.c.l.b16 %v3861
    %v4410 = vunpack.c.l.b16 %v3862
    %v4411 = vunpack.c.h.b16 %v3862
    %v4412 = vunpack.c.l.b16 %v3863
    %v4413 = vunpack.c.h.b16 %v3863
    %v4414 = vunpack.c.l.b16 %v3864
    %v4415 = vunpack.c.h.b16 %v3864
    %v4416 = vunpack.c.l.b16 %v3865
    %v4417 = vunpack.c.l.b16 %v3866
    %v4418 = vunpack.c.h.b16 %v3866
    %v4419 = vunpack.c.l.b16 %v3867
    %v4420 = vunpack.c.h.b16 %v3867
    %v4421 = vunpack.c.l.b16 %v3868
    %v4422 = vunpack.c.h.b16 %v3868
    %v4423 = vunpack.c.l.b16 %v3869
    %v4424 = vunpack.c.l.b16 %v3870
    %v4425 = vunpack.c.h.b16 %v3870
    %v4426 = vunpack.c.l.b16 %v3871
    %v4427 = vunpack.c.h.b16 %v3871
    %v4428 = vunpack.c.l.b16 %v3872
    %v4429 = vunpack.c.h.b16 %v3872
    %v4430 = vunpack.c.l.b16 %v3873
    %v4431 = vunpack.c.l.b16 %v3874
    %v4432 = vunpack.c.h.b16 %v3874
    %v4433 = vunpack.c.l.b16 %v3875
    %v4434 = vunpack.c.h.b16 %v3875
    %v4435 = vunpack.c.l.b16 %v3876
    %v4436 = vunpack.c.h.b16 %v3876
    %v4437 = vunpack.c.l.b16 %v3877
    %v4438 = vunpack.c.l.b16 %v3878
    %v4439 = vunpack.c.h.b16 %v3878
    %v4440 = vunpack.c.l.b16 %v3879
    %v4441 = vunpack.c.h.b16 %v3879
    %v4442 = vunpack.c.l.b16 %v3880
    %v4443 = vunpack.c.h.b16 %v3880
    %v4444 = vunpack.c.l.b16 %v3881
    %v4445 = vunpack.c.l.b16 %v3882
    %v4446 = vunpack.c.h.b16 %v3882
    %v4447 = vunpack.c.l.b16 %v3883
    %v4448 = vunpack.c.h.b16 %v3883
    %v4449 = vunpack.c.l.b16 %v3884
    %v4450 = vunpack.c.h.b16 %v3884
    %v4451 = vunpack.c.l.b16 %v3885
    %v4452 = vunpack.c.l.b16 %v3886
    %v4453 = vunpack.c.h.b16 %v3886
    %v4454 = vunpack.c.l.b16 %v3887
    %v4455 = vunpack.c.h.b16 %v3887
    %v4456 = vunpack.c.l.b16 %v3888
    %v4457 = vunpack.c.h.b16 %v3888
    %v4458 = vunpack.c.l.b16 %v3889
    %v4459 = vunpack.c.l.b16 %v3890
    %v4460 = vunpack.c.h.b16 %v3890
    %v4461 = vunpack.c.l.b16 %v3891
    %v4462 = vunpack.c.h.b16 %v3891
    %v4463 = vunpack.c.l.b16 %v3892
    %v4464 = vunpack.c.h.b16 %v3892
    %v4465 = vunpack.c.l.b16 %v3893
    %v4466 = vunpack.c.l.b16 %v3894
    %v4467 = vunpack.c.h.b16 %v3894
    %v4468 = vunpack.c.l.b16 %v3895
    %v4469 = vunpack.c.h.b16 %v3895
    %v4470 = vunpack.c.l.b16 %v3896
    %v4471 = vunpack.c.h.b16 %v3896
    %v4472 = vunpack.c.l.b16 %v3897
    %v4473 = vunpack.c.l.b16 %v3898
    %v4474 = vunpack.c.h.b16 %v3898
    %v4475 = vunpack.c.l.b16 %v3899
    %v4476 = vunpack.c.h.b16 %v3899
    %v4477 = vunpack.c.l.b16 %v3900
    %v4478 = vunpack.c.h.b16 %v3900
    %v4479 = vunpack.c.l.b16 %v3901
    %v4480 = vunpack.c.l.b16 %v3902
    %v4481 = vunpack.c.h.b16 %v3902
    %v4482 = vunpack.c.l.b16 %v3903
    %v4483 = vunpack.c.h.b16 %v3903
    %v4484 = vunpack.c.l.b16 %v3904
    %v4485 = vunpack.c.h.b16 %v3904
    %v4486 = vunpack.c.l.b16 %v3905
    %v4487 = vunpack.c.l.b16 %v3906
    %v4488 = vunpack.c.h.b16 %v3906
    %v4489 = vunpack.c.l.b16 %v3907
    %v4490 = vunpack.c.h.b16 %v3907
    %v4491 = vunpack.c.l.b16 %v3908
    %v4492 = vunpack.c.h.b16 %v3908
    %v4493 = vunpack.c.l.b16 %v3909
    %v4494 = vunpack.c.l.b16 %v3910
    %v4495 = vunpack.c.h.b16 %v3910
    %v4496 = vunpack.c.l.b16 %v3911
    %v4497 = vunpack.c.h.b16 %v3911
    %v4498 = vunpack.c.l.b16 %v3912
    %v4499 = vunpack.c.h.b16 %v3912
    %v4500 = vunpack.c.l.b16 %v3913
    %v4501 = vpack.c.b16 %v4158, %v4151
    %v4502 = vpack.c.b16 %v4159, %v4152
    %v4503 = vpack.c.b16 %v4160, %v4153
    %v4504 = vpack.c.b16 %v4161, %v4154
    %v4505 = vpack.c.b16 %v4162, %v4155
    %v4506 = vpack.c.b16 %v4163, %v4156
    %v4507 = vpack.c.b16 %v4164, %v4157
    %v4508 = vpack.c.b16 %v4172, %v4165
    %v4509 = vpack.c.b16 %v4173, %v4166
    %v4510 = vpack.c.b16 %v4174, %v4167
    %v4511 = vpack.c.b16 %v4175, %v4168
    %v4512 = vpack.c.b16 %v4176, %v4169
    %v4513 = vpack.c.b16 %v4177, %v4170
    %v4514 = vpack.c.b16 %v4178, %v4171
    %v4515 = vpack.c.b16 %v4186, %v4179
    %v4516 = vpack.c.b16 %v4187, %v4180
    %v4517 = vpack.c.b16 %v4188, %v4181
    %v4518 = vpack.c.b16 %v4189, %v4182
    %v4519 = vpack.c.b16 %v4190, %v4183
    %v4520 = vpack.c.b16 %v4191, %v4184
    %v4521 = vpack.c.b16 %v4192, %v4185
    %v4522 = vpack.c.b16 %v4200, %v4193
    %v4523 = vpack.c.b16 %v4201, %v4194
    %v4524 = vpack.c.b16 %v4202, %v4195
    %v4525 = vpack.c.b16 %v4203, %v4196
    %v4526 = vpack.c.b16 %v4204, %v4197
    %v4527 = vpack.c.b16 %v4205, %v4198
    %v4528 = vpack.c.b16 %v4206, %v4199
    %v4529 = vpack.c.b16 %v4214, %v4207
    %v4530 = vpack.c.b16 %v4215, %v4208
    %v4531 = vpack.c.b16 %v4216, %v4209
    %v4532 = vpack.c.b16 %v4217, %v4210
    %v4533 = vpack.c.b16 %v4218, %v4211
    %v4534 = vpack.c.b16 %v4219, %v4212
    %v4535 = vpack.c.b16 %v4220, %v4213
    %v4536 = vpack.c.b16 %v4228, %v4221
    %v4537 = vpack.c.b16 %v4229, %v4222
    %v4538 = vpack.c.b16 %v4230, %v4223
    %v4539 = vpack.c.b16 %v4231, %v4224
    %v4540 = vpack.c.b16 %v4232, %v4225
    %v4541 = vpack.c.b16 %v4233, %v4226
    %v4542 = vpack.c.b16 %v4234, %v4227
    %v4543 = vpack.c.b16 %v4242, %v4235
    %v4544 = vpack.c.b16 %v4243, %v4236
    %v4545 = vpack.c.b16 %v4244, %v4237
    %v4546 = vpack.c.b16 %v4245, %v4238
    %v4547 = vpack.c.b16 %v4246, %v4239
    %v4548 = vpack.c.b16 %v4247, %v4240
    %v4549 = vpack.c.b16 %v4248, %v4241
    %v4550 = vpack.c.b16 %v4256, %v4249
    %v4551 = vpack.c.b16 %v4257, %v4250
    %v4552 = vpack.c.b16 %v4258, %v4251
    %v4553 = vpack.c.b16 %v4259, %v4252
    %v4554 = vpack.c.b16 %v4260, %v4253
    %v4555 = vpack.c.b16 %v4261, %v4254
    %v4556 = vpack.c.b16 %v4262, %v4255
    %v4557 = vpack.c.b16 %v4270, %v4263
    %v4558 = vpack.c.b16 %v4271, %v4264
    %v4559 = vpack.c.b16 %v4272, %v4265
    %v4560 = vpack.c.b16 %v4273, %v4266
    %v4561 = vpack.c.b16 %v4274, %v4267
    %v4562 = vpack.c.b16 %v4275, %v4268
    %v4563 = vpack.c.b16 %v4276, %v4269
    %v4564 = vpack.c.b16 %v4284, %v4277
    %v4565 = vpack.c.b16 %v4285, %v4278
    %v4566 = vpack.c.b16 %v4286, %v4279
    %v4567 = vpack.c.b16 %v4287, %v4280
    %v4568 = vpack.c.b16 %v4288, %v4281
    %v4569 = vpack.c.b16 %v4289, %v4282
    %v4570 = vpack.c.b16 %v4290, %v4283
    %v4571 = vpack.c.b16 %v4298, %v4291
    %v4572 = vpack.c.b16 %v4299, %v4292
    %v4573 = vpack.c.b16 %v4300, %v4293
    %v4574 = vpack.c.b16 %v4301, %v4294
    %v4575 = vpack.c.b16 %v4302, %v4295
    %v4576 = vpack.c.b16 %v4303, %v4296
    %v4577 = vpack.c.b16 %v4304, %v4297
    %v4578 = vpack.c.b16 %v4312, %v4305
    %v4579 = vpack.c.b16 %v4313, %v4306
    %v4580 = vpack.c.b16 %v4314, %v4307
    %v4581 = vpack.c.b16 %v4315, %v4308
    %v4582 = vpack.c.b16 %v4316, %v4309
    %v4583 = vpack.c.b16 %v4317, %v4310
    %v4584 = vpack.c.b16 %v4318, %v4311
    %v4585 = vpack.c.b16 %v4326, %v4319
    %v4586 = vpack.c.b16 %v4327, %v4320
    %v4587 = vpack.c.b16 %v4328, %v4321
    %v4588 = vpack.c.b16 %v4329, %v4322
    %v4589 = vpack.c.b16 %v4330, %v4323
    %v4590 = vpack.c.b16 %v4331, %v4324
    %v4591 = vpack.c.b16 %v4332, %v4325
    %v4592 = vpack.c.b16 %v4340, %v4333
    %v4593 = vpack.c.b16 %v4341, %v4334
    %v4594 = vpack.c.b16 %v4342, %v4335
    %v4595 = vpack.c.b16 %v4343, %v4336
    %v4596 = vpack.c.b16 %v4344, %v4337
    %v4597 = vpack.c.b16 %v4345, %v4338
    %v4598 = vpack.c.b16 %v4346, %v4339
    %v4599 = vpack.c.b16 %v4354, %v4347
    %v4600 = vpack.c.b16 %v4355, %v4348
    %v4601 = vpack.c.b16 %v4356, %v4349
    %v4602 = vpack.c.b16 %v4357, %v4350
    %v4603 = vpack.c.b16 %v4358, %v4351
    %v4604 = vpack.c.b16 %v4359, %v4352
    %v4605 = vpack.c.b16 %v4360, %v4353
    %v4606 = vpack.c.b16 %v4368, %v4361
    %v4607 = vpack.c.b16 %v4369, %v4362
    %v4608 = vpack.c.b16 %v4370, %v4363
    %v4609 = vpack.c.b16 %v4371, %v4364
    %v4610 = vpack.c.b16 %v4372, %v4365
    %v4611 = vpack.c.b16 %v4373, %v4366
    %v4612 = vpack.c.b16 %v4374, %v4367
    %v4613 = vpack.c.b16 %v4382, %v4375
    %v4614 = vpack.c.b16 %v4383, %v4376
    %v4615 = vpack.c.b16 %v4384, %v4377
    %v4616 = vpack.c.b16 %v4385, %v4378
    %v4617 = vpack.c.b16 %v4386, %v4379
    %v4618 = vpack.c.b16 %v4387, %v4380
    %v4619 = vpack.c.b16 %v4388, %v4381
    %v4620 = vpack.c.b16 %v4396, %v4389
    %v4621 = vpack.c.b16 %v4397, %v4390
    %v4622 = vpack.c.b16 %v4398, %v4391
    %v4623 = vpack.c.b16 %v4399, %v4392
    %v4624 = vpack.c.b16 %v4400, %v4393
    %v4625 = vpack.c.b16 %v4401, %v4394
    %v4626 = vpack.c.b16 %v4402, %v4395
    %v4627 = vpack.c.b16 %v4410, %v4403
    %v4628 = vpack.c.b16 %v4411, %v4404
    %v4629 = vpack.c.b16 %v4412, %v4405
    %v4630 = vpack.c.b16 %v4413, %v4406
    %v4631 = vpack.c.b16 %v4414, %v4407
    %v4632 = vpack.c.b16 %v4415, %v4408
    %v4633 = vpack.c.b16 %v4416, %v4409
    %v4634 = vpack.c.b16 %v4424, %v4417
    %v4635 = vpack.c.b16 %v4425, %v4418
    %v4636 = vpack.c.b16 %v4426, %v4419
    %v4637 = vpack.c.b16 %v4427, %v4420
    %v4638 = vpack.c.b16 %v4428, %v4421
    %v4639 = vpack.c.b16 %v4429, %v4422
    %v4640 = vpack.c.b16 %v4430, %v4423
    %v4641 = vpack.c.b16 %v4438, %v4431
    %v4642 = vpack.c.b16 %v4439, %v4432
    %v4643 = vpack.c.b16 %v4440, %v4433
    %v4644 = vpack.c.b16 %v4441, %v4434
    %v4645 = vpack.c.b16 %v4442, %v4435
    %v4646 = vpack.c.b16 %v4443, %v4436
    %v4647 = vpack.c.b16 %v4444, %v4437
    %v4648 = vpack.c.b16 %v4452, %v4445
    %v4649 = vpack.c.b16 %v4453, %v4446
    %v4650 = vpack.c.b16 %v4454, %v4447
    %v4651 = vpack.c.b16 %v4455, %v4448
    %v4652 = vpack.c.b16 %v4456, %v4449
    %v4653 = vpack.c.b16 %v4457, %v4450
    %v4654 = vpack.c.b16 %v4458, %v4451
    %v4655 = vpack.c.b16 %v4466, %v4459
    %v4656 = vpack.c.b16 %v4467, %v4460
    %v4657 = vpack.c.b16 %v4468, %v4461
    %v4658 = vpack.c.b16 %v4469, %v4462
    %v4659 = vpack.c.b16 %v4470, %v4463
    %v4660 = vpack.c.b16 %v4471, %v4464
    %v4661 = vpack.c.b16 %v4472, %v4465
    %v4662 = vpack.c.b16 %v4480, %v4473
    %v4663 = vpack.c.b16 %v4481, %v4474
    %v4664 = vpack.c.b16 %v4482, %v4475
    %v4665 = vpack.c.b16 %v4483, %v4476
    %v4666 = vpack.c.b16 %v4484, %v4477
    %v4667 = vpack.c.b16 %v4485, %v4478
    %v4668 = vpack.c.b16 %v4486, %v4479
    %v4669 = vpack.c.b16 %v4494, %v4487
    %v4670 = vpack.c.b16 %v4495, %v4488
    %v4671 = vpack.c.b16 %v4496, %v4489
    %v4672 = vpack.c.b16 %v4497, %v4490
    %v4673 = vpack.c.b16 %v4498, %v4491
    %v4674 = vpack.c.b16 %v4499, %v4492
    %v4675 = vpack.c.b16 %v4500, %v4493
    %v4852 = vsel %vm1368, %v3713, 0
    %4854 = vmatprep.subr.bf16.mxu0 %v4502
    %4855 = vmatpush1.bf16.msra.mxu0 %v4501
    %4856 = vmatprep.subr.bf16.mxu0 %v4509
    %4857 = vmatpush1.bf16.msra.mxu0 %v4508
    %4858 = vmatprep.subr.bf16.mxu0 %v4516
    %4859 = vmatpush1.bf16.msra.mxu0 %v4515
    %4860 = vmatprep.subr.bf16.mxu0 %v4523
    %4861 = vmatpush1.bf16.msra.mxu0 %v4522
    %4862 = vmatprep.subr.bf16.mxu0 %v4530
    %4863 = vmatpush1.bf16.msra.mxu0 %v4529
    %4864 = vmatprep.subr.bf16.mxu0 %v4537
    %4865 = vmatpush1.bf16.msra.mxu0 %v4536
    %4866 = vmatprep.subr.bf16.mxu0 %v4544
    %4867 = vmatpush1.bf16.msra.mxu0 %v4543
    %4868 = vmatprep.subr.bf16.mxu0 %v4551
    %4869 = vmatpush1.bf16.msra.mxu0 %v4550
    %4870 = vmatprep.subr.bf16.mxu0 %v4558
    %4871 = vmatpush1.bf16.msra.mxu0 %v4557
    %4872 = vmatprep.subr.bf16.mxu0 %v4565
    %4873 = vmatpush1.bf16.msra.mxu0 %v4564
    %4874 = vmatprep.subr.bf16.mxu0 %v4572
    %4875 = vmatpush1.bf16.msra.mxu0 %v4571
    %4876 = vmatprep.subr.bf16.mxu0 %v4579
    %4877 = vmatpush1.bf16.msra.mxu0 %v4578
    %4878 = vmatprep.subr.bf16.mxu0 %v4586
    %4879 = vmatpush1.bf16.msra.mxu0 %v4585
    %4880 = vmatprep.subr.bf16.mxu0 %v4593
    %4881 = vmatpush1.bf16.msra.mxu0 %v4592
    %4882 = vmatprep.subr.bf16.mxu0 %v4600
    %4883 = vmatpush1.bf16.msra.mxu0 %v4599
    %4884 = vmatprep.subr.bf16.mxu0 %v4607
    %4885 = vmatpush1.bf16.msra.mxu0 %v4606
    %4886 = vmatprep.mubr.bf16.mxu0 %v3711
    %4887 = vmatmul.mubr.bf16.gmra.mrb[0].mxu0 %v3710
    %v4888 = vpop.f32.mrb[0].mxu0
    %v4889 = vadd.f32 %v3919, %v4888
    %v4890 = vpop.f32.mrb[0].mxu0
    %v4891 = vadd.f32 %v3923, %v4890
    %v4892 = vpop.f32.mrb[0].mxu0
    %v4893 = vpop.f32.mrb[0].mxu0
    %4894 = vdwg.mxu0
    %4895 = vmatprep.subr.bf16.mxu0 %v4614
    %4896 = vmatpush1.bf16.msra.mxu0 %v4613
    %4897 = vmatprep.subr.bf16.mxu0 %v4621
    %4898 = vmatpush1.bf16.msra.mxu0 %v4620
    %4899 = vmatprep.subr.bf16.mxu0 %v4628
    %4900 = vmatpush1.bf16.msra.mxu0 %v4627
    %4901 = vmatprep.subr.bf16.mxu0 %v4635
    %4902 = vmatpush1.bf16.msra.mxu0 %v4634
    %4903 = vmatprep.subr.bf16.mxu0 %v4642
    %4904 = vmatpush1.bf16.msra.mxu0 %v4641
    %4905 = vmatprep.subr.bf16.mxu0 %v4649
    %4906 = vmatpush1.bf16.msra.mxu0 %v4648
    %4907 = vmatprep.subr.bf16.mxu0 %v4656
    %4908 = vmatpush1.bf16.msra.mxu0 %v4655
    %4909 = vmatprep.subr.bf16.mxu0 %v4663
    %4910 = vmatpush1.bf16.msra.mxu0 %v4662
    %4911 = vmatprep.subr.bf16.mxu0 %v4670
    %4912 = vmatpush1.bf16.msra.mxu0 %v4669
    %4913 = vmatprep.subr.bf16.mxu0 0
    %4914 = vmatpush1.bf16.msra.mxu0 0
    %4915 = vmatprep.subr.bf16.mxu0 0
    %4916 = vmatpush1.bf16.msra.mxu0 0
    %4917 = vmatprep.subr.bf16.mxu0 0
    %4918 = vmatpush1.bf16.msra.mxu0 0
    %4919 = vmatprep.subr.bf16.mxu0 0
    %4920 = vmatpush1.bf16.msra.mxu0 0
    %4921 = vmatprep.subr.bf16.mxu0 0
    %4922 = vmatpush1.bf16.msra.mxu0 0
    %4923 = vmatprep.subr.bf16.mxu0 0
    %4924 = vmatpush1.bf16.msra.mxu0 0
    %4925 = vmatprep.subr.bf16.mxu0 0
    %4926 = vmatpush1.bf16.msra.mxu0 0
    %4927 = vmatprep.mubr.bf16.mxu0 %v4852
    %4928 = vmatmul.mubr.bf16.gmra.mrb[0].mxu0 %v3712
    %v4929 = vpop.f32.mrb[0].mxu0
    %v4930 = vadd.f32 %v4889, %v4929
    %v4931 = vpop.f32.mrb[0].mxu0
    %v4932 = vadd.f32 %v4891, %v4931
    %v4933 = vpop.f32.mrb[0].mxu0
    %v4934 = vpop.f32.mrb[0].mxu0
    %4935 = vdwg.mxu0
    %4936 = vmatprep.subr.bf16.mxu0 %v4504
    %4937 = vmatpush1.bf16.msra.mxu0 %v4503
    %4938 = vmatprep.subr.bf16.mxu0 %v4511
    %4939 = vmatpush1.bf16.msra.mxu0 %v4510
    %4940 = vmatprep.subr.bf16.mxu0 %v4518
    %4941 = vmatpush1.bf16.msra.mxu0 %v4517
    %4942 = vmatprep.subr.bf16.mxu0 %v4525
    %4943 = vmatpush1.bf16.msra.mxu0 %v4524
    %4944 = vmatprep.subr.bf16.mxu0 %v4532
    %4945 = vmatpush1.bf16.msra.mxu0 %v4531
    %4946 = vmatprep.subr.bf16.mxu0 %v4539
    %4947 = vmatpush1.bf16.msra.mxu0 %v4538
    %4948 = vmatprep.subr.bf16.mxu0 %v4546
    %4949 = vmatpush1.bf16.msra.mxu0 %v4545
    %4950 = vmatprep.subr.bf16.mxu0 %v4553
    %4951 = vmatpush1.bf16.msra.mxu0 %v4552
    %4952 = vmatprep.subr.bf16.mxu0 %v4560
    %4953 = vmatpush1.bf16.msra.mxu0 %v4559
    %4954 = vmatprep.subr.bf16.mxu0 %v4567
    %4955 = vmatpush1.bf16.msra.mxu0 %v4566
    %4956 = vmatprep.subr.bf16.mxu0 %v4574
    %4957 = vmatpush1.bf16.msra.mxu0 %v4573
    %4958 = vmatprep.subr.bf16.mxu0 %v4581
    %4959 = vmatpush1.bf16.msra.mxu0 %v4580
    %4960 = vmatprep.subr.bf16.mxu0 %v4588
    %4961 = vmatpush1.bf16.msra.mxu0 %v4587
    %4962 = vmatprep.subr.bf16.mxu0 %v4595
    %4963 = vmatpush1.bf16.msra.mxu0 %v4594
    %4964 = vmatprep.subr.bf16.mxu0 %v4602
    %4965 = vmatpush1.bf16.msra.mxu0 %v4601
    %4966 = vmatprep.subr.bf16.mxu0 %v4609
    %4967 = vmatpush1.bf16.msra.mxu0 %v4608
    %4968 = vmatprep.mubr.bf16.mxu0 %v3711
    %4969 = vmatmul.mubr.bf16.gmra.mrb[0].mxu0 %v3710
    %v4970 = vpop.f32.mrb[0].mxu0
    %v4971 = vadd.f32 %v3927, %v4970
    %v4972 = vpop.f32.mrb[0].mxu0
    %v4973 = vadd.f32 %v3931, %v4972
    %v4974 = vpop.f32.mrb[0].mxu0
    %v4975 = vpop.f32.mrb[0].mxu0
    %4976 = vdwg.mxu0
    %4977 = vmatprep.subr.bf16.mxu0 %v4616
    %4978 = vmatpush1.bf16.msra.mxu0 %v4615
    %4979 = vmatprep.subr.bf16.mxu0 %v4623
    %4980 = vmatpush1.bf16.msra.mxu0 %v4622
    %4981 = vmatprep.subr.bf16.mxu0 %v4630
    %4982 = vmatpush1.bf16.msra.mxu0 %v4629
    %4983 = vmatprep.subr.bf16.mxu0 %v4637
    %4984 = vmatpush1.bf16.msra.mxu0 %v4636
    %4985 = vmatprep.subr.bf16.mxu0 %v4644
    %4986 = vmatpush1.bf16.msra.mxu0 %v4643
    %4987 = vmatprep.subr.bf16.mxu0 %v4651
    %4988 = vmatpush1.bf16.msra.mxu0 %v4650
    %4989 = vmatprep.subr.bf16.mxu0 %v4658
    %4990 = vmatpush1.bf16.msra.mxu0 %v4657
    %4991 = vmatprep.subr.bf16.mxu0 %v4665
    %4992 = vmatpush1.bf16.msra.mxu0 %v4664
    %4993 = vmatprep.subr.bf16.mxu0 %v4672
    %4994 = vmatpush1.bf16.msra.mxu0 %v4671
    %4995 = vmatprep.subr.bf16.mxu0 0
    %4996 = vmatpush1.bf16.msra.mxu0 0
    %4997 = vmatprep.subr.bf16.mxu0 0
    %4998 = vmatpush1.bf16.msra.mxu0 0
    %4999 = vmatprep.subr.bf16.mxu0 0
    %5000 = vmatpush1.bf16.msra.mxu0 0
    %5001 = vmatprep.subr.bf16.mxu0 0
    %5002 = vmatpush1.bf16.msra.mxu0 0
    %5003 = vmatprep.subr.bf16.mxu0 0
    %5004 = vmatpush1.bf16.msra.mxu0 0
    %5005 = vmatprep.subr.bf16.mxu0 0
    %5006 = vmatpush1.bf16.msra.mxu0 0
    %5007 = vmatprep.subr.bf16.mxu0 0
    %5008 = vmatpush1.bf16.msra.mxu0 0
    %5009 = vmatprep.mubr.bf16.mxu0 %v4852
    %5010 = vmatmul.mubr.bf16.gmra.mrb[0].mxu0 %v3712
    %v5011 = vpop.f32.mrb[0].mxu0
    %v5012 = vadd.f32 %v4971, %v5011
    %v5013 = vpop.f32.mrb[0].mxu0
    %v5014 = vadd.f32 %v4973, %v5013
    %v5015 = vpop.f32.mrb[0].mxu0
    %v5016 = vpop.f32.mrb[0].mxu0
    %5017 = vdwg.mxu0
    %5018 = vmatprep.subr.bf16.mxu0 %v4506
    %5019 = vmatpush1.bf16.msra.mxu0 %v4505
    %5020 = vmatprep.subr.bf16.mxu0 %v4513
    %5021 = vmatpush1.bf16.msra.mxu0 %v4512
    %5022 = vmatprep.subr.bf16.mxu0 %v4520
    %5023 = vmatpush1.bf16.msra.mxu0 %v4519
    %5024 = vmatprep.subr.bf16.mxu0 %v4527
    %5025 = vmatpush1.bf16.msra.mxu0 %v4526
    %5026 = vmatprep.subr.bf16.mxu0 %v4534
    %5027 = vmatpush1.bf16.msra.mxu0 %v4533
    %5028 = vmatprep.subr.bf16.mxu0 %v4541
    %5029 = vmatpush1.bf16.msra.mxu0 %v4540
    %5030 = vmatprep.subr.bf16.mxu0 %v4548
    %5031 = vmatpush1.bf16.msra.mxu0 %v4547
    %5032 = vmatprep.subr.bf16.mxu0 %v4555
    %5033 = vmatpush1.bf16.msra.mxu0 %v4554
    %5034 = vmatprep.subr.bf16.mxu0 %v4562
    %5035 = vmatpush1.bf16.msra.mxu0 %v4561
    %5036 = vmatprep.subr.bf16.mxu0 %v4569
    %5037 = vmatpush1.bf16.msra.mxu0 %v4568
    %5038 = vmatprep.subr.bf16.mxu0 %v4576
    %5039 = vmatpush1.bf16.msra.mxu0 %v4575
    %5040 = vmatprep.subr.bf16.mxu0 %v4583
    %5041 = vmatpush1.bf16.msra.mxu0 %v4582
    %5042 = vmatprep.subr.bf16.mxu0 %v4590
    %5043 = vmatpush1.bf16.msra.mxu0 %v4589
    %5044 = vmatprep.subr.bf16.mxu0 %v4597
    %5045 = vmatpush1.bf16.msra.mxu0 %v4596
    %5046 = vmatprep.subr.bf16.mxu0 %v4604
    %5047 = vmatpush1.bf16.msra.mxu0 %v4603
    %5048 = vmatprep.subr.bf16.mxu0 %v4611
    %5049 = vmatpush1.bf16.msra.mxu0 %v4610
    %5050 = vmatprep.mubr.bf16.mxu0 %v3711
    %5051 = vmatmul.mubr.bf16.gmra.mrb[0].mxu0 %v3710
    %v5052 = vpop.f32.mrb[0].mxu0
    %v5053 = vadd.f32 %v3935, %v5052
    %v5054 = vpop.f32.mrb[0].mxu0
    %v5055 = vadd.f32 %v3939, %v5054
    %v5056 = vpop.f32.mrb[0].mxu0
    %v5057 = vpop.f32.mrb[0].mxu0
    %5058 = vdwg.mxu0
    %5059 = vmatprep.subr.bf16.mxu0 %v4618
    %5060 = vmatpush1.bf16.msra.mxu0 %v4617
    %5061 = vmatprep.subr.bf16.mxu0 %v4625
    %5062 = vmatpush1.bf16.msra.mxu0 %v4624
    %5063 = vmatprep.subr.bf16.mxu0 %v4632
    %5064 = vmatpush1.bf16.msra.mxu0 %v4631
    %5065 = vmatprep.subr.bf16.mxu0 %v4639
    %5066 = vmatpush1.bf16.msra.mxu0 %v4638
    %5067 = vmatprep.subr.bf16.mxu0 %v4646
    %5068 = vmatpush1.bf16.msra.mxu0 %v4645
    %5069 = vmatprep.subr.bf16.mxu0 %v4653
    %5070 = vmatpush1.bf16.msra.mxu0 %v4652
    %5071 = vmatprep.subr.bf16.mxu0 %v4660
    %5072 = vmatpush1.bf16.msra.mxu0 %v4659
    %5073 = vmatprep.subr.bf16.mxu0 %v4667
    %5074 = vmatpush1.bf16.msra.mxu0 %v4666
    %5075 = vmatprep.subr.bf16.mxu0 %v4674
    %5076 = vmatpush1.bf16.msra.mxu0 %v4673
    %5077 = vmatprep.subr.bf16.mxu0 0
    %5078 = vmatpush1.bf16.msra.mxu0 0
    %5079 = vmatprep.subr.bf16.mxu0 0
    %5080 = vmatpush1.bf16.msra.mxu0 0
    %5081 = vmatprep.subr.bf16.mxu0 0
    %5082 = vmatpush1.bf16.msra.mxu0 0
    %5083 = vmatprep.subr.bf16.mxu0 0
    %5084 = vmatpush1.bf16.msra.mxu0 0
    %5085 = vmatprep.subr.bf16.mxu0 0
    %5086 = vmatpush1.bf16.msra.mxu0 0
    %5087 = vmatprep.subr.bf16.mxu0 0
    %5088 = vmatpush1.bf16.msra.mxu0 0
    %5089 = vmatprep.subr.bf16.mxu0 0
    %5090 = vmatpush1.bf16.msra.mxu0 0
    %5091 = vmatprep.mubr.bf16.mxu0 %v4852
    %5092 = vmatmul.mubr.bf16.gmra.mrb[0].mxu0 %v3712
    %v5093 = vpop.f32.mrb[0].mxu0
    %v5094 = vadd.f32 %v5053, %v5093
    %v5095 = vpop.f32.mrb[0].mxu0
    %v5096 = vadd.f32 %v5055, %v5095
    %v5097 = vpop.f32.mrb[0].mxu0
    %v5098 = vpop.f32.mrb[0].mxu0
    %5099 = vdwg.mxu0
    %5100 = vmatprep.subr.bf16.mxu0 0
    %5101 = vmatpush1.bf16.msra.mxu0 %v4507
    %5102 = vmatprep.subr.bf16.mxu0 0
    %5103 = vmatpush1.bf16.msra.mxu0 %v4514
    %5104 = vmatprep.subr.bf16.mxu0 0
    %5105 = vmatpush1.bf16.msra.mxu0 %v4521
    %5106 = vmatprep.subr.bf16.mxu0 0
    %5107 = vmatpush1.bf16.msra.mxu0 %v4528
    %5108 = vmatprep.subr.bf16.mxu0 0
    %5109 = vmatpush1.bf16.msra.mxu0 %v4535
    %5110 = vmatprep.subr.bf16.mxu0 0
    %5111 = vmatpush1.bf16.msra.mxu0 %v4542
    %5112 = vmatprep.subr.bf16.mxu0 0
    %5113 = vmatpush1.bf16.msra.mxu0 %v4549
    %5114 = vmatprep.subr.bf16.mxu0 0
    %5115 = vmatpush1.bf16.msra.mxu0 %v4556
    %5116 = vmatprep.subr.bf16.mxu0 0
    %5117 = vmatpush1.bf16.msra.mxu0 %v4563
    %5118 = vmatprep.subr.bf16.mxu0 0
    %5119 = vmatpush1.bf16.msra.mxu0 %v4570
    %5120 = vmatprep.subr.bf16.mxu0 0
    %5121 = vmatpush1.bf16.msra.mxu0 %v4577
    %5122 = vmatprep.subr.bf16.mxu0 0
    %5123 = vmatpush1.bf16.msra.mxu0 %v4584
    %5124 = vmatprep.subr.bf16.mxu0 0
    %5125 = vmatpush1.bf16.msra.mxu0 %v4591
    %5126 = vmatprep.subr.bf16.mxu0 0
    %5127 = vmatpush1.bf16.msra.mxu0 %v4598
    %5128 = vmatprep.subr.bf16.mxu0 0
    %5129 = vmatpush1.bf16.msra.mxu0 %v4605
    %5130 = vmatprep.subr.bf16.mxu0 0
    %5131 = vmatpush1.bf16.msra.mxu0 %v4612
    %5132 = vmatprep.mubr.bf16.mxu0 %v3711
    %5133 = vmatmul.mubr.bf16.gmra.mrb[0].mxu0 %v3710
    %v5134 = vpop.f32.mrb[0].mxu0
    %v5135 = vadd.f32 %v3943, %v5134
    %v5136 = vpop.f32.mrb[0].mxu0
    %v5137 = vpop.f32.mrb[0].mxu0
    %v5138 = vpop.f32.mrb[0].mxu0
    %5139 = vdwg.mxu0
    %5140 = vmatprep.subr.bf16.mxu0 0
    %5141 = vmatpush1.bf16.msra.mxu0 %v4619
    %5142 = vmatprep.subr.bf16.mxu0 0
    %5143 = vmatpush1.bf16.msra.mxu0 %v4626
    %5144 = vmatprep.subr.bf16.mxu0 0
    %5145 = vmatpush1.bf16.msra.mxu0 %v4633
    %5146 = vmatprep.subr.bf16.mxu0 0
    %5147 = vmatpush1.bf16.msra.mxu0 %v4640
    %5148 = vmatprep.subr.bf16.mxu0 0
    %5149 = vmatpush1.bf16.msra.mxu0 %v4647
    %5150 = vmatprep.subr.bf16.mxu0 0
    %5151 = vmatpush1.bf16.msra.mxu0 %v4654
    %5152 = vmatprep.subr.bf16.mxu0 0
    %5153 = vmatpush1.bf16.msra.mxu0 %v4661
    %5154 = vmatprep.subr.bf16.mxu0 0
    %5155 = vmatpush1.bf16.msra.mxu0 %v4668
    %5156 = vmatprep.subr.bf16.mxu0 0
    %5157 = vmatpush1.bf16.msra.mxu0 %v4675
    %5158 = vmatprep.subr.bf16.mxu0 0
    %5159 = vmatpush1.bf16.msra.mxu0 0
    %5160 = vmatprep.subr.bf16.mxu0 0
    %5161 = vmatpush1.bf16.msra.mxu0 0
    %5162 = vmatprep.subr.bf16.mxu0 0
    %5163 = vmatpush1.bf16.msra.mxu0 0
    %5164 = vmatprep.subr.bf16.mxu0 0
    %5165 = vmatpush1.bf16.msra.mxu0 0
    %5166 = vmatprep.subr.bf16.mxu0 0
    %5167 = vmatpush1.bf16.msra.mxu0 0
    %5168 = vmatprep.subr.bf16.mxu0 0
    %5169 = vmatpush1.bf16.msra.mxu0 0
    %5170 = vmatprep.subr.bf16.mxu0 0
    %5171 = vmatpush1.bf16.msra.mxu0 0
    %5172 = vmatprep.mubr.bf16.mxu0 %v4852
    %5173 = vmatmul.mubr.bf16.gmra.mrb[0].mxu0 %v3712
    %v5174 = vpop.f32.mrb[0].mxu0
    %v5175 = vadd.f32 %v5135, %v5174
    %v5176 = vpop.f32.mrb[0].mxu0
    %v5177 = vpop.f32.mrb[0].mxu0
    %v5178 = vpop.f32.mrb[0].mxu0
    %5179 = vdwg.mxu0
    %5180 = vst [vmem:[#allocation2] sm:$0xff] %v4930
    %5181 = vst [vmem:[#allocation2 + $0x8] sm:$0xff] %v4932
    %5182 = vst [vmem:[#allocation2 + $0x10] sm:$0xff] %v5012
    %5183 = vst [vmem:[#allocation2 + $0x18] sm:$0xff] %v5014
    %5184 = vst [vmem:[#allocation2 + $0x20] sm:$0xff] %v5094
    %5185 = vst [vmem:[#allocation2 + $0x28] sm:$0xff] %v5096
    %5186 = vst.msk [vmem:[#allocation2 + $0x30] sm:$0xff] %vm1368, %v5175
    %vm5187 = vcmask 326656
    %5188 = vst.msk [vmem:[%s17] sm:$0xff] %vm5187, %v2724
    // Predicated region
    $region66: #{_cvae_forward_impl.1} parent=1 // pred_check
      _
    $region67: #{_cvae_forward_impl.1} parent=1 // pred_check_branch
      %5190 = sbr.rel (0) target = $region69
    $region68: #{_cvae_forward_impl.1} parent=1 // pred_region
      %s5192 = ssub.s32 896, 896
      %5193 = vsyncadd [#allocation3], %s5192
      %s5195 = sshll.u32 [#allocation2], 4
      %s5196 = int_to_ptr.vmem [resolvable:$true] %s5195
      %5198 = dma.vmem_to_hbm [thread:$0]  %s5196, 896, %s16, [#allocation3]
    $region69: #{_cvae_forward_impl.1} parent=1 // pred_fallthru
      _
    // Predicated region
    $region70: #{_cvae_forward_impl.1} parent=1 // pred_check
      _
    $region71: #{_cvae_forward_impl.1} parent=1 // pred_check_branch
      %5200 = sbr.rel (0) target = $region73
    $region72: #{_cvae_forward_impl.1} parent=1 // pred_region
      _
    $region73: #{_cvae_forward_impl.1} parent=1 // pred_fallthru
      _
    // Predicated region
    $region74: #{_cvae_forward_impl.1} parent=1 // pred_check
      _
    $region75: #{_cvae_forward_impl.1} parent=1 // pred_check_branch
      %5202 = sbr.rel (0) target = $region77
    $region76: #{_cvae_forward_impl.1} parent=1 // pred_region
      %5203 = dma.done [#allocation3], 896
    $region77: #{_cvae_forward_impl.1} parent=1 // pred_fallthru
      _
    // Predicated region
    $region78: #{_cvae_forward_impl.1} parent=1 // pred_check
      _
    $region79: #{_cvae_forward_impl.1} parent=1 // pred_check_branch
      %5205 = sbr.rel (0) target = $region81
    $region80: #{_cvae_forward_impl.1} parent=1 // pred_region
      _
    $region81: #{_cvae_forward_impl.1} parent=1 // pred_fallthru
      _
    %5206 = vsyncpa [#allocation3], 1

</llo_original>
